<compile_context>
chip_gen: v6e
topology: v6e:2x2x1
jax: 0.10.0
libtpu: 0.0.40
codegen_flags: <defaults>
</compile_context>

<pallas_src>
import functools

import jax
import jax.numpy as jnp
from jax import lax
from jax.experimental import pallas as pl
from jax.experimental.pallas import tpu as pltpu


_TAPS = tuple((kh, kw) for kh in range(3) for kw in range(3))


def _round_up(x, m):
    return ((x + m - 1) // m) * m


def _compiler_params():
    return pltpu.CompilerParams(dimension_semantics=("parallel",),
                                vmem_limit_bytes=48 * 1024 * 1024)


# ----------------------------------------------------------------------------
# Layout conventions
# ----------------------------------------------------------------------------
# Pitched activation (HBM <-> kernel I/O): (B, C, H*P) with P = W + 2 and data
# (r, c) at flat column r*P + c + 1; columns with col % P in {0, W+1} are zero.
# This is exactly jnp.pad(x, [..., (1, 1)]) flattened.
#
# Padded conv scratch (VMEM, one per layer): (Cin, (H+3)*P) with data (r, c)
# at flat (r+1)*P + c + 2.  A pitched activation is placed with ONE offset
# copy at flat offset P+1 (its zero columns land exactly on the halo/gap
# columns), and the 9 conv taps are then 9 contiguous windows of length H*P
# starting at kh*P + kw, contracted against the matching weight slab.  The
# conv result comes back in the pitched convention (garbage at the wrap
# columns, zeroed by a mask multiply).
# ----------------------------------------------------------------------------


def _conv3x3_bn_relu(pad_ref, w_ref, scale_ref, shift_ref, mask, H, P):
    """relu(conv3x3(pad) * scale + shift) * mask as 9 accumulated MXU dots.

    Returns a (Cout_p, H*P) f32 pitched activation (row-wrap columns zeroed)."""
    HP = H * P
    cin = pad_ref.shape[0]
    acc = None
    for t, (kh, kw) in enumerate(_TAPS):
        off = kh * P + kw
        part = jnp.dot(w_ref[:, t * cin:(t + 1) * cin],
                       pad_ref[:, off:off + HP],
                       preferred_element_type=jnp.float32)
        acc = part if acc is None else acc + part
    y = jnp.maximum(acc * scale_ref[...] + shift_ref[...], 0.0)
    return y * mask


def _zero_halo(pad_ref, H, P):
    """Zero only the halo prefix/suffix; the data window [P+1, P+1+H*P) is
    fully overwritten every grid step, so each step stays independent (safe
    under megacore batch sharding) at negligible store cost."""
    HP = H * P
    rows, cols = pad_ref.shape
    pad_ref[:, 0:P + 1] = jnp.zeros((rows, P + 1), pad_ref.dtype)
    tail = cols - (P + 1 + HP)
    pad_ref[:, P + 1 + HP:cols] = jnp.zeros((rows, tail), pad_ref.dtype)


# ----------------------------------------------------------------------------
# Kernels
# ----------------------------------------------------------------------------
def _convt_kernel(x_ref, w_ref, b_ref, o_ref):
    # ConvTranspose2d(k=2, s=2) as one dot: x (1, Cin, H2*W2),
    # w (4*Cout, Cin) rows ordered (kh, kw, co), b (4*Cout, 1).
    acc = jnp.dot(w_ref[...], x_ref[0], preferred_element_type=jnp.float32)
    o_ref[0] = (acc + b_ref[...]).astype(o_ref.dtype)


def _expansion_convs_kernel(ff_ref, up_ref, contr_ref,
                            w1_ref, s1_ref, b1_ref,
                            w2_ref, s2_ref, b2_ref,
                            w3_ref, s3_ref, b3_ref,
                            mask_ref, o_ref,
                            pad1, pad2, pad3, *, H, P):
    HP = H * P
    c_ff = ff_ref.shape[1]
    c_up = up_ref.shape[1]
    mask = mask_ref[...]

    _zero_halo(pad1, H, P)
    _zero_halo(pad2, H, P)
    _zero_halo(pad3, H, P)

    # ConvBlock #1: the channel-concat(ff, upscaled) is just two offset copies
    # of already-pitched inputs into the padded scratch.
    pad1[0:c_ff, P + 1:P + 1 + HP] = ff_ref[0]
    pad1[c_ff:c_ff + c_up, P + 1:P + 1 + HP] = up_ref[0]
    y1 = _conv3x3_bn_relu(pad1, w1_ref, s1_ref, b1_ref, mask, H, P)

    # ConvBlock #2 (intermediate activation never leaves VMEM).
    pad2[:, P + 1:P + 1 + HP] = y1.astype(pad2.dtype)
    y2 = _conv3x3_bn_relu(pad2, w2_ref, s2_ref, b2_ref, mask, H, P)

    # ConvBlock #3 fused with the block residual: contr + convs_out + upscaled.
    pad3[:, P + 1:P + 1 + HP] = y2.astype(pad3.dtype)
    y3 = _conv3x3_bn_relu(pad3, w3_ref, s3_ref, b3_ref, mask, H, P)

    cout = o_ref.shape[1]
    o_ref[0] = (y3[:cout, :]
                + contr_ref[0].astype(jnp.float32)
                + up_ref[0].astype(jnp.float32)).astype(o_ref.dtype)


# ----------------------------------------------------------------------------
# Parameter preparation (XLA side, tiny tensors)
# ----------------------------------------------------------------------------
def _fold_bn(bias, gamma, beta, mean, var, cp, eps=1e-5):
    scale = gamma / jnp.sqrt(var + eps)
    shift = (bias - mean) * scale + beta
    cout = scale.shape[0]
    scale = jnp.pad(scale, (0, cp - cout)).astype(jnp.float32).reshape(cp, 1)
    shift = jnp.pad(shift, (0, cp - cout)).astype(jnp.float32).reshape(cp, 1)
    return scale, shift


def _w9(w_pt, cinp, coutp, dtype):
    # (Cout, Cin, 3, 3) -> (coutp, 9*cinp): rows / per-tap ci zero-padded,
    # columns ordered (kh, kw, ci) to match the per-tap slab slicing in-kernel.
    cout, cin = w_pt.shape[0], w_pt.shape[1]
    w = jnp.transpose(w_pt, (0, 2, 3, 1))                      # (cout, 3, 3, cin)
    w = jnp.pad(w, ((0, coutp - cout), (0, 0), (0, 0), (0, cinp - cin)))
    return w.reshape(coutp, 9 * cinp).astype(dtype)


def _pitch(x_nchw):
    """(B, C, H, W) -> (B, C, H*(W+2)): one zero column on each side of every
    image row (data (r, c) at flat r*(W+2) + c + 1)."""
    B, C, H, W = x_nchw.shape
    return jnp.pad(x_nchw, ((0, 0), (0, 0), (0, 0), (1, 1))).reshape(
        B, C, H * (W + 2))


# ----------------------------------------------------------------------------
# Wrappers
# ----------------------------------------------------------------------------
def conv_transpose_2x2_s2(x_nchw, w_pt, b_pt, dtype):
    """ConvTranspose2d(kernel=2, stride=2): (B, Cin, H2, W2) -> (B, Cout, 2H2, 2W2)."""
    B, Cin, H2, W2 = x_nchw.shape
    Cout = w_pt.shape[1]
    S2 = H2 * W2
    x_flat = x_nchw.reshape(B, Cin, S2).astype(dtype)
    w_flat = jnp.transpose(w_pt, (2, 3, 1, 0)).reshape(4 * Cout, Cin).astype(dtype)
    b_flat = jnp.tile(b_pt, 4).reshape(4 * Cout, 1).astype(jnp.float32)

    y = pl.pallas_call(
        _convt_kernel,
        out_shape=jax.ShapeDtypeStruct((B, 4 * Cout, S2), dtype),
        grid=(B,),
        in_specs=[
            pl.BlockSpec((1, Cin, S2), lambda i: (i, 0, 0)),
            pl.BlockSpec((4 * Cout, Cin), lambda i: (0, 0)),
            pl.BlockSpec((4 * Cout, 1), lambda i: (0, 0)),
        ],
        out_specs=pl.BlockSpec((1, 4 * Cout, S2), lambda i: (i, 0, 0)),
        compiler_params=_compiler_params(),
    )(x_flat, w_flat, b_flat)

    # TODO(synk): the 2x2 (kh, kw) spatial de-interleave remains an XLA-level
    # reshape/transpose; fusing it in-kernel needs lane-strided stores.
    y = y.reshape(B, 2, 2, Cout, H2, W2)
    return jnp.transpose(y, (0, 3, 4, 1, 5, 2)).reshape(B, Cout, 2 * H2, 2 * W2)


def expansion_convs(ff_p, up_p, contr_p, params, H, W, dtype):
    """Fused conv1 -> conv2 -> conv3 -> (+ contr + upscaled).  Pitched I/O,
    one pallas_call, intermediate activations stay in VMEM."""
    B, c_ff, HP = ff_p.shape
    c_up = up_p.shape[1]
    cin1 = c_ff + c_up
    P = W + 2
    assert HP == H * P

    cout = params['conv1'][0].shape[0]
    sub = 16 if dtype == jnp.bfloat16 else 8
    cp = _round_up(cout, sub)            # sublane-padded channel count

    w1 = _w9(params['conv1'][0], cin1, cp, dtype)
    s1, h1 = _fold_bn(*params['conv1'][1:], cp)
    w2 = _w9(params['conv2'][0], cp, cp, dtype)
    s2, h2 = _fold_bn(*params['conv2'][1:], cp)
    w3 = _w9(params['conv3'][0], cp, cp, dtype)
    s3, h3 = _fold_bn(*params['conv3'][1:], cp)

    col = jnp.arange(HP) % P
    mask = ((col >= 1) & (col <= W)).astype(jnp.float32).reshape(1, HP)

    full = lambda i: (0, 0)
    kernel = functools.partial(_expansion_convs_kernel, H=H, P=P)
    return pl.pallas_call(
        kernel,
        out_shape=jax.ShapeDtypeStruct((B, cout, HP), jnp.float32),
        grid=(B,),
        in_specs=[
            pl.BlockSpec((1, c_ff, HP), lambda i: (i, 0, 0)),
            pl.BlockSpec((1, c_up, HP), lambda i: (i, 0, 0)),
            pl.BlockSpec((1, cout, HP), lambda i: (i, 0, 0)),
            pl.BlockSpec(w1.shape, full),
            pl.BlockSpec((cp, 1), full),
            pl.BlockSpec((cp, 1), full),
            pl.BlockSpec(w2.shape, full),
            pl.BlockSpec((cp, 1), full),
            pl.BlockSpec((cp, 1), full),
            pl.BlockSpec(w3.shape, full),
            pl.BlockSpec((cp, 1), full),
            pl.BlockSpec((cp, 1), full),
            pl.BlockSpec((1, HP), full),
        ],
        out_specs=pl.BlockSpec((1, cout, HP), lambda i: (i, 0, 0)),
        scratch_shapes=[
            pltpu.VMEM((cin1, (H + 3) * P), dtype),   # padded conv1 input
            pltpu.VMEM((cp, (H + 3) * P), dtype),     # padded conv2 input
            pltpu.VMEM((cp, (H + 3) * P), dtype),     # padded conv3 input
        ],
        compiler_params=_compiler_params(),
    )(ff_p, up_p, contr_p, w1, s1, h1, w2, s2, h2, w3, s3, h3, mask)


# ----------------------------------------------------------------------------
# ExpansionBlock forward (residual=False): conv_t -> [concat -> 3x ConvBlock]
# -> out = contr_input + convs_out + upscaled.  NCHW in, NCHW f32 out.
# ----------------------------------------------------------------------------
def expansion_block_forward(params, x_nchw, ff_nchw, contr_nchw,
                            compute_dtype=jnp.float32):
    dt = compute_dtype
    B, c_ff, H, W = ff_nchw.shape
    P = W + 2

    if x_nchw is not None:
        upscaled = conv_transpose_2x2_s2(x_nchw, params['convt_w'],
                                         params['convt_b'], dt)
    else:
        upscaled = ff_nchw

    # Cheap XLA-side row-pitching (one pad per tensor); everything from here
    # to the output de-pitch slice is a single fused Pallas kernel per image.
    ff_p = _pitch(ff_nchw.astype(dt))
    up_p = _pitch(upscaled.astype(dt))
    contr_p = _pitch(contr_nchw.astype(jnp.float32))

    out_p = expansion_convs(ff_p, up_p, contr_p, params, H, W, dt)
    return out_p.reshape(B, -1, H, P)[:, :, :, 1:1 + W]


# ----------------------------------------------------------------------------
# Pure-JAX reference (independent path) for correctness checking.
# ----------------------------------------------------------------------------
def ref_forward(params, x_nchw, ff_nchw, contr_nchw, eps=1e-5):
    to_nhwc = lambda t: jnp.transpose(t, (0, 2, 3, 1))
    ff, contr = to_nhwc(ff_nchw), to_nhwc(contr_nchw)

    if x_nchw is not None:
        x = to_nhwc(x_nchw)
        w, b = params['convt_w'], params['convt_b']
        B, H2, W2, _ = x.shape
        Co = w.shape[1]
        up = jnp.zeros((B, 2 * H2, 2 * W2, Co), jnp.float32)
        for kh in range(2):
            for kw in range(2):
                v = jnp.einsum('bhwi,io->bhwo', x, w[:, :, kh, kw],
                               precision=lax.Precision.HIGHEST) + b
                up = up.at[:, kh::2, kw::2, :].set(v)
    else:
        up = ff

    h = jnp.concatenate([ff, up], axis=-1)
    for name in ('conv1', 'conv2', 'conv3'):
        cw, cb, g, bt, mu, var = params[name]
        whwio = jnp.transpose(cw, (2, 3, 1, 0))
        y = lax.conv_general_dilated(h, whwio, (1, 1), 'SAME',
                                     dimension_numbers=('NHWC', 'HWIO', 'NHWC'),
                                     precision=lax.Precision.HIGHEST)
        y = (y + cb - mu) / jnp.sqrt(var + eps) * g + bt
        h = jnp.maximum(y, 0.0)
    return jnp.transpose(contr + h + up, (0, 3, 1, 2))


# ----------------------------------------------------------------------------
# Deterministic parameter init (shapes from ExpansionBlock.__init__, residual=False)
# ----------------------------------------------------------------------------
def init_params(key, in_channels, out_channels):
    ks = jax.random.split(key, 5)
    nrm = lambda k, shape, s=0.1: s * jax.random.normal(k, shape, jnp.float32)

    def conv_bn(k, cin, cout):
        kk = jax.random.split(k, 6)
        w = nrm(kk[0], (cout, cin, 3, 3))
        b = nrm(kk[1], (cout,))
        gamma = 1.0 + 0.1 * jax.random.normal(kk[2], (cout,), jnp.float32)
        beta = nrm(kk[3], (cout,))
        mean = nrm(kk[4], (cout,))
        var = 0.5 + jax.random.uniform(kk[5], (cout,), jnp.float32)
        return (w, b, gamma, beta, mean, var)

    return {
        'convt_w': nrm(ks[0], (in_channels, out_channels, 2, 2)),
        'convt_b': nrm(ks[1], (out_channels,)),
        'conv1': conv_bn(ks[2], in_channels, out_channels),
        'conv2': conv_bn(ks[3], out_channels, out_channels),
        'conv3': conv_bn(ks[4], out_channels, out_channels),
    }


def _bf16_representable(t):
    # Round test inputs/weights to bf16-representable f32 values so precision
    # differences from MXU pass decomposition stay small in the f32 check.
    return t.astype(jnp.bfloat16).astype(jnp.float32)


if __name__ == "__main__":
    key = jax.random.PRNGKey(0)
    kx, kff, kc, kp = jax.random.split(key, 4)

    B, IN_C, OUT_C, H, W = 2, 8, 4, 16, 16
    # x = lower-resolution decoder feature; ff/contr = skip connections.
    x = _bf16_representable(
        jax.random.normal(kx, (B, IN_C, H // 2, W // 2), jnp.float32))
    ff_input = _bf16_representable(
        jax.random.normal(kff, (B, IN_C - OUT_C, H, W), jnp.float32))
    contr_input = _bf16_representable(
        jax.random.normal(kc, (B, OUT_C, H, W), jnp.float32))

    params = init_params(kp, IN_C, OUT_C)
    params['convt_w'] = _bf16_representable(params['convt_w'])
    for name in ('conv1', 'conv2', 'conv3'):
        cw, cb, g, bt, mu, var = params[name]
        params[name] = (_bf16_representable(cw), cb, g, bt, mu, var)

    fwd = jax.jit(expansion_block_forward, static_argnames=('compute_dtype',))
    ref = jax.block_until_ready(ref_forward(params, x, ff_input, contr_input))

    # f32 compute path.
    out_f32 = jax.block_until_ready(
        fwd(params, x, ff_input, contr_input, compute_dtype=jnp.float32))
    assert out_f32.shape == (B, OUT_C, H, W), out_f32.shape
    err_f32 = float(jnp.max(jnp.abs(out_f32 - ref)))
    assert err_f32 < 2e-2, f"f32 max abs err too large: {err_f32}"

    # bf16 compute path (recommended, bandwidth-bound block): bf16 weights /
    # activations, f32 MXU accumulation and f32 scale/shift/residual.
    out_bf16 = jax.block_until_ready(
        fwd(params, x, ff_input, contr_input, compute_dtype=jnp.bfloat16))
    assert out_bf16.shape == (B, OUT_C, H, W), out_bf16.shape
    err_bf16 = float(jnp.max(jnp.abs(out_bf16 - ref)))
    assert err_bf16 < 1e-1, f"bf16 max abs err too large: {err_bf16}"

    print("KERNEL_OK")
</pallas_src>

<mosaic_0001>
module attributes {stable_mosaic.version = 11 : i64} {
  func.func @_convt_kernel(%arg0: i32, %arg1: memref<1x8x64xf32, #tpu.memory_space<vmem>>, %arg2: memref<16x8xf32, #tpu.memory_space<vmem>>, %arg3: memref<16x1xf32, #tpu.memory_space<vmem>>, %arg4: memref<1x16x64xf32, #tpu.memory_space<vmem>>) attributes {dimension_semantics = [#tpu.dimension_semantics<parallel>], iteration_bounds = array<i64: 2>, scalar_prefetch = 0 : i64, scratch_operands = 0 : i64, tpu.core_type = #tpu.core_type<tc>, window_params = [{transform_indices = @transform_0, window_bounds = array<i64: 1, 8, 64>}, {pipeline_mode = #tpu.pipeline_mode<synchronous>, transform_indices = @transform_1, window_bounds = array<i64: 16, 8>}, {pipeline_mode = #tpu.pipeline_mode<synchronous>, transform_indices = @transform_2, window_bounds = array<i64: 16, 1>}, {transform_indices = @transform_3, window_bounds = array<i64: 1, 16, 64>}]} {
    %c0 = arith.constant 0 : index
    %c0_0 = arith.constant 0 : index
    %0 = vector.load %arg2[%c0, %c0_0] : memref<16x8xf32, #tpu.memory_space<vmem>>, vector<16x8xf32>
    %c0_1 = arith.constant 0 : index
    %c0_2 = arith.constant 0 : index
    %c0_3 = arith.constant 0 : index
    %1 = vector.load %arg1[%c0_1, %c0_2, %c0_3] : memref<1x8x64xf32, #tpu.memory_space<vmem>>, vector<1x8x64xf32>
    %2 = vector.shape_cast %1 : vector<1x8x64xf32> to vector<8x64xf32>
    %cst = arith.constant dense<0.000000e+00> : vector<16x64xf32>
    %3 = tpu.matmul %0, %2, %cst {dimension_numbers = #tpu.dot_dimension_numbers<[1], [0], [0], [1], [0, 0, 1, 1], [], []>} : vector<16x8xf32>, vector<8x64xf32>, vector<16x64xf32> -> vector<16x64xf32>
    %c0_4 = arith.constant 0 : index
    %c0_5 = arith.constant 0 : index
    %4 = vector.load %arg3[%c0_4, %c0_5] : memref<16x1xf32, #tpu.memory_space<vmem>>, vector<16x1xf32>
    %5 = vector.broadcast %4 : vector<16x1xf32> to vector<16x64xf32>
    %6 = arith.addf %3, %5 : vector<16x64xf32>
    %c0_6 = arith.constant 0 : index
    %c0_7 = arith.constant 0 : index
    %c0_8 = arith.constant 0 : index
    %7 = vector.load %arg4[%c0_6, %c0_7, %c0_8] : memref<1x16x64xf32, #tpu.memory_space<vmem>>, vector<1x16x64xf32>
    %8 = vector.shape_cast %7 : vector<1x16x64xf32> to vector<16x64xf32>
    %9 = vector.shape_cast %6 : vector<16x64xf32> to vector<1x16x64xf32>
    tpu.vector_store %arg4[%c0_6, %c0_7, %c0_8], %9 {strides = array<i32>} : memref<1x16x64xf32, #tpu.memory_space<vmem>>, vector<1x16x64xf32>,
    return
  }
  func.func @transform_0(%arg0: i32) -> (i32, i32, i32) {
    %c0_i32 = arith.constant 0 : i32
    %c0_i32_0 = arith.constant 0 : i32
    %c0_i32_1 = arith.constant 0 : i32
    return %arg0, %c0_i32, %c0_i32_0 : i32, i32, i32
  }
  func.func @transform_1(%arg0: i32) -> (i32, i32) {
    %c0_i32 = arith.constant 0 : i32
    %c0_i32_0 = arith.constant 0 : i32
    %c0_i32_1 = arith.constant 0 : i32
    return %c0_i32, %c0_i32_0 : i32, i32
  }
  func.func @transform_2(%arg0: i32) -> (i32, i32) {
    %c0_i32 = arith.constant 0 : i32
    %c0_i32_0 = arith.constant 0 : i32
    %c0_i32_1 = arith.constant 0 : i32
    return %c0_i32, %c0_i32_0 : i32, i32
  }
  func.func @transform_3(%arg0: i32) -> (i32, i32, i32) {
    %c0_i32 = arith.constant 0 : i32
    %c0_i32_0 = arith.constant 0 : i32
    %c0_i32_1 = arith.constant 0 : i32
    return %arg0, %c0_i32, %c0_i32_0 : i32, i32, i32
  }
}

module attributes {stable_mosaic.version = 11 : i64} {
  func.func @_expansion_convs_kernel(%arg0: i32, %arg1: memref<1x4x288xf32, #tpu.memory_space<vmem>>, %arg2: memref<1x4x288xf32, #tpu.memory_space<vmem>>, %arg3: memref<1x4x288xf32, #tpu.memory_space<vmem>>, %arg4: memref<8x72xf32, #tpu.memory_space<vmem>>, %arg5: memref<8x1xf32, #tpu.memory_space<vmem>>, %arg6: memref<8x1xf32, #tpu.memory_space<vmem>>, %arg7: memref<8x72xf32, #tpu.memory_space<vmem>>, %arg8: memref<8x1xf32, #tpu.memory_space<vmem>>, %arg9: memref<8x1xf32, #tpu.memory_space<vmem>>, %arg10: memref<8x72xf32, #tpu.memory_space<vmem>>, %arg11: memref<8x1xf32, #tpu.memory_space<vmem>>, %arg12: memref<8x1xf32, #tpu.memory_space<vmem>>, %arg13: memref<1x288xf32, #tpu.memory_space<vmem>>, %arg14: memref<1x4x288xf32, #tpu.memory_space<vmem>>, %arg15: memref<8x342xf32, #tpu.memory_space<vmem>>, %arg16: memref<8x342xf32, #tpu.memory_space<vmem>>, %arg17: memref<8x342xf32, #tpu.memory_space<vmem>>) attributes {dimension_semantics = [#tpu.dimension_semantics<parallel>], iteration_bounds = array<i64: 2>, scalar_prefetch = 0 : i64, scratch_operands = 3 : i64, tpu.core_type = #tpu.core_type<tc>, window_params = [{transform_indices = @transform_0, window_bounds = array<i64: 1, 4, 288>}, {transform_indices = @transform_1, window_bounds = array<i64: 1, 4, 288>}, {transform_indices = @transform_2, window_bounds = array<i64: 1, 4, 288>}, {pipeline_mode = #tpu.pipeline_mode<synchronous>, transform_indices = @transform_3, window_bounds = array<i64: 8, 72>}, {pipeline_mode = #tpu.pipeline_mode<synchronous>, transform_indices = @transform_4, window_bounds = array<i64: 8, 1>}, {pipeline_mode = #tpu.pipeline_mode<synchronous>, transform_indices = @transform_5, window_bounds = array<i64: 8, 1>}, {pipeline_mode = #tpu.pipeline_mode<synchronous>, transform_indices = @transform_6, window_bounds = array<i64: 8, 72>}, {pipeline_mode = #tpu.pipeline_mode<synchronous>, transform_indices = @transform_7, window_bounds = array<i64: 8, 1>}, {pipeline_mode = #tpu.pipeline_mode<synchronous>, transform_indices = @transform_8, window_bounds = array<i64: 8, 1>}, {pipeline_mode = #tpu.pipeline_mode<synchronous>, transform_indices = @transform_9, window_bounds = array<i64: 8, 72>}, {pipeline_mode = #tpu.pipeline_mode<synchronous>, transform_indices = @transform_10, window_bounds = array<i64: 8, 1>}, {pipeline_mode = #tpu.pipeline_mode<synchronous>, transform_indices = @transform_11, window_bounds = array<i64: 8, 1>}, {pipeline_mode = #tpu.pipeline_mode<synchronous>, transform_indices = @transform_12, window_bounds = array<i64: 1, 288>}, {transform_indices = @transform_13, window_bounds = array<i64: 1, 4, 288>}]} {
    %c0 = arith.constant 0 : index
    %c0_0 = arith.constant 0 : index
    %0 = vector.load %arg13[%c0, %c0_0] : memref<1x288xf32, #tpu.memory_space<vmem>>, vector<1x288xf32>
    %cst = arith.constant 0.000000e+00 : f32
    %1 = vector.broadcast %cst : f32 to vector<8x19xf32>
    %c0_1 = arith.constant 0 : index
    %c0_2 = arith.constant 0 : index
    %2 = vector.load %arg15[%c0_1, %c0_2] : memref<8x342xf32, #tpu.memory_space<vmem>>, vector<8x19xf32>
    tpu.vector_store %arg15[%c0_1, %c0_2], %1 {strides = array<i32>} : memref<8x342xf32, #tpu.memory_space<vmem>>, vector<8x19xf32>,
    %cst_3 = arith.constant 0.000000e+00 : f32
    %3 = vector.broadcast %cst_3 : f32 to vector<8x35xf32>
    %c0_4 = arith.constant 0 : index
    %c307 = arith.constant 307 : index
    %4 = vector.load %arg15[%c0_4, %c307] : memref<8x342xf32, #tpu.memory_space<vmem>>, vector<8x35xf32>
    tpu.vector_store %arg15[%c0_4, %c307], %3 {strides = array<i32>} : memref<8x342xf32, #tpu.memory_space<vmem>>, vector<8x35xf32>,
    %cst_5 = arith.constant 0.000000e+00 : f32
    %5 = vector.broadcast %cst_5 : f32 to vector<8x19xf32>
    %c0_6 = arith.constant 0 : index
    %c0_7 = arith.constant 0 : index
    %6 = vector.load %arg16[%c0_6, %c0_7] : memref<8x342xf32, #tpu.memory_space<vmem>>, vector<8x19xf32>
    tpu.vector_store %arg16[%c0_6, %c0_7], %5 {strides = array<i32>} : memref<8x342xf32, #tpu.memory_space<vmem>>, vector<8x19xf32>,
    %cst_8 = arith.constant 0.000000e+00 : f32
    %7 = vector.broadcast %cst_8 : f32 to vector<8x35xf32>
    %c0_9 = arith.constant 0 : index
    %c307_10 = arith.constant 307 : index
    %8 = vector.load %arg16[%c0_9, %c307_10] : memref<8x342xf32, #tpu.memory_space<vmem>>, vector<8x35xf32>
    tpu.vector_store %arg16[%c0_9, %c307_10], %7 {strides = array<i32>} : memref<8x342xf32, #tpu.memory_space<vmem>>, vector<8x35xf32>,
    %cst_11 = arith.constant 0.000000e+00 : f32
    %9 = vector.broadcast %cst_11 : f32 to vector<8x19xf32>
    %c0_12 = arith.constant 0 : index
    %c0_13 = arith.constant 0 : index
    %10 = vector.load %arg17[%c0_12, %c0_13] : memref<8x342xf32, #tpu.memory_space<vmem>>, vector<8x19xf32>
    tpu.vector_store %arg17[%c0_12, %c0_13], %9 {strides = array<i32>} : memref<8x342xf32, #tpu.memory_space<vmem>>, vector<8x19xf32>,
    %cst_14 = arith.constant 0.000000e+00 : f32
    %11 = vector.broadcast %cst_14 : f32 to vector<8x35xf32>
    %c0_15 = arith.constant 0 : index
    %c307_16 = arith.constant 307 : index
    %12 = vector.load %arg17[%c0_15, %c307_16] : memref<8x342xf32, #tpu.memory_space<vmem>>, vector<8x35xf32>
    tpu.vector_store %arg17[%c0_15, %c307_16], %11 {strides = array<i32>} : memref<8x342xf32, #tpu.memory_space<vmem>>, vector<8x35xf32>,
    %c0_17 = arith.constant 0 : index
    %c0_18 = arith.constant 0 : index
    %c0_19 = arith.constant 0 : index
    %13 = vector.load %arg1[%c0_17, %c0_18, %c0_19] : memref<1x4x288xf32, #tpu.memory_space<vmem>>, vector<1x4x288xf32>
    %14 = vector.shape_cast %13 : vector<1x4x288xf32> to vector<4x288xf32>
    %c0_20 = arith.constant 0 : index
    %c19 = arith.constant 19 : index
    %15 = vector.load %arg15[%c0_20, %c19] : memref<8x342xf32, #tpu.memory_space<vmem>>, vector<4x288xf32>
    tpu.vector_store %arg15[%c0_20, %c19], %14 {strides = array<i32>} : memref<8x342xf32, #tpu.memory_space<vmem>>, vector<4x288xf32>,
    %c0_21 = arith.constant 0 : index
    %c0_22 = arith.constant 0 : index
    %c0_23 = arith.constant 0 : index
    %16 = vector.load %arg2[%c0_21, %c0_22, %c0_23] : memref<1x4x288xf32, #tpu.memory_space<vmem>>, vector<1x4x288xf32>
    %17 = vector.shape_cast %16 : vector<1x4x288xf32> to vector<4x288xf32>
    %c4 = arith.constant 4 : index
    %c19_24 = arith.constant 19 : index
    %18 = vector.load %arg15[%c4, %c19_24] : memref<8x342xf32, #tpu.memory_space<vmem>>, vector<4x288xf32>
    tpu.vector_store %arg15[%c4, %c19_24], %17 {strides = array<i32>} : memref<8x342xf32, #tpu.memory_space<vmem>>, vector<4x288xf32>,
    %c0_25 = arith.constant 0 : index
    %c0_26 = arith.constant 0 : index
    %19 = vector.load %arg4[%c0_25, %c0_26] : memref<8x72xf32, #tpu.memory_space<vmem>>, vector<8x8xf32>
    %c0_27 = arith.constant 0 : index
    %c0_28 = arith.constant 0 : index
    %20 = vector.load %arg15[%c0_27, %c0_28] : memref<8x342xf32, #tpu.memory_space<vmem>>, vector<8x288xf32>
    %cst_29 = arith.constant dense<0.000000e+00> : vector<8x288xf32>
    %21 = tpu.matmul %19, %20, %cst_29 {dimension_numbers = #tpu.dot_dimension_numbers<[1], [0], [0], [1], [0, 0, 1, 1], [], []>} : vector<8x8xf32>, vector<8x288xf32>, vector<8x288xf32> -> vector<8x288xf32>
    %c0_30 = arith.constant 0 : index
    %c8 = arith.constant 8 : index
    %22 = vector.load %arg4[%c0_30, %c8] : memref<8x72xf32, #tpu.memory_space<vmem>>, vector<8x8xf32>
    %c0_31 = arith.constant 0 : index
    %c1 = arith.constant 1 : index
    %23 = vector.load %arg15[%c0_31, %c1] : memref<8x342xf32, #tpu.memory_space<vmem>>, vector<8x288xf32>
    %cst_32 = arith.constant dense<0.000000e+00> : vector<8x288xf32>
    %24 = tpu.matmul %22, %23, %cst_32 {dimension_numbers = #tpu.dot_dimension_numbers<[1], [0], [0], [1], [0, 0, 1, 1], [], []>} : vector<8x8xf32>, vector<8x288xf32>, vector<8x288xf32> -> vector<8x288xf32>
    %25 = arith.addf %21, %24 : vector<8x288xf32>
    %c0_33 = arith.constant 0 : index
    %c16 = arith.constant 16 : index
    %26 = vector.load %arg4[%c0_33, %c16] : memref<8x72xf32, #tpu.memory_space<vmem>>, vector<8x8xf32>
    %c0_34 = arith.constant 0 : index
    %c2 = arith.constant 2 : index
    %27 = vector.load %arg15[%c0_34, %c2] : memref<8x342xf32, #tpu.memory_space<vmem>>, vector<8x288xf32>
    %cst_35 = arith.constant dense<0.000000e+00> : vector<8x288xf32>
    %28 = tpu.matmul %26, %27, %cst_35 {dimension_numbers = #tpu.dot_dimension_numbers<[1], [0], [0], [1], [0, 0, 1, 1], [], []>} : vector<8x8xf32>, vector<8x288xf32>, vector<8x288xf32> -> vector<8x288xf32>
    %29 = arith.addf %25, %28 : vector<8x288xf32>
    %c0_36 = arith.constant 0 : index
    %c24 = arith.constant 24 : index
    %30 = vector.load %arg4[%c0_36, %c24] : memref<8x72xf32, #tpu.memory_space<vmem>>, vector<8x8xf32>
    %c0_37 = arith.constant 0 : index
    %c18 = arith.constant 18 : index
    %31 = vector.load %arg15[%c0_37, %c18] : memref<8x342xf32, #tpu.memory_space<vmem>>, vector<8x288xf32>
    %cst_38 = arith.constant dense<0.000000e+00> : vector<8x288xf32>
    %32 = tpu.matmul %30, %31, %cst_38 {dimension_numbers = #tpu.dot_dimension_numbers<[1], [0], [0], [1], [0, 0, 1, 1], [], []>} : vector<8x8xf32>, vector<8x288xf32>, vector<8x288xf32> -> vector<8x288xf32>
    %33 = arith.addf %29, %32 : vector<8x288xf32>
    %c0_39 = arith.constant 0 : index
    %c32 = arith.constant 32 : index
    %34 = vector.load %arg4[%c0_39, %c32] : memref<8x72xf32, #tpu.memory_space<vmem>>, vector<8x8xf32>
    %c0_40 = arith.constant 0 : index
    %c19_41 = arith.constant 19 : index
    %35 = vector.load %arg15[%c0_40, %c19_41] : memref<8x342xf32, #tpu.memory_space<vmem>>, vector<8x288xf32>
    %cst_42 = arith.constant dense<0.000000e+00> : vector<8x288xf32>
    %36 = tpu.matmul %34, %35, %cst_42 {dimension_numbers = #tpu.dot_dimension_numbers<[1], [0], [0], [1], [0, 0, 1, 1], [], []>} : vector<8x8xf32>, vector<8x288xf32>, vector<8x288xf32> -> vector<8x288xf32>
    %37 = arith.addf %33, %36 : vector<8x288xf32>
    %c0_43 = arith.constant 0 : index
    %c40 = arith.constant 40 : index
    %38 = vector.load %arg4[%c0_43, %c40] : memref<8x72xf32, #tpu.memory_space<vmem>>, vector<8x8xf32>
    %c0_44 = arith.constant 0 : index
    %c20 = arith.constant 20 : index
    %39 = vector.load %arg15[%c0_44, %c20] : memref<8x342xf32, #tpu.memory_space<vmem>>, vector<8x288xf32>
    %cst_45 = arith.constant dense<0.000000e+00> : vector<8x288xf32>
    %40 = tpu.matmul %38, %39, %cst_45 {dimension_numbers = #tpu.dot_dimension_numbers<[1], [0], [0], [1], [0, 0, 1, 1], [], []>} : vector<8x8xf32>, vector<8x288xf32>, vector<8x288xf32> -> vector<8x288xf32>
    %41 = arith.addf %37, %40 : vector<8x288xf32>
    %c0_46 = arith.constant 0 : index
    %c48 = arith.constant 48 : index
    %42 = vector.load %arg4[%c0_46, %c48] : memref<8x72xf32, #tpu.memory_space<vmem>>, vector<8x8xf32>
    %c0_47 = arith.constant 0 : index
    %c36 = arith.constant 36 : index
    %43 = vector.load %arg15[%c0_47, %c36] : memref<8x342xf32, #tpu.memory_space<vmem>>, vector<8x288xf32>
    %cst_48 = arith.constant dense<0.000000e+00> : vector<8x288xf32>
    %44 = tpu.matmul %42, %43, %cst_48 {dimension_numbers = #tpu.dot_dimension_numbers<[1], [0], [0], [1], [0, 0, 1, 1], [], []>} : vector<8x8xf32>, vector<8x288xf32>, vector<8x288xf32> -> vector<8x288xf32>
    %45 = arith.addf %41, %44 : vector<8x288xf32>
    %c0_49 = arith.constant 0 : index
    %c56 = arith.constant 56 : index
    %46 = vector.load %arg4[%c0_49, %c56] : memref<8x72xf32, #tpu.memory_space<vmem>>, vector<8x8xf32>
    %c0_50 = arith.constant 0 : index
    %c37 = arith.constant 37 : index
    %47 = vector.load %arg15[%c0_50, %c37] : memref<8x342xf32, #tpu.memory_space<vmem>>, vector<8x288xf32>
    %cst_51 = arith.constant dense<0.000000e+00> : vector<8x288xf32>
    %48 = tpu.matmul %46, %47, %cst_51 {dimension_numbers = #tpu.dot_dimension_numbers<[1], [0], [0], [1], [0, 0, 1, 1], [], []>} : vector<8x8xf32>, vector<8x288xf32>, vector<8x288xf32> -> vector<8x288xf32>
    %49 = arith.addf %45, %48 : vector<8x288xf32>
    %c0_52 = arith.constant 0 : index
    %c64 = arith.constant 64 : index
    %50 = vector.load %arg4[%c0_52, %c64] : memref<8x72xf32, #tpu.memory_space<vmem>>, vector<8x8xf32>
    %c0_53 = arith.constant 0 : index
    %c38 = arith.constant 38 : index
    %51 = vector.load %arg15[%c0_53, %c38] : memref<8x342xf32, #tpu.memory_space<vmem>>, vector<8x288xf32>
    %cst_54 = arith.constant dense<0.000000e+00> : vector<8x288xf32>
    %52 = tpu.matmul %50, %51, %cst_54 {dimension_numbers = #tpu.dot_dimension_numbers<[1], [0], [0], [1], [0, 0, 1, 1], [], []>} : vector<8x8xf32>, vector<8x288xf32>, vector<8x288xf32> -> vector<8x288xf32>
    %53 = arith.addf %49, %52 : vector<8x288xf32>
    %c0_55 = arith.constant 0 : index
    %c0_56 = arith.constant 0 : index
    %54 = vector.load %arg5[%c0_55, %c0_56] : memref<8x1xf32, #tpu.memory_space<vmem>>, vector<8x1xf32>
    %55 = vector.broadcast %54 : vector<8x1xf32> to vector<8x288xf32>
    %56 = arith.mulf %53, %55 : vector<8x288xf32>
    %c0_57 = arith.constant 0 : index
    %c0_58 = arith.constant 0 : index
    %57 = vector.load %arg6[%c0_57, %c0_58] : memref<8x1xf32, #tpu.memory_space<vmem>>, vector<8x1xf32>
    %58 = vector.broadcast %57 : vector<8x1xf32> to vector<8x288xf32>
    %59 = arith.addf %56, %58 : vector<8x288xf32>
    %cst_59 = arith.constant 0.000000e+00 : f32
    %60 = vector.broadcast %cst_59 : f32 to vector<8x288xf32>
    %61 = arith.maximumf %59, %60 : vector<8x288xf32>
    %62 = vector.broadcast %0 : vector<1x288xf32> to vector<8x288xf32>
    %63 = arith.mulf %61, %62 : vector<8x288xf32>
    %c0_60 = arith.constant 0 : index
    %c19_61 = arith.constant 19 : index
    %64 = vector.load %arg16[%c0_60, %c19_61] : memref<8x342xf32, #tpu.memory_space<vmem>>, vector<8x288xf32>
    tpu.vector_store %arg16[%c0_60, %c19_61], %63 {strides = array<i32>} : memref<8x342xf32, #tpu.memory_space<vmem>>, vector<8x288xf32>,
    %c0_62 = arith.constant 0 : index
    %c0_63 = arith.constant 0 : index
    %65 = vector.load %arg7[%c0_62, %c0_63] : memref<8x72xf32, #tpu.memory_space<vmem>>, vector<8x8xf32>
    %c0_64 = arith.constant 0 : index
    %c0_65 = arith.constant 0 : index
    %66 = vector.load %arg16[%c0_64, %c0_65] : memref<8x342xf32, #tpu.memory_space<vmem>>, vector<8x288xf32>
    %cst_66 = arith.constant dense<0.000000e+00> : vector<8x288xf32>
    %67 = tpu.matmul %65, %66, %cst_66 {dimension_numbers = #tpu.dot_dimension_numbers<[1], [0], [0], [1], [0, 0, 1, 1], [], []>} : vector<8x8xf32>, vector<8x288xf32>, vector<8x288xf32> -> vector<8x288xf32>
    %c0_67 = arith.constant 0 : index
    %c8_68 = arith.constant 8 : index
    %68 = vector.load %arg7[%c0_67, %c8_68] : memref<8x72xf32, #tpu.memory_space<vmem>>, vector<8x8xf32>
    %c0_69 = arith.constant 0 : index
    %c1_70 = arith.constant 1 : index
    %69 = vector.load %arg16[%c0_69, %c1_70] : memref<8x342xf32, #tpu.memory_space<vmem>>, vector<8x288xf32>
    %cst_71 = arith.constant dense<0.000000e+00> : vector<8x288xf32>
    %70 = tpu.matmul %68, %69, %cst_71 {dimension_numbers = #tpu.dot_dimension_numbers<[1], [0], [0], [1], [0, 0, 1, 1], [], []>} : vector<8x8xf32>, vector<8x288xf32>, vector<8x288xf32> -> vector<8x288xf32>
    %71 = arith.addf %67, %70 : vector<8x288xf32>
    %c0_72 = arith.constant 0 : index
    %c16_73 = arith.constant 16 : index
    %72 = vector.load %arg7[%c0_72, %c16_73] : memref<8x72xf32, #tpu.memory_space<vmem>>, vector<8x8xf32>
    %c0_74 = arith.constant 0 : index
    %c2_75 = arith.constant 2 : index
    %73 = vector.load %arg16[%c0_74, %c2_75] : memref<8x342xf32, #tpu.memory_space<vmem>>, vector<8x288xf32>
    %cst_76 = arith.constant dense<0.000000e+00> : vector<8x288xf32>
    %74 = tpu.matmul %72, %73, %cst_76 {dimension_numbers = #tpu.dot_dimension_numbers<[1], [0], [0], [1], [0, 0, 1, 1], [], []>} : vector<8x8xf32>, vector<8x288xf32>, vector<8x288xf32> -> vector<8x288xf32>
    %75 = arith.addf %71, %74 : vector<8x288xf32>
    %c0_77 = arith.constant 0 : index
    %c24_78 = arith.constant 24 : index
    %76 = vector.load %arg7[%c0_77, %c24_78] : memref<8x72xf32, #tpu.memory_space<vmem>>, vector<8x8xf32>
    %c0_79 = arith.constant 0 : index
    %c18_80 = arith.constant 18 : index
    %77 = vector.load %arg16[%c0_79, %c18_80] : memref<8x342xf32, #tpu.memory_space<vmem>>, vector<8x288xf32>
    %cst_81 = arith.constant dense<0.000000e+00> : vector<8x288xf32>
    %78 = tpu.matmul %76, %77, %cst_81 {dimension_numbers = #tpu.dot_dimension_numbers<[1], [0], [0], [1], [0, 0, 1, 1], [], []>} : vector<8x8xf32>, vector<8x288xf32>, vector<8x288xf32> -> vector<8x288xf32>
    %79 = arith.addf %75, %78 : vector<8x288xf32>
    %c0_82 = arith.constant 0 : index
    %c32_83 = arith.constant 32 : index
    %80 = vector.load %arg7[%c0_82, %c32_83] : memref<8x72xf32, #tpu.memory_space<vmem>>, vector<8x8xf32>
    %c0_84 = arith.constant 0 : index
    %c19_85 = arith.constant 19 : index
    %81 = vector.load %arg16[%c0_84, %c19_85] : memref<8x342xf32, #tpu.memory_space<vmem>>, vector<8x288xf32>
    %cst_86 = arith.constant dense<0.000000e+00> : vector<8x288xf32>
    %82 = tpu.matmul %80, %81, %cst_86 {dimension_numbers = #tpu.dot_dimension_numbers<[1], [0], [0], [1], [0, 0, 1, 1], [], []>} : vector<8x8xf32>, vector<8x288xf32>, vector<8x288xf32> -> vector<8x288xf32>
    %83 = arith.addf %79, %82 : vector<8x288xf32>
    %c0_87 = arith.constant 0 : index
    %c40_88 = arith.constant 40 : index
    %84 = vector.load %arg7[%c0_87, %c40_88] : memref<8x72xf32, #tpu.memory_space<vmem>>, vector<8x8xf32>
    %c0_89 = arith.constant 0 : index
    %c20_90 = arith.constant 20 : index
    %85 = vector.load %arg16[%c0_89, %c20_90] : memref<8x342xf32, #tpu.memory_space<vmem>>, vector<8x288xf32>
    %cst_91 = arith.constant dense<0.000000e+00> : vector<8x288xf32>
    %86 = tpu.matmul %84, %85, %cst_91 {dimension_numbers = #tpu.dot_dimension_numbers<[1], [0], [0], [1], [0, 0, 1, 1], [], []>} : vector<8x8xf32>, vector<8x288xf32>, vector<8x288xf32> -> vector<8x288xf32>
    %87 = arith.addf %83, %86 : vector<8x288xf32>
    %c0_92 = arith.constant 0 : index
    %c48_93 = arith.constant 48 : index
    %88 = vector.load %arg7[%c0_92, %c48_93] : memref<8x72xf32, #tpu.memory_space<vmem>>, vector<8x8xf32>
    %c0_94 = arith.constant 0 : index
    %c36_95 = arith.constant 36 : index
    %89 = vector.load %arg16[%c0_94, %c36_95] : memref<8x342xf32, #tpu.memory_space<vmem>>, vector<8x288xf32>
    %cst_96 = arith.constant dense<0.000000e+00> : vector<8x288xf32>
    %90 = tpu.matmul %88, %89, %cst_96 {dimension_numbers = #tpu.dot_dimension_numbers<[1], [0], [0], [1], [0, 0, 1, 1], [], []>} : vector<8x8xf32>, vector<8x288xf32>, vector<8x288xf32> -> vector<8x288xf32>
    %91 = arith.addf %87, %90 : vector<8x288xf32>
    %c0_97 = arith.constant 0 : index
    %c56_98 = arith.constant 56 : index
    %92 = vector.load %arg7[%c0_97, %c56_98] : memref<8x72xf32, #tpu.memory_space<vmem>>, vector<8x8xf32>
    %c0_99 = arith.constant 0 : index
    %c37_100 = arith.constant 37 : index
    %93 = vector.load %arg16[%c0_99, %c37_100] : memref<8x342xf32, #tpu.memory_space<vmem>>, vector<8x288xf32>
    %cst_101 = arith.constant dense<0.000000e+00> : vector<8x288xf32>
    %94 = tpu.matmul %92, %93, %cst_101 {dimension_numbers = #tpu.dot_dimension_numbers<[1], [0], [0], [1], [0, 0, 1, 1], [], []>} : vector<8x8xf32>, vector<8x288xf32>, vector<8x288xf32> -> vector<8x288xf32>
    %95 = arith.addf %91, %94 : vector<8x288xf32>
    %c0_102 = arith.constant 0 : index
    %c64_103 = arith.constant 64 : index
    %96 = vector.load %arg7[%c0_102, %c64_103] : memref<8x72xf32, #tpu.memory_space<vmem>>, vector<8x8xf32>
    %c0_104 = arith.constant 0 : index
    %c38_105 = arith.constant 38 : index
    %97 = vector.load %arg16[%c0_104, %c38_105] : memref<8x342xf32, #tpu.memory_space<vmem>>, vector<8x288xf32>
    %cst_106 = arith.constant dense<0.000000e+00> : vector<8x288xf32>
    %98 = tpu.matmul %96, %97, %cst_106 {dimension_numbers = #tpu.dot_dimension_numbers<[1], [0], [0], [1], [0, 0, 1, 1], [], []>} : vector<8x8xf32>, vector<8x288xf32>, vector<8x288xf32> -> vector<8x288xf32>
    %99 = arith.addf %95, %98 : vector<8x288xf32>
    %c0_107 = arith.constant 0 : index
    %c0_108 = arith.constant 0 : index
    %100 = vector.load %arg8[%c0_107, %c0_108] : memref<8x1xf32, #tpu.memory_space<vmem>>, vector<8x1xf32>
    %101 = vector.broadcast %100 : vector<8x1xf32> to vector<8x288xf32>
    %102 = arith.mulf %99, %101 : vector<8x288xf32>
    %c0_109 = arith.constant 0 : index
    %c0_110 = arith.constant 0 : index
    %103 = vector.load %arg9[%c0_109, %c0_110] : memref<8x1xf32, #tpu.memory_space<vmem>>, vector<8x1xf32>
    %104 = vector.broadcast %103 : vector<8x1xf32> to vector<8x288xf32>
    %105 = arith.addf %102, %104 : vector<8x288xf32>
    %cst_111 = arith.constant 0.000000e+00 : f32
    %106 = vector.broadcast %cst_111 : f32 to vector<8x288xf32>
    %107 = arith.maximumf %105, %106 : vector<8x288xf32>
    %108 = vector.broadcast %0 : vector<1x288xf32> to vector<8x288xf32>
    %109 = arith.mulf %107, %108 : vector<8x288xf32>
    %c0_112 = arith.constant 0 : index
    %c19_113 = arith.constant 19 : index
    %110 = vector.load %arg17[%c0_112, %c19_113] : memref<8x342xf32, #tpu.memory_space<vmem>>, vector<8x288xf32>
    tpu.vector_store %arg17[%c0_112, %c19_113], %109 {strides = array<i32>} : memref<8x342xf32, #tpu.memory_space<vmem>>, vector<8x288xf32>,
    %c0_114 = arith.constant 0 : index
    %c0_115 = arith.constant 0 : index
    %111 = vector.load %arg10[%c0_114, %c0_115] : memref<8x72xf32, #tpu.memory_space<vmem>>, vector<8x8xf32>
    %c0_116 = arith.constant 0 : index
    %c0_117 = arith.constant 0 : index
    %112 = vector.load %arg17[%c0_116, %c0_117] : memref<8x342xf32, #tpu.memory_space<vmem>>, vector<8x288xf32>
    %cst_118 = arith.constant dense<0.000000e+00> : vector<8x288xf32>
    %113 = tpu.matmul %111, %112, %cst_118 {dimension_numbers = #tpu.dot_dimension_numbers<[1], [0], [0], [1], [0, 0, 1, 1], [], []>} : vector<8x8xf32>, vector<8x288xf32>, vector<8x288xf32> -> vector<8x288xf32>
    %c0_119 = arith.constant 0 : index
    %c8_120 = arith.constant 8 : index
    %114 = vector.load %arg10[%c0_119, %c8_120] : memref<8x72xf32, #tpu.memory_space<vmem>>, vector<8x8xf32>
    %c0_121 = arith.constant 0 : index
    %c1_122 = arith.constant 1 : index
    %115 = vector.load %arg17[%c0_121, %c1_122] : memref<8x342xf32, #tpu.memory_space<vmem>>, vector<8x288xf32>
    %cst_123 = arith.constant dense<0.000000e+00> : vector<8x288xf32>
    %116 = tpu.matmul %114, %115, %cst_123 {dimension_numbers = #tpu.dot_dimension_numbers<[1], [0], [0], [1], [0, 0, 1, 1], [], []>} : vector<8x8xf32>, vector<8x288xf32>, vector<8x288xf32> -> vector<8x288xf32>
    %117 = arith.addf %113, %116 : vector<8x288xf32>
    %c0_124 = arith.constant 0 : index
    %c16_125 = arith.constant 16 : index
    %118 = vector.load %arg10[%c0_124, %c16_125] : memref<8x72xf32, #tpu.memory_space<vmem>>, vector<8x8xf32>
    %c0_126 = arith.constant 0 : index
    %c2_127 = arith.constant 2 : index
    %119 = vector.load %arg17[%c0_126, %c2_127] : memref<8x342xf32, #tpu.memory_space<vmem>>, vector<8x288xf32>
    %cst_128 = arith.constant dense<0.000000e+00> : vector<8x288xf32>
    %120 = tpu.matmul %118, %119, %cst_128 {dimension_numbers = #tpu.dot_dimension_numbers<[1], [0], [0], [1], [0, 0, 1, 1], [], []>} : vector<8x8xf32>, vector<8x288xf32>, vector<8x288xf32> -> vector<8x288xf32>
    %121 = arith.addf %117, %120 : vector<8x288xf32>
    %c0_129 = arith.constant 0 : index
    %c24_130 = arith.constant 24 : index
    %122 = vector.load %arg10[%c0_129, %c24_130] : memref<8x72xf32, #tpu.memory_space<vmem>>, vector<8x8xf32>
    %c0_131 = arith.constant 0 : index
    %c18_132 = arith.constant 18 : index
    %123 = vector.load %arg17[%c0_131, %c18_132] : memref<8x342xf32, #tpu.memory_space<vmem>>, vector<8x288xf32>
    %cst_133 = arith.constant dense<0.000000e+00> : vector<8x288xf32>
    %124 = tpu.matmul %122, %123, %cst_133 {dimension_numbers = #tpu.dot_dimension_numbers<[1], [0], [0], [1], [0, 0, 1, 1], [], []>} : vector<8x8xf32>, vector<8x288xf32>, vector<8x288xf32> -> vector<8x288xf32>
    %125 = arith.addf %121, %124 : vector<8x288xf32>
    %c0_134 = arith.constant 0 : index
    %c32_135 = arith.constant 32 : index
    %126 = vector.load %arg10[%c0_134, %c32_135] : memref<8x72xf32, #tpu.memory_space<vmem>>, vector<8x8xf32>
    %c0_136 = arith.constant 0 : index
    %c19_137 = arith.constant 19 : index
    %127 = vector.load %arg17[%c0_136, %c19_137] : memref<8x342xf32, #tpu.memory_space<vmem>>, vector<8x288xf32>
    %cst_138 = arith.constant dense<0.000000e+00> : vector<8x288xf32>
    %128 = tpu.matmul %126, %127, %cst_138 {dimension_numbers = #tpu.dot_dimension_numbers<[1], [0], [0], [1], [0, 0, 1, 1], [], []>} : vector<8x8xf32>, vector<8x288xf32>, vector<8x288xf32> -> vector<8x288xf32>
    %129 = arith.addf %125, %128 : vector<8x288xf32>
    %c0_139 = arith.constant 0 : index
    %c40_140 = arith.constant 40 : index
    %130 = vector.load %arg10[%c0_139, %c40_140] : memref<8x72xf32, #tpu.memory_space<vmem>>, vector<8x8xf32>
    %c0_141 = arith.constant 0 : index
    %c20_142 = arith.constant 20 : index
    %131 = vector.load %arg17[%c0_141, %c20_142] : memref<8x342xf32, #tpu.memory_space<vmem>>, vector<8x288xf32>
    %cst_143 = arith.constant dense<0.000000e+00> : vector<8x288xf32>
    %132 = tpu.matmul %130, %131, %cst_143 {dimension_numbers = #tpu.dot_dimension_numbers<[1], [0], [0], [1], [0, 0, 1, 1], [], []>} : vector<8x8xf32>, vector<8x288xf32>, vector<8x288xf32> -> vector<8x288xf32>
    %133 = arith.addf %129, %132 : vector<8x288xf32>
    %c0_144 = arith.constant 0 : index
    %c48_145 = arith.constant 48 : index
    %134 = vector.load %arg10[%c0_144, %c48_145] : memref<8x72xf32, #tpu.memory_space<vmem>>, vector<8x8xf32>
    %c0_146 = arith.constant 0 : index
    %c36_147 = arith.constant 36 : index
    %135 = vector.load %arg17[%c0_146, %c36_147] : memref<8x342xf32, #tpu.memory_space<vmem>>, vector<8x288xf32>
    %cst_148 = arith.constant dense<0.000000e+00> : vector<8x288xf32>
    %136 = tpu.matmul %134, %135, %cst_148 {dimension_numbers = #tpu.dot_dimension_numbers<[1], [0], [0], [1], [0, 0, 1, 1], [], []>} : vector<8x8xf32>, vector<8x288xf32>, vector<8x288xf32> -> vector<8x288xf32>
    %137 = arith.addf %133, %136 : vector<8x288xf32>
    %c0_149 = arith.constant 0 : index
    %c56_150 = arith.constant 56 : index
    %138 = vector.load %arg10[%c0_149, %c56_150] : memref<8x72xf32, #tpu.memory_space<vmem>>, vector<8x8xf32>
    %c0_151 = arith.constant 0 : index
    %c37_152 = arith.constant 37 : index
    %139 = vector.load %arg17[%c0_151, %c37_152] : memref<8x342xf32, #tpu.memory_space<vmem>>, vector<8x288xf32>
    %cst_153 = arith.constant dense<0.000000e+00> : vector<8x288xf32>
    %140 = tpu.matmul %138, %139, %cst_153 {dimension_numbers = #tpu.dot_dimension_numbers<[1], [0], [0], [1], [0, 0, 1, 1], [], []>} : vector<8x8xf32>, vector<8x288xf32>, vector<8x288xf32> -> vector<8x288xf32>
    %141 = arith.addf %137, %140 : vector<8x288xf32>
    %c0_154 = arith.constant 0 : index
    %c64_155 = arith.constant 64 : index
    %142 = vector.load %arg10[%c0_154, %c64_155] : memref<8x72xf32, #tpu.memory_space<vmem>>, vector<8x8xf32>
    %c0_156 = arith.constant 0 : index
    %c38_157 = arith.constant 38 : index
    %143 = vector.load %arg17[%c0_156, %c38_157] : memref<8x342xf32, #tpu.memory_space<vmem>>, vector<8x288xf32>
    %cst_158 = arith.constant dense<0.000000e+00> : vector<8x288xf32>
    %144 = tpu.matmul %142, %143, %cst_158 {dimension_numbers = #tpu.dot_dimension_numbers<[1], [0], [0], [1], [0, 0, 1, 1], [], []>} : vector<8x8xf32>, vector<8x288xf32>, vector<8x288xf32> -> vector<8x288xf32>
    %145 = arith.addf %141, %144 : vector<8x288xf32>
    %c0_159 = arith.constant 0 : index
    %c0_160 = arith.constant 0 : index
    %146 = vector.load %arg11[%c0_159, %c0_160] : memref<8x1xf32, #tpu.memory_space<vmem>>, vector<8x1xf32>
    %147 = vector.broadcast %146 : vector<8x1xf32> to vector<8x288xf32>
    %148 = arith.mulf %145, %147 : vector<8x288xf32>
    %c0_161 = arith.constant 0 : index
    %c0_162 = arith.constant 0 : index
    %149 = vector.load %arg12[%c0_161, %c0_162] : memref<8x1xf32, #tpu.memory_space<vmem>>, vector<8x1xf32>
    %150 = vector.broadcast %149 : vector<8x1xf32> to vector<8x288xf32>
    %151 = arith.addf %148, %150 : vector<8x288xf32>
    %cst_163 = arith.constant 0.000000e+00 : f32
    %152 = vector.broadcast %cst_163 : f32 to vector<8x288xf32>
    %153 = arith.maximumf %151, %152 : vector<8x288xf32>
    %154 = vector.broadcast %0 : vector<1x288xf32> to vector<8x288xf32>
    %155 = arith.mulf %153, %154 : vector<8x288xf32>
    %156 = vector.extract_strided_slice %155 {offsets = [0, 0], sizes = [4, 288], strides = [1, 1]} : vector<8x288xf32> to vector<4x288xf32>
    %c0_164 = arith.constant 0 : index
    %c0_165 = arith.constant 0 : index
    %c0_166 = arith.constant 0 : index
    %157 = vector.load %arg3[%c0_164, %c0_165, %c0_166] : memref<1x4x288xf32, #tpu.memory_space<vmem>>, vector<1x4x288xf32>
    %158 = vector.shape_cast %157 : vector<1x4x288xf32> to vector<4x288xf32>
    %159 = arith.addf %156, %158 : vector<4x288xf32>
    %c0_167 = arith.constant 0 : index
    %c0_168 = arith.constant 0 : index
    %c0_169 = arith.constant 0 : index
    %160 = vector.load %arg2[%c0_167, %c0_168, %c0_169] : memref<1x4x288xf32, #tpu.memory_space<vmem>>, vector<1x4x288xf32>
    %161 = vector.shape_cast %160 : vector<1x4x288xf32> to vector<4x288xf32>
    %162 = arith.addf %159, %161 : vector<4x288xf32>
    %c0_170 = arith.constant 0 : index
    %c0_171 = arith.constant 0 : index
    %c0_172 = arith.constant 0 : index
    %163 = vector.load %arg14[%c0_170, %c0_171, %c0_172] : memref<1x4x288xf32, #tpu.memory_space<vmem>>, vector<1x4x288xf32>
    %164 = vector.shape_cast %163 : vector<1x4x288xf32> to vector<4x288xf32>
    %165 = vector.shape_cast %162 : vector<4x288xf32> to vector<1x4x288xf32>
    tpu.vector_store %arg14[%c0_170, %c0_171, %c0_172], %165 {strides = array<i32>} : memref<1x4x288xf32, #tpu.memory_space<vmem>>, vector<1x4x288xf32>,
    return
  }
  func.func @transform_0(%arg0: i32) -> (i32, i32, i32) {
    %c0_i32 = arith.constant 0 : i32
    %c0_i32_0 = arith.constant 0 : i32
    %c0_i32_1 = arith.constant 0 : i32
    return %arg0, %c0_i32, %c0_i32_0 : i32, i32, i32
  }
  func.func @transform_1(%arg0: i32) -> (i32, i32, i32) {
    %c0_i32 = arith.constant 0 : i32
    %c0_i32_0 = arith.constant 0 : i32
    %c0_i32_1 = arith.constant 0 : i32
    return %arg0, %c0_i32, %c0_i32_0 : i32, i32, i32
  }
  func.func @transform_2(%arg0: i32) -> (i32, i32, i32) {
    %c0_i32 = arith.constant 0 : i32
    %c0_i32_0 = arith.constant 0 : i32
    %c0_i32_1 = arith.constant 0 : i32
    return %arg0, %c0_i32, %c0_i32_0 : i32, i32, i32
  }
  func.func @transform_3(%arg0: i32) -> (i32, i32) {
    %c0_i32 = arith.constant 0 : i32
    %c0_i32_0 = arith.constant 0 : i32
    %c0_i32_1 = arith.constant 0 : i32
    return %c0_i32, %c0_i32_0 : i32, i32
  }
  func.func @transform_4(%arg0: i32) -> (i32, i32) {
    %c0_i32 = arith.constant 0 : i32
    %c0_i32_0 = arith.constant 0 : i32
    %c0_i32_1 = arith.constant 0 : i32
    return %c0_i32, %c0_i32_0 : i32, i32
  }
  func.func @transform_5(%arg0: i32) -> (i32, i32) {
    %c0_i32 = arith.constant 0 : i32
    %c0_i32_0 = arith.constant 0 : i32
    %c0_i32_1 = arith.constant 0 : i32
    return %c0_i32, %c0_i32_0 : i32, i32
  }
  func.func @transform_6(%arg0: i32) -> (i32, i32) {
    %c0_i32 = arith.constant 0 : i32
    %c0_i32_0 = arith.constant 0 : i32
    %c0_i32_1 = arith.constant 0 : i32
    return %c0_i32, %c0_i32_0 : i32, i32
  }
  func.func @transform_7(%arg0: i32) -> (i32, i32) {
    %c0_i32 = arith.constant 0 : i32
    %c0_i32_0 = arith.constant 0 : i32
    %c0_i32_1 = arith.constant 0 : i32
    return %c0_i32, %c0_i32_0 : i32, i32
  }
  func.func @transform_8(%arg0: i32) -> (i32, i32) {
    %c0_i32 = arith.constant 0 : i32
    %c0_i32_0 = arith.constant 0 : i32
    %c0_i32_1 = arith.constant 0 : i32
    return %c0_i32, %c0_i32_0 : i32, i32
  }
  func.func @transform_9(%arg0: i32) -> (i32, i32) {
    %c0_i32 = arith.constant 0 : i32
    %c0_i32_0 = arith.constant 0 : i32
    %c0_i32_1 = arith.constant 0 : i32
    return %c0_i32, %c0_i32_0 : i32, i32
  }
  func.func @transform_10(%arg0: i32) -> (i32, i32) {
    %c0_i32 = arith.constant 0 : i32
    %c0_i32_0 = arith.constant 0 : i32
    %c0_i32_1 = arith.constant 0 : i32
    return %c0_i32, %c0_i32_0 : i32, i32
  }
  func.func @transform_11(%arg0: i32) -> (i32, i32) {
    %c0_i32 = arith.constant 0 : i32
    %c0_i32_0 = arith.constant 0 : i32
    %c0_i32_1 = arith.constant 0 : i32
    return %c0_i32, %c0_i32_0 : i32, i32
  }
  func.func @transform_12(%arg0: i32) -> (i32, i32) {
    %c0_i32 = arith.constant 0 : i32
    %c0_i32_0 = arith.constant 0 : i32
    %c0_i32_1 = arith.constant 0 : i32
    return %c0_i32, %c0_i32_0 : i32, i32
  }
  func.func @transform_13(%arg0: i32) -> (i32, i32, i32) {
    %c0_i32 = arith.constant 0 : i32
    %c0_i32_0 = arith.constant 0 : i32
    %c0_i32_1 = arith.constant 0 : i32
    return %arg0, %c0_i32, %c0_i32_0 : i32, i32, i32
  }
}

</mosaic_0001>

<llo_original>
// kernel: tile.8
$region0: #{tile.8}
  #allocation0 [shape = 's32[1]{0}', space=sflag, size = 0x4, scoped, tag = 'scoped memory for tile.8']
  %s0 = inlined_call_operand.vmem [shape: f32[4], index: 0, kind: input, shape index: {}]
  %s1 = inlined_call_operand.vmem [shape: f32[4,4], index: 1, kind: output, shape index: {}]
  // Predicated region
  $region2: #{tile.8} parent=0 // pred_check
    _
  $region3: #{tile.8} parent=0 // pred_check_branch
    %3 = sbr.rel (0) target = $region5
  $region4: #{tile.8} parent=0 // pred_region
    _
  $region5: #{tile.8} parent=0 // pred_fallthru
    _
  %v4 = vld [vmem:[%s0] ss:$0 sm:$0xff]
  %5 = vst [vmem:[%s1] sm:$0xf] %v4

// kernel: tile.0
$region0: #{tile.0}
  %s0 = inlined_call_operand.vmem [shape: f32[4,4], index: 0, kind: input, shape index: {}]
  %s1 = inlined_call_operand.vmem [shape: f32[16,1], index: 1, kind: output, shape index: {}]
  $region1: #{tile.0} parent=0
    #allocation0 [shape = 'u8[4096]{0}', space=vmem, size = 0x1000, scoped, tag = 'scoped mem for input reshape']
    %s3 = sshll.u32 1, 4
    %s4 = ssub.s32 %s3, 1
    %v5 = vld [vmem:[%s0] sm:%s4]
    %6 = vst [vmem:[#allocation0] sm:%s4] %v5
    %v7 = vld [vmem:[#allocation0] sm:$0xf]
    %vm8 = vcmask 7168
    %9 = vst.msk [vmem:[%s1] ss:$4 sm:$0xf] %vm8, %v7
    %v10 = vld [vmem:[#allocation0] sm:$0xf]
    %11 = vrot.lane.b32.xlu0 %v10, 127
    %v12 = vpop.permute.xlu0 %11
    %vm13 = vcmask 7168
    %s14 = scalar_lea.vmem %s1, 1
    %15 = vst.msk [vmem:[%s14] ss:$4 sm:$0xf] %vm13, %v12
    %v16 = vld [vmem:[#allocation0] sm:$0xf]
    %17 = vrot.lane.b32.xlu0 %v16, 126
    %v18 = vpop.permute.xlu0 %17
    %vm19 = vcmask 7168
    %s20 = scalar_lea.vmem %s1, 2
    %21 = vst.msk [vmem:[%s20] ss:$4 sm:$0xf] %vm19, %v18
    %v22 = vld [vmem:[#allocation0] sm:$0xf]
    %23 = vrot.lane.b32.xlu0 %v22, 125
    %v24 = vpop.permute.xlu0 %23
    %vm25 = vcmask 7168
    %s26 = scalar_lea.vmem %s1, 3
    %27 = vst.msk [vmem:[%s26] ss:$4 sm:$0xf] %vm25, %v24

// kernel: expansion_block_forward.2
$region0: #{expansion_block_forward.2}
  #allocation0 [shape = 'u32[]', space=smem, size = 0x4, offset = 0x4, fixed_abs, tag = 'smem constant byte address 0x4 - core index']
  #allocation1 [shape = 'u32[144,128]{1,0:T(1,128)}', space=vmem, size = 0x12000, scoped, tag = 'internal scratch']
  %s0 = inlined_call_operand.vmem [shape: f32[2,8,64], index: 0, kind: input, shape index: {}]
  %s1 = inlined_call_operand.vmem [shape: f32[16,8], index: 1, kind: input, shape index: {}]
  %s2 = inlined_call_operand.vmem [shape: f32[16,1], index: 2, kind: input, shape index: {}]
  %s3 = inlined_call_operand.vmem [shape: f32[2,16,64], index: 3, kind: output, shape index: {}]
  %s4 = sld [smem:[#allocation0]]
  $region45: #{expansion_block_forward.2} parent=0
    _
  %s6 = ssub.s32 1, %s4
  %s7 = scalar_select 0, %s6, %s4
  loop: start=0, step=1, limit=4
  $region2: #{expansion_block_forward.2} parent=0 // loop_pre_header
    _
  $region3: #{expansion_block_forward.2} parent=0 // loop_header
    %s9 = sphi 0, %s13
    %p10 = scmp.ge.s32.totalorder %s9, 4
    %s19 = sphi 0, %s21
    %s22 = sphi 0, %s19
    %s23 = sphi 0, %s22
    %s39 = sphi 0, %s23
    %s43 = sphi 0, %s43
    %s45 = sphi 0, %s43
    %s46 = sphi 0, %s45
    %s60 = sphi 0, %s46
    %s64 = sphi 0, %s64
    %s66 = sphi 0, %s64
    %s67 = sphi 0, %s66
    %s81 = sphi 0, %s67
    %s87 = sphi 0, %s89
    %s90 = sphi 0, %s87
    %s91 = sphi 0, %s90
    %s107 = sphi 0, %s91
  $region4: #{expansion_block_forward.2} parent=0 // loop_header_branch
    %12 = sbr.rel (%p10) target = $region8
  $region5: #{expansion_block_forward.2} parent=0 // loop_body
    %s14 = ssub.s32 %s9, 1
    %s15 = ssub.s32 %s9, 2
    %s16 = sadd.s32 %s9, 1
    %s17 = ssub.s32 %s9, %s16
    %p18 = scmp.eq.s32.totalorder %s17, 0
    %s20 = sadd.s32 %s19, 1
    %s21 = scalar_select %p18, %s19, %s20
    %p24 = pneg %p18
    %p25 = scmp.eq.s32.totalorder %s9, 1
    %p26 = por %p24, %p25
    %p27 = scmp.ne.s32.totalorder %s19, %s22
    %p28 = scmp.eq.s32.totalorder %s9, 0
    %p29 = por %p27, %p28
    %p30 = scmp.ne.s32.totalorder %s19, %s22
    %p31 = scmp.eq.s32.totalorder %s14, 1
    %p32 = por %p30, %p31
    %p33 = scmp.ne.s32.totalorder %s22, %s23
    %p34 = scmp.eq.s32.totalorder %s14, 0
    %p35 = por %p33, %p34
    %p36 = scmp.ne.s32.totalorder %s22, %s23
    %p37 = scmp.eq.s32.totalorder %s15, 1
    %p38 = por %p36, %p37
    %p40 = scmp.ne.s32.totalorder %s23, %s39
    %p41 = scmp.eq.s32.totalorder %s15, 0
    %p42 = por %p40, %p41
    %s44 = sadd.s32 %s43, 1
    %p47 = scmp.eq.s32.totalorder %s9, 1
    %p48 = scmp.ne.s32.totalorder %s43, %s45
    %p49 = scmp.eq.s32.totalorder %s9, 0
    %p50 = por %p48, %p49
    %p51 = scmp.ne.s32.totalorder %s43, %s45
    %p52 = scmp.eq.s32.totalorder %s14, 1
    %p53 = por %p51, %p52
    %p54 = scmp.ne.s32.totalorder %s45, %s46
    %p55 = scmp.eq.s32.totalorder %s14, 0
    %p56 = por %p54, %p55
    %p57 = scmp.ne.s32.totalorder %s45, %s46
    %p58 = scmp.eq.s32.totalorder %s15, 1
    %p59 = por %p57, %p58
    %p61 = scmp.ne.s32.totalorder %s46, %s60
    %p62 = scmp.eq.s32.totalorder %s15, 0
    %p63 = por %p61, %p62
    %s65 = sadd.s32 %s64, 1
    %p68 = scmp.eq.s32.totalorder %s9, 1
    %p69 = scmp.ne.s32.totalorder %s64, %s66
    %p70 = scmp.eq.s32.totalorder %s9, 0
    %p71 = por %p69, %p70
    %p72 = scmp.ne.s32.totalorder %s64, %s66
    %p73 = scmp.eq.s32.totalorder %s14, 1
    %p74 = por %p72, %p73
    %p75 = scmp.ne.s32.totalorder %s66, %s67
    %p76 = scmp.eq.s32.totalorder %s14, 0
    %p77 = por %p75, %p76
    %p78 = scmp.ne.s32.totalorder %s66, %s67
    %p79 = scmp.eq.s32.totalorder %s15, 1
    %p80 = por %p78, %p79
    %p82 = scmp.ne.s32.totalorder %s67, %s81
    %p83 = scmp.eq.s32.totalorder %s15, 0
    %p84 = por %p82, %p83
    %s85 = ssub.s32 %s9, %s16
    %p86 = scmp.eq.s32.totalorder %s85, 0
    %s88 = sadd.s32 %s87, 1
    %s89 = scalar_select %p86, %s87, %s88
    %p92 = pneg %p86
    %p93 = scmp.eq.s32.totalorder %s9, 1
    %p94 = por %p92, %p93
    %p95 = scmp.ne.s32.totalorder %s87, %s90
    %p96 = scmp.eq.s32.totalorder %s9, 0
    %p97 = por %p95, %p96
    %p98 = scmp.ne.s32.totalorder %s87, %s90
    %p99 = scmp.eq.s32.totalorder %s14, 1
    %p100 = por %p98, %p99
    %p101 = scmp.ne.s32.totalorder %s90, %s91
    %p102 = scmp.eq.s32.totalorder %s14, 0
    %p103 = por %p101, %p102
    %p104 = scmp.ne.s32.totalorder %s90, %s91
    %p105 = scmp.eq.s32.totalorder %s15, 1
    %p106 = por %p104, %p105
    %p108 = scmp.ne.s32.totalorder %s91, %s107
    %p109 = scmp.eq.s32.totalorder %s15, 0
    %p110 = por %p108, %p109
    %p111 = scmp.le.s32.totalorder 1, %s9
    %p112 = scmp.lt.s32.totalorder %s9, 3
    %p113 = pnand %p111, %p112
    %p114 = pneg %p113
    // Predicated region
    $region9: #{expansion_block_forward.2} parent=5 // pred_check
      _
    $region10: #{expansion_block_forward.2} parent=5 // pred_check_branch
      %116 = sbr.rel (%p113) target = $region12
    $region11: #{expansion_block_forward.2} parent=5 // pred_region
      %s117 = ssub.s32 %s9, 1
      // Predicated region
      $region13: #{expansion_block_forward.2} parent=11 // pred_check
        %p118 = pneg %p56
      $region14: #{expansion_block_forward.2} parent=11 // pred_check_branch
        %120 = sbr.rel (%p118) target = $region16
      $region15: #{expansion_block_forward.2} parent=11 // pred_region
        _
      $region16: #{expansion_block_forward.2} parent=11 // pred_fallthru
        _
      // Predicated region
      $region17: #{expansion_block_forward.2} parent=11 // pred_check
        %p121 = pneg %p77
      $region18: #{expansion_block_forward.2} parent=11 // pred_check_branch
        %123 = sbr.rel (%p121) target = $region20
      $region19: #{expansion_block_forward.2} parent=11 // pred_region
        _
      $region20: #{expansion_block_forward.2} parent=11 // pred_fallthru
        _
    $region12: #{expansion_block_forward.2} parent=5 // pred_fallthru
      _
    %p124 = scmp.lt.s32.totalorder %s9, 2
    // Predicated region
    $region21: #{expansion_block_forward.2} parent=5 // pred_check
      %p125 = pneg %p124
    $region22: #{expansion_block_forward.2} parent=5 // pred_check_branch
      %127 = sbr.rel (%p125) target = $region24
    $region23: #{expansion_block_forward.2} parent=5 // pred_region
      // Predicated region
      $region25: #{expansion_block_forward.2} parent=23 // pred_check
        %p128 = pneg %p29
      $region26: #{expansion_block_forward.2} parent=23 // pred_check_branch
        %130 = sbr.rel (%p128) target = $region28
      $region27: #{expansion_block_forward.2} parent=23 // pred_region
        %p131 = scmp.lt.s32.totalorder %s9, 1
        %s132 = scalar_select %p131, %s9, 1
        %s133 = smul.addr %s132, 8
        %s134 = scalar_lea.vmem %s0, %s133
      $region28: #{expansion_block_forward.2} parent=23 // pred_fallthru
        _
    $region24: #{expansion_block_forward.2} parent=5 // pred_fallthru
      _
    %p135 = scmp.le.s32.totalorder 1, %s9
    %p136 = scmp.lt.s32.totalorder %s9, 3
    %p137 = pnand %p135, %p136
    %p138 = pneg %p137
    // Predicated region
    $region29: #{expansion_block_forward.2} parent=5 // pred_check
      _
    $region30: #{expansion_block_forward.2} parent=5 // pred_check_branch
      %140 = sbr.rel (%p137) target = $region32
    $region31: #{expansion_block_forward.2} parent=5 // pred_region
      %s141 = ssub.s32 %s9, 1
      %p142 = scmp.lt.s32.totalorder %s14, 1
      %s143 = scalar_select %p142, %s14, 1
      %s144 = smul.addr %s143, 8
      %s145 = scalar_lea.vmem %s0, %s144
      %p146 = pneg %p35
      %p147 = pneg %p32
      %p148 = pneg %p56
      %p149 = pneg %p53
      %p150 = pneg %p77
      %p151 = pneg %p74
      %p152 = pneg %p103
      %p153 = pneg %p100
      %p154 = scmp.lt.s32.totalorder %s14, 1
      %s155 = scalar_select %p154, %s14, 1
      %s156 = smul.addr %s155, 2
      %s157 = smul.addr %s156, 8
      %s158 = scalar_lea.vmem %s3, %s157
      %p159 = scmp.lt.s32.totalorder %s14, 1
      %s160 = scalar_select %p159, %s14, 1
      %s161 = smul.addr %s160, 8
      %s162 = scalar_lea.vmem %s0, %s161
      %p163 = scmp.lt.s32.totalorder %s14, 1
      %s164 = scalar_select %p163, %s14, 1
      %s165 = smul.addr %s164, 2
      %s166 = smul.addr %s165, 8
      %s167 = scalar_lea.vmem %s3, %s166
      %v168 = vld [vmem:[%s1] sm:$0xff]
      %v169 = vld [vmem:[%s1 + $0x8] sm:$0xff]
      %v170 = vld [vmem:[%s162] sm:$0xff]
      %v171 = vld [vmem:[%s2] sm:$0xff]
      %v172 = vld [vmem:[%s2 + $0x8] sm:$0xff]
      %174 = vset.pattern.permute.xlu0 0
      %175 = vperm.xlu0 %174, %v171
      %v176 = vpop.permute.xlu0 %175
      %179 = vset.pattern.permute.xlu0 0
      %180 = vperm.xlu0 %179, %v172
      %v181 = vpop.permute.xlu0 %180
      %vm183 = vcmask 64512
      %v185 = vsel %vm183, %v168, 0
      %v188 = vsel %vm183, %v169, 0
      %190 = vmatprep.subr.mxu0 0.0
      %191 = vmatpush1.msra.mxu0 0.0
      %192 = vmatprep.subr.mxu0 0.0
      %193 = vmatpush1.msra.mxu0 0.0
      %194 = vmatprep.subr.mxu0 0.0
      %195 = vmatpush1.msra.mxu0 0.0
      %196 = vmatprep.subr.mxu0 0.0
      %197 = vmatpush1.msra.mxu0 0.0
      %198 = vmatprep.subr.mxu0 0.0
      %199 = vmatpush1.msra.mxu0 0.0
      %200 = vmatprep.subr.mxu0 0.0
      %201 = vmatpush1.msra.mxu0 0.0
      %202 = vmatprep.subr.mxu0 0.0
      %203 = vmatpush1.msra.mxu0 0.0
      %204 = vmatprep.subr.mxu0 0.0
      %205 = vmatpush1.msra.mxu0 0.0
      %206 = vmatprep.subr.mxu0 0.0
      %207 = vmatpush1.msra.mxu0 0.0
      %208 = vmatprep.subr.mxu0 0.0
      %209 = vmatpush1.msra.mxu0 0.0
      %210 = vmatprep.subr.mxu0 0.0
      %211 = vmatpush1.msra.mxu0 0.0
      %212 = vmatprep.subr.mxu0 0.0
      %213 = vmatpush1.msra.mxu0 0.0
      %214 = vmatprep.subr.mxu0 0.0
      %215 = vmatpush1.msra.mxu0 0.0
      %216 = vmatprep.subr.mxu0 0.0
      %217 = vmatpush1.msra.mxu0 0.0
      %218 = vmatprep.subr.mxu0 0.0
      %219 = vmatpush1.msra.mxu0 0.0
      %220 = vmatprep.subr.mxu0 0.0
      %221 = vmatpush1.msra.mxu0 %v170
      %222 = vmatprep.subr.mxu0 0.0
      %223 = vmatpush2.msra.mxu0 0.0
      %224 = vmatprep.subr.mxu0 0.0
      %225 = vmatpush2.msra.mxu0 0.0
      %226 = vmatprep.subr.mxu0 0.0
      %227 = vmatpush2.msra.mxu0 0.0
      %228 = vmatprep.subr.mxu0 0.0
      %229 = vmatpush2.msra.mxu0 0.0
      %230 = vmatprep.subr.mxu0 0.0
      %231 = vmatpush2.msra.mxu0 0.0
      %232 = vmatprep.subr.mxu0 0.0
      %233 = vmatpush2.msra.mxu0 0.0
      %234 = vmatprep.subr.mxu0 0.0
      %235 = vmatpush2.msra.mxu0 0.0
      %236 = vmatprep.subr.mxu0 0.0
      %237 = vmatpush2.msra.mxu0 0.0
      %238 = vmatprep.subr.mxu0 0.0
      %239 = vmatpush2.msra.mxu0 0.0
      %240 = vmatprep.subr.mxu0 0.0
      %241 = vmatpush2.msra.mxu0 0.0
      %242 = vmatprep.subr.mxu0 0.0
      %243 = vmatpush2.msra.mxu0 0.0
      %244 = vmatprep.subr.mxu0 0.0
      %245 = vmatpush2.msra.mxu0 0.0
      %246 = vmatprep.subr.mxu0 0.0
      %247 = vmatpush2.msra.mxu0 0.0
      %248 = vmatprep.subr.mxu0 0.0
      %249 = vmatpush2.msra.mxu0 0.0
      %250 = vmatprep.subr.mxu0 0.0
      %251 = vmatpush2.msra.mxu0 0.0
      %252 = vmatprep.subr.mxu0 0.0
      %253 = vmatpush2.msra.mxu0 0.0
      %254 = vmatprep.mubr.f32.mxu0 0.0
      %255 = vmatmul.mubr.f32.gmra.mxu0 %v185
      %v256 = vpop.f32.mrf.mxu0
      %v257 = vadd.f32 %v176, %v256
      %v258 = vpop.f32.mrf.mxu0
      %259 = vmatprep.mubr.f32.mxu0 0.0
      %260 = vmatmul.mubr.f32.gmra.mxu0 %v188
      %v261 = vpop.f32.mrf.mxu0
      %v262 = vadd.f32 %v181, %v261
      %v263 = vpop.f32.mrf.mxu0
      %264 = vdwg.mxu0
      %vm265 = vcmask 523264
      %266 = vst.msk [vmem:[%s167] sm:$0xff] %vm265, %v257
      %267 = vst.msk [vmem:[%s167 + $0x8] sm:$0xff] %vm265, %v262
      %p268 = scmp.lt.s32.totalorder %s14, 1
      %s269 = scalar_select %p268, %s14, 1
      %s270 = smul.addr %s269, 2
      %s271 = smul.addr %s270, 8
      %s272 = scalar_lea.vmem %s3, %s271
      // Predicated region
      $region33: #{expansion_block_forward.2} parent=31 // pred_check
        %p273 = pneg %p100
      $region34: #{expansion_block_forward.2} parent=31 // pred_check_branch
        %275 = sbr.rel (%p273) target = $region36
      $region35: #{expansion_block_forward.2} parent=31 // pred_region
        _
      $region36: #{expansion_block_forward.2} parent=31 // pred_fallthru
        _
    $region32: #{expansion_block_forward.2} parent=5 // pred_fallthru
      _
    %p276 = scmp.le.s32.totalorder 2, %s9
    // Predicated region
    $region37: #{expansion_block_forward.2} parent=5 // pred_check
      %p277 = pneg %p276
    $region38: #{expansion_block_forward.2} parent=5 // pred_check_branch
      %279 = sbr.rel (%p277) target = $region40
    $region39: #{expansion_block_forward.2} parent=5 // pred_region
      %s280 = ssub.s32 %s9, 2
      // Predicated region
      $region41: #{expansion_block_forward.2} parent=39 // pred_check
        %p281 = pneg %p106
      $region42: #{expansion_block_forward.2} parent=39 // pred_check_branch
        %283 = sbr.rel (%p281) target = $region44
      $region43: #{expansion_block_forward.2} parent=39 // pred_region
        %p284 = scmp.lt.s32.totalorder %s15, 1
        %s285 = scalar_select %p284, %s15, 1
        %s286 = smul.addr %s285, 2
        %s287 = smul.addr %s286, 8
        %s288 = scalar_lea.vmem %s3, %s287
      $region44: #{expansion_block_forward.2} parent=39 // pred_fallthru
        _
    $region40: #{expansion_block_forward.2} parent=5 // pred_fallthru
      _
  $region6: #{expansion_block_forward.2} parent=0 // loop_footer
    %s13 = sadd.s32 1, %s9
  $region7: #{expansion_block_forward.2} parent=0 // loop_footer_branch
    %8 = sbr.rel target = $region3
  $region8: #{expansion_block_forward.2} parent=0 // loop_exit
    _

// kernel: expansion_block_forward.3
$region0: #{expansion_block_forward.3}
  #allocation0 [shape = 'u32[]', space=smem, size = 0x4, offset = 0x4, fixed_abs, tag = 'smem constant byte address 0x4 - core index']
  #allocation1 [shape = 'u32[144,128]{1,0:T(1,128)}', space=vmem, size = 0x12000, scoped, tag = 'internal scratch']
  #allocation2 [shape = 'f32[8,342]{1,0:T(8,128)}', space=vmem, size = 0x3000, scoped, tag = 'scratch operand']
  #allocation3 [shape = 'f32[8,342]{1,0:T(8,128)}', space=vmem, size = 0x3000, scoped, tag = 'scratch operand']
  #allocation4 [shape = 'f32[8,342]{1,0:T(8,128)}', space=vmem, size = 0x3000, scoped, tag = 'scratch operand']
  %s0 = inlined_call_operand.vmem [shape: f32[2,4,288], index: 0, kind: input, shape index: {}]
  %s1 = inlined_call_operand.vmem [shape: f32[2,4,288], index: 1, kind: input, shape index: {}]
  %s2 = inlined_call_operand.vmem [shape: f32[2,4,288], index: 2, kind: input, shape index: {}]
  %s3 = inlined_call_operand.vmem [shape: f32[8,72], index: 3, kind: input, shape index: {}]
  %s4 = inlined_call_operand.vmem [shape: f32[8,1], index: 4, kind: input, shape index: {}]
  %s5 = inlined_call_operand.vmem [shape: f32[8,1], index: 5, kind: input, shape index: {}]
  %s6 = inlined_call_operand.vmem [shape: f32[8,72], index: 6, kind: input, shape index: {}]
  %s7 = inlined_call_operand.vmem [shape: f32[8,1], index: 7, kind: input, shape index: {}]
  %s8 = inlined_call_operand.vmem [shape: f32[8,1], index: 8, kind: input, shape index: {}]
  %s9 = inlined_call_operand.vmem [shape: f32[8,72], index: 9, kind: input, shape index: {}]
  %s10 = inlined_call_operand.vmem [shape: f32[8,1], index: 10, kind: input, shape index: {}]
  %s11 = inlined_call_operand.vmem [shape: f32[8,1], index: 11, kind: input, shape index: {}]
  %s12 = inlined_call_operand.vmem [shape: f32[1,288], index: 12, kind: input, shape index: {}]
  %s13 = inlined_call_operand.vmem [shape: f32[2,4,288], index: 13, kind: output, shape index: {}]
  %s14 = sld [smem:[#allocation0]]
  $region85: #{expansion_block_forward.3} parent=0
    _
  %s16 = ssub.s32 1, %s14
  %s17 = scalar_select 0, %s16, %s14
  loop: start=0, step=1, limit=4
  $region2: #{expansion_block_forward.3} parent=0 // loop_pre_header
    _
  $region3: #{expansion_block_forward.3} parent=0 // loop_header
    %s19 = sphi 0, %s23
    %p20 = scmp.ge.s32.totalorder %s19, 4
    %s29 = sphi 0, %s31
    %s32 = sphi 0, %s29
    %s33 = sphi 0, %s32
    %s49 = sphi 0, %s33
    %s55 = sphi 0, %s57
    %s58 = sphi 0, %s55
    %s59 = sphi 0, %s58
    %s75 = sphi 0, %s59
    %s81 = sphi 0, %s83
    %s84 = sphi 0, %s81
    %s85 = sphi 0, %s84
    %s101 = sphi 0, %s85
    %s105 = sphi 0, %s105
    %s107 = sphi 0, %s105
    %s108 = sphi 0, %s107
    %s122 = sphi 0, %s108
    %s126 = sphi 0, %s126
    %s128 = sphi 0, %s126
    %s129 = sphi 0, %s128
    %s143 = sphi 0, %s129
    %s147 = sphi 0, %s147
    %s149 = sphi 0, %s147
    %s150 = sphi 0, %s149
    %s164 = sphi 0, %s150
    %s168 = sphi 0, %s168
    %s170 = sphi 0, %s168
    %s171 = sphi 0, %s170
    %s185 = sphi 0, %s171
    %s189 = sphi 0, %s189
    %s191 = sphi 0, %s189
    %s192 = sphi 0, %s191
    %s206 = sphi 0, %s192
    %s210 = sphi 0, %s210
    %s212 = sphi 0, %s210
    %s213 = sphi 0, %s212
    %s227 = sphi 0, %s213
    %s231 = sphi 0, %s231
    %s233 = sphi 0, %s231
    %s234 = sphi 0, %s233
    %s248 = sphi 0, %s234
    %s252 = sphi 0, %s252
    %s254 = sphi 0, %s252
    %s255 = sphi 0, %s254
    %s269 = sphi 0, %s255
    %s273 = sphi 0, %s273
    %s275 = sphi 0, %s273
    %s276 = sphi 0, %s275
    %s290 = sphi 0, %s276
    %s294 = sphi 0, %s294
    %s296 = sphi 0, %s294
    %s297 = sphi 0, %s296
    %s311 = sphi 0, %s297
    %s317 = sphi 0, %s319
    %s320 = sphi 0, %s317
    %s321 = sphi 0, %s320
    %s337 = sphi 0, %s321
  $region4: #{expansion_block_forward.3} parent=0 // loop_header_branch
    %22 = sbr.rel (%p20) target = $region8
  $region5: #{expansion_block_forward.3} parent=0 // loop_body
    %s24 = ssub.s32 %s19, 1
    %s25 = ssub.s32 %s19, 2
    %s26 = sadd.s32 %s19, 1
    %s27 = ssub.s32 %s19, %s26
    %p28 = scmp.eq.s32.totalorder %s27, 0
    %s30 = sadd.s32 %s29, 1
    %s31 = scalar_select %p28, %s29, %s30
    %p34 = pneg %p28
    %p35 = scmp.eq.s32.totalorder %s19, 1
    %p36 = por %p34, %p35
    %p37 = scmp.ne.s32.totalorder %s29, %s32
    %p38 = scmp.eq.s32.totalorder %s19, 0
    %p39 = por %p37, %p38
    %p40 = scmp.ne.s32.totalorder %s29, %s32
    %p41 = scmp.eq.s32.totalorder %s24, 1
    %p42 = por %p40, %p41
    %p43 = scmp.ne.s32.totalorder %s32, %s33
    %p44 = scmp.eq.s32.totalorder %s24, 0
    %p45 = por %p43, %p44
    %p46 = scmp.ne.s32.totalorder %s32, %s33
    %p47 = scmp.eq.s32.totalorder %s25, 1
    %p48 = por %p46, %p47
    %p50 = scmp.ne.s32.totalorder %s33, %s49
    %p51 = scmp.eq.s32.totalorder %s25, 0
    %p52 = por %p50, %p51
    %s53 = ssub.s32 %s19, %s26
    %p54 = scmp.eq.s32.totalorder %s53, 0
    %s56 = sadd.s32 %s55, 1
    %s57 = scalar_select %p54, %s55, %s56
    %p60 = pneg %p54
    %p61 = scmp.eq.s32.totalorder %s19, 1
    %p62 = por %p60, %p61
    %p63 = scmp.ne.s32.totalorder %s55, %s58
    %p64 = scmp.eq.s32.totalorder %s19, 0
    %p65 = por %p63, %p64
    %p66 = scmp.ne.s32.totalorder %s55, %s58
    %p67 = scmp.eq.s32.totalorder %s24, 1
    %p68 = por %p66, %p67
    %p69 = scmp.ne.s32.totalorder %s58, %s59
    %p70 = scmp.eq.s32.totalorder %s24, 0
    %p71 = por %p69, %p70
    %p72 = scmp.ne.s32.totalorder %s58, %s59
    %p73 = scmp.eq.s32.totalorder %s25, 1
    %p74 = por %p72, %p73
    %p76 = scmp.ne.s32.totalorder %s59, %s75
    %p77 = scmp.eq.s32.totalorder %s25, 0
    %p78 = por %p76, %p77
    %s79 = ssub.s32 %s19, %s26
    %p80 = scmp.eq.s32.totalorder %s79, 0
    %s82 = sadd.s32 %s81, 1
    %s83 = scalar_select %p80, %s81, %s82
    %p86 = pneg %p80
    %p87 = scmp.eq.s32.totalorder %s19, 1
    %p88 = por %p86, %p87
    %p89 = scmp.ne.s32.totalorder %s81, %s84
    %p90 = scmp.eq.s32.totalorder %s19, 0
    %p91 = por %p89, %p90
    %p92 = scmp.ne.s32.totalorder %s81, %s84
    %p93 = scmp.eq.s32.totalorder %s24, 1
    %p94 = por %p92, %p93
    %p95 = scmp.ne.s32.totalorder %s84, %s85
    %p96 = scmp.eq.s32.totalorder %s24, 0
    %p97 = por %p95, %p96
    %p98 = scmp.ne.s32.totalorder %s84, %s85
    %p99 = scmp.eq.s32.totalorder %s25, 1
    %p100 = por %p98, %p99
    %p102 = scmp.ne.s32.totalorder %s85, %s101
    %p103 = scmp.eq.s32.totalorder %s25, 0
    %p104 = por %p102, %p103
    %s106 = sadd.s32 %s105, 1
    %p109 = scmp.eq.s32.totalorder %s19, 1
    %p110 = scmp.ne.s32.totalorder %s105, %s107
    %p111 = scmp.eq.s32.totalorder %s19, 0
    %p112 = por %p110, %p111
    %p113 = scmp.ne.s32.totalorder %s105, %s107
    %p114 = scmp.eq.s32.totalorder %s24, 1
    %p115 = por %p113, %p114
    %p116 = scmp.ne.s32.totalorder %s107, %s108
    %p117 = scmp.eq.s32.totalorder %s24, 0
    %p118 = por %p116, %p117
    %p119 = scmp.ne.s32.totalorder %s107, %s108
    %p120 = scmp.eq.s32.totalorder %s25, 1
    %p121 = por %p119, %p120
    %p123 = scmp.ne.s32.totalorder %s108, %s122
    %p124 = scmp.eq.s32.totalorder %s25, 0
    %p125 = por %p123, %p124
    %s127 = sadd.s32 %s126, 1
    %p130 = scmp.eq.s32.totalorder %s19, 1
    %p131 = scmp.ne.s32.totalorder %s126, %s128
    %p132 = scmp.eq.s32.totalorder %s19, 0
    %p133 = por %p131, %p132
    %p134 = scmp.ne.s32.totalorder %s126, %s128
    %p135 = scmp.eq.s32.totalorder %s24, 1
    %p136 = por %p134, %p135
    %p137 = scmp.ne.s32.totalorder %s128, %s129
    %p138 = scmp.eq.s32.totalorder %s24, 0
    %p139 = por %p137, %p138
    %p140 = scmp.ne.s32.totalorder %s128, %s129
    %p141 = scmp.eq.s32.totalorder %s25, 1
    %p142 = por %p140, %p141
    %p144 = scmp.ne.s32.totalorder %s129, %s143
    %p145 = scmp.eq.s32.totalorder %s25, 0
    %p146 = por %p144, %p145
    %s148 = sadd.s32 %s147, 1
    %p151 = scmp.eq.s32.totalorder %s19, 1
    %p152 = scmp.ne.s32.totalorder %s147, %s149
    %p153 = scmp.eq.s32.totalorder %s19, 0
    %p154 = por %p152, %p153
    %p155 = scmp.ne.s32.totalorder %s147, %s149
    %p156 = scmp.eq.s32.totalorder %s24, 1
    %p157 = por %p155, %p156
    %p158 = scmp.ne.s32.totalorder %s149, %s150
    %p159 = scmp.eq.s32.totalorder %s24, 0
    %p160 = por %p158, %p159
    %p161 = scmp.ne.s32.totalorder %s149, %s150
    %p162 = scmp.eq.s32.totalorder %s25, 1
    %p163 = por %p161, %p162
    %p165 = scmp.ne.s32.totalorder %s150, %s164
    %p166 = scmp.eq.s32.totalorder %s25, 0
    %p167 = por %p165, %p166
    %s169 = sadd.s32 %s168, 1
    %p172 = scmp.eq.s32.totalorder %s19, 1
    %p173 = scmp.ne.s32.totalorder %s168, %s170
    %p174 = scmp.eq.s32.totalorder %s19, 0
    %p175 = por %p173, %p174
    %p176 = scmp.ne.s32.totalorder %s168, %s170
    %p177 = scmp.eq.s32.totalorder %s24, 1
    %p178 = por %p176, %p177
    %p179 = scmp.ne.s32.totalorder %s170, %s171
    %p180 = scmp.eq.s32.totalorder %s24, 0
    %p181 = por %p179, %p180
    %p182 = scmp.ne.s32.totalorder %s170, %s171
    %p183 = scmp.eq.s32.totalorder %s25, 1
    %p184 = por %p182, %p183
    %p186 = scmp.ne.s32.totalorder %s171, %s185
    %p187 = scmp.eq.s32.totalorder %s25, 0
    %p188 = por %p186, %p187
    %s190 = sadd.s32 %s189, 1
    %p193 = scmp.eq.s32.totalorder %s19, 1
    %p194 = scmp.ne.s32.totalorder %s189, %s191
    %p195 = scmp.eq.s32.totalorder %s19, 0
    %p196 = por %p194, %p195
    %p197 = scmp.ne.s32.totalorder %s189, %s191
    %p198 = scmp.eq.s32.totalorder %s24, 1
    %p199 = por %p197, %p198
    %p200 = scmp.ne.s32.totalorder %s191, %s192
    %p201 = scmp.eq.s32.totalorder %s24, 0
    %p202 = por %p200, %p201
    %p203 = scmp.ne.s32.totalorder %s191, %s192
    %p204 = scmp.eq.s32.totalorder %s25, 1
    %p205 = por %p203, %p204
    %p207 = scmp.ne.s32.totalorder %s192, %s206
    %p208 = scmp.eq.s32.totalorder %s25, 0
    %p209 = por %p207, %p208
    %s211 = sadd.s32 %s210, 1
    %p214 = scmp.eq.s32.totalorder %s19, 1
    %p215 = scmp.ne.s32.totalorder %s210, %s212
    %p216 = scmp.eq.s32.totalorder %s19, 0
    %p217 = por %p215, %p216
    %p218 = scmp.ne.s32.totalorder %s210, %s212
    %p219 = scmp.eq.s32.totalorder %s24, 1
    %p220 = por %p218, %p219
    %p221 = scmp.ne.s32.totalorder %s212, %s213
    %p222 = scmp.eq.s32.totalorder %s24, 0
    %p223 = por %p221, %p222
    %p224 = scmp.ne.s32.totalorder %s212, %s213
    %p225 = scmp.eq.s32.totalorder %s25, 1
    %p226 = por %p224, %p225
    %p228 = scmp.ne.s32.totalorder %s213, %s227
    %p229 = scmp.eq.s32.totalorder %s25, 0
    %p230 = por %p228, %p229
    %s232 = sadd.s32 %s231, 1
    %p235 = scmp.eq.s32.totalorder %s19, 1
    %p236 = scmp.ne.s32.totalorder %s231, %s233
    %p237 = scmp.eq.s32.totalorder %s19, 0
    %p238 = por %p236, %p237
    %p239 = scmp.ne.s32.totalorder %s231, %s233
    %p240 = scmp.eq.s32.totalorder %s24, 1
    %p241 = por %p239, %p240
    %p242 = scmp.ne.s32.totalorder %s233, %s234
    %p243 = scmp.eq.s32.totalorder %s24, 0
    %p244 = por %p242, %p243
    %p245 = scmp.ne.s32.totalorder %s233, %s234
    %p246 = scmp.eq.s32.totalorder %s25, 1
    %p247 = por %p245, %p246
    %p249 = scmp.ne.s32.totalorder %s234, %s248
    %p250 = scmp.eq.s32.totalorder %s25, 0
    %p251 = por %p249, %p250
    %s253 = sadd.s32 %s252, 1
    %p256 = scmp.eq.s32.totalorder %s19, 1
    %p257 = scmp.ne.s32.totalorder %s252, %s254
    %p258 = scmp.eq.s32.totalorder %s19, 0
    %p259 = por %p257, %p258
    %p260 = scmp.ne.s32.totalorder %s252, %s254
    %p261 = scmp.eq.s32.totalorder %s24, 1
    %p262 = por %p260, %p261
    %p263 = scmp.ne.s32.totalorder %s254, %s255
    %p264 = scmp.eq.s32.totalorder %s24, 0
    %p265 = por %p263, %p264
    %p266 = scmp.ne.s32.totalorder %s254, %s255
    %p267 = scmp.eq.s32.totalorder %s25, 1
    %p268 = por %p266, %p267
    %p270 = scmp.ne.s32.totalorder %s255, %s269
    %p271 = scmp.eq.s32.totalorder %s25, 0
    %p272 = por %p270, %p271
    %s274 = sadd.s32 %s273, 1
    %p277 = scmp.eq.s32.totalorder %s19, 1
    %p278 = scmp.ne.s32.totalorder %s273, %s275
    %p279 = scmp.eq.s32.totalorder %s19, 0
    %p280 = por %p278, %p279
    %p281 = scmp.ne.s32.totalorder %s273, %s275
    %p282 = scmp.eq.s32.totalorder %s24, 1
    %p283 = por %p281, %p282
    %p284 = scmp.ne.s32.totalorder %s275, %s276
    %p285 = scmp.eq.s32.totalorder %s24, 0
    %p286 = por %p284, %p285
    %p287 = scmp.ne.s32.totalorder %s275, %s276
    %p288 = scmp.eq.s32.totalorder %s25, 1
    %p289 = por %p287, %p288
    %p291 = scmp.ne.s32.totalorder %s276, %s290
    %p292 = scmp.eq.s32.totalorder %s25, 0
    %p293 = por %p291, %p292
    %s295 = sadd.s32 %s294, 1
    %p298 = scmp.eq.s32.totalorder %s19, 1
    %p299 = scmp.ne.s32.totalorder %s294, %s296
    %p300 = scmp.eq.s32.totalorder %s19, 0
    %p301 = por %p299, %p300
    %p302 = scmp.ne.s32.totalorder %s294, %s296
    %p303 = scmp.eq.s32.totalorder %s24, 1
    %p304 = por %p302, %p303
    %p305 = scmp.ne.s32.totalorder %s296, %s297
    %p306 = scmp.eq.s32.totalorder %s24, 0
    %p307 = por %p305, %p306
    %p308 = scmp.ne.s32.totalorder %s296, %s297
    %p309 = scmp.eq.s32.totalorder %s25, 1
    %p310 = por %p308, %p309
    %p312 = scmp.ne.s32.totalorder %s297, %s311
    %p313 = scmp.eq.s32.totalorder %s25, 0
    %p314 = por %p312, %p313
    %s315 = ssub.s32 %s19, %s26
    %p316 = scmp.eq.s32.totalorder %s315, 0
    %s318 = sadd.s32 %s317, 1
    %s319 = scalar_select %p316, %s317, %s318
    %p322 = pneg %p316
    %p323 = scmp.eq.s32.totalorder %s19, 1
    %p324 = por %p322, %p323
    %p325 = scmp.ne.s32.totalorder %s317, %s320
    %p326 = scmp.eq.s32.totalorder %s19, 0
    %p327 = por %p325, %p326
    %p328 = scmp.ne.s32.totalorder %s317, %s320
    %p329 = scmp.eq.s32.totalorder %s24, 1
    %p330 = por %p328, %p329
    %p331 = scmp.ne.s32.totalorder %s320, %s321
    %p332 = scmp.eq.s32.totalorder %s24, 0
    %p333 = por %p331, %p332
    %p334 = scmp.ne.s32.totalorder %s320, %s321
    %p335 = scmp.eq.s32.totalorder %s25, 1
    %p336 = por %p334, %p335
    %p338 = scmp.ne.s32.totalorder %s321, %s337
    %p339 = scmp.eq.s32.totalorder %s25, 0
    %p340 = por %p338, %p339
    %p341 = scmp.le.s32.totalorder 1, %s19
    %p342 = scmp.lt.s32.totalorder %s19, 3
    %p343 = pnand %p341, %p342
    %p344 = pneg %p343
    // Predicated region
    $region9: #{expansion_block_forward.3} parent=5 // pred_check
      _
    $region10: #{expansion_block_forward.3} parent=5 // pred_check_branch
      %346 = sbr.rel (%p343) target = $region12
    $region11: #{expansion_block_forward.3} parent=5 // pred_region
      %s347 = ssub.s32 %s19, 1
      // Predicated region
      $region13: #{expansion_block_forward.3} parent=11 // pred_check
        %p348 = pneg %p118
      $region14: #{expansion_block_forward.3} parent=11 // pred_check_branch
        %350 = sbr.rel (%p348) target = $region16
      $region15: #{expansion_block_forward.3} parent=11 // pred_region
        _
      $region16: #{expansion_block_forward.3} parent=11 // pred_fallthru
        _
      // Predicated region
      $region17: #{expansion_block_forward.3} parent=11 // pred_check
        %p351 = pneg %p139
      $region18: #{expansion_block_forward.3} parent=11 // pred_check_branch
        %353 = sbr.rel (%p351) target = $region20
      $region19: #{expansion_block_forward.3} parent=11 // pred_region
        _
      $region20: #{expansion_block_forward.3} parent=11 // pred_fallthru
        _
      // Predicated region
      $region21: #{expansion_block_forward.3} parent=11 // pred_check
        %p354 = pneg %p160
      $region22: #{expansion_block_forward.3} parent=11 // pred_check_branch
        %356 = sbr.rel (%p354) target = $region24
      $region23: #{expansion_block_forward.3} parent=11 // pred_region
        _
      $region24: #{expansion_block_forward.3} parent=11 // pred_fallthru
        _
      // Predicated region
      $region25: #{expansion_block_forward.3} parent=11 // pred_check
        %p357 = pneg %p181
      $region26: #{expansion_block_forward.3} parent=11 // pred_check_branch
        %359 = sbr.rel (%p357) target = $region28
      $region27: #{expansion_block_forward.3} parent=11 // pred_region
        _
      $region28: #{expansion_block_forward.3} parent=11 // pred_fallthru
        _
      // Predicated region
      $region29: #{expansion_block_forward.3} parent=11 // pred_check
        %p360 = pneg %p202
      $region30: #{expansion_block_forward.3} parent=11 // pred_check_branch
        %362 = sbr.rel (%p360) target = $region32
      $region31: #{expansion_block_forward.3} parent=11 // pred_region
        _
      $region32: #{expansion_block_forward.3} parent=11 // pred_fallthru
        _
      // Predicated region
      $region33: #{expansion_block_forward.3} parent=11 // pred_check
        %p363 = pneg %p223
      $region34: #{expansion_block_forward.3} parent=11 // pred_check_branch
        %365 = sbr.rel (%p363) target = $region36
      $region35: #{expansion_block_forward.3} parent=11 // pred_region
        _
      $region36: #{expansion_block_forward.3} parent=11 // pred_fallthru
        _
      // Predicated region
      $region37: #{expansion_block_forward.3} parent=11 // pred_check
        %p366 = pneg %p244
      $region38: #{expansion_block_forward.3} parent=11 // pred_check_branch
        %368 = sbr.rel (%p366) target = $region40
      $region39: #{expansion_block_forward.3} parent=11 // pred_region
        _
      $region40: #{expansion_block_forward.3} parent=11 // pred_fallthru
        _
      // Predicated region
      $region41: #{expansion_block_forward.3} parent=11 // pred_check
        %p369 = pneg %p265
      $region42: #{expansion_block_forward.3} parent=11 // pred_check_branch
        %371 = sbr.rel (%p369) target = $region44
      $region43: #{expansion_block_forward.3} parent=11 // pred_region
        _
      $region44: #{expansion_block_forward.3} parent=11 // pred_fallthru
        _
      // Predicated region
      $region45: #{expansion_block_forward.3} parent=11 // pred_check
        %p372 = pneg %p286
      $region46: #{expansion_block_forward.3} parent=11 // pred_check_branch
        %374 = sbr.rel (%p372) target = $region48
      $region47: #{expansion_block_forward.3} parent=11 // pred_region
        _
      $region48: #{expansion_block_forward.3} parent=11 // pred_fallthru
        _
      // Predicated region
      $region49: #{expansion_block_forward.3} parent=11 // pred_check
        %p375 = pneg %p307
      $region50: #{expansion_block_forward.3} parent=11 // pred_check_branch
        %377 = sbr.rel (%p375) target = $region52
      $region51: #{expansion_block_forward.3} parent=11 // pred_region
        _
      $region52: #{expansion_block_forward.3} parent=11 // pred_fallthru
        _
    $region12: #{expansion_block_forward.3} parent=5 // pred_fallthru
      _
    %p378 = scmp.lt.s32.totalorder %s19, 2
    // Predicated region
    $region53: #{expansion_block_forward.3} parent=5 // pred_check
      %p379 = pneg %p378
    $region54: #{expansion_block_forward.3} parent=5 // pred_check_branch
      %381 = sbr.rel (%p379) target = $region56
    $region55: #{expansion_block_forward.3} parent=5 // pred_region
      // Predicated region
      $region57: #{expansion_block_forward.3} parent=55 // pred_check
        %p382 = pneg %p39
      $region58: #{expansion_block_forward.3} parent=55 // pred_check_branch
        %384 = sbr.rel (%p382) target = $region60
      $region59: #{expansion_block_forward.3} parent=55 // pred_region
        %p385 = scmp.lt.s32.totalorder %s19, 1
        %s386 = scalar_select %p385, %s19, 1
        %s387 = smul.addr %s386, 3
        %s388 = smul.addr %s387, 4
        %s389 = scalar_lea.vmem %s0, %s388
      $region60: #{expansion_block_forward.3} parent=55 // pred_fallthru
        _
      // Predicated region
      $region61: #{expansion_block_forward.3} parent=55 // pred_check
        %p390 = pneg %p65
      $region62: #{expansion_block_forward.3} parent=55 // pred_check_branch
        %392 = sbr.rel (%p390) target = $region64
      $region63: #{expansion_block_forward.3} parent=55 // pred_region
        %p393 = scmp.lt.s32.totalorder %s19, 1
        %s394 = scalar_select %p393, %s19, 1
        %s395 = smul.addr %s394, 3
        %s396 = smul.addr %s395, 4
        %s397 = scalar_lea.vmem %s1, %s396
      $region64: #{expansion_block_forward.3} parent=55 // pred_fallthru
        _
      // Predicated region
      $region65: #{expansion_block_forward.3} parent=55 // pred_check
        %p398 = pneg %p91
      $region66: #{expansion_block_forward.3} parent=55 // pred_check_branch
        %400 = sbr.rel (%p398) target = $region68
      $region67: #{expansion_block_forward.3} parent=55 // pred_region
        %p401 = scmp.lt.s32.totalorder %s19, 1
        %s402 = scalar_select %p401, %s19, 1
        %s403 = smul.addr %s402, 3
        %s404 = smul.addr %s403, 4
        %s405 = scalar_lea.vmem %s2, %s404
      $region68: #{expansion_block_forward.3} parent=55 // pred_fallthru
        _
    $region56: #{expansion_block_forward.3} parent=5 // pred_fallthru
      _
    %p406 = scmp.le.s32.totalorder 1, %s19
    %p407 = scmp.lt.s32.totalorder %s19, 3
    %p408 = pnand %p406, %p407
    %p409 = pneg %p408
    // Predicated region
    $region69: #{expansion_block_forward.3} parent=5 // pred_check
      _
    $region70: #{expansion_block_forward.3} parent=5 // pred_check_branch
      %411 = sbr.rel (%p408) target = $region72
    $region71: #{expansion_block_forward.3} parent=5 // pred_region
      %s412 = ssub.s32 %s19, 1
      %p413 = scmp.lt.s32.totalorder %s24, 1
      %s414 = scalar_select %p413, %s24, 1
      %s415 = smul.addr %s414, 3
      %s416 = smul.addr %s415, 4
      %s417 = scalar_lea.vmem %s0, %s416
      %p418 = pneg %p45
      %p419 = pneg %p42
      %p420 = scmp.lt.s32.totalorder %s24, 1
      %s421 = scalar_select %p420, %s24, 1
      %s422 = smul.addr %s421, 3
      %s423 = smul.addr %s422, 4
      %s424 = scalar_lea.vmem %s1, %s423
      %p425 = pneg %p71
      %p426 = pneg %p68
      %p427 = scmp.lt.s32.totalorder %s24, 1
      %s428 = scalar_select %p427, %s24, 1
      %s429 = smul.addr %s428, 3
      %s430 = smul.addr %s429, 4
      %s431 = scalar_lea.vmem %s2, %s430
      %p432 = pneg %p97
      %p433 = pneg %p94
      %p434 = pneg %p118
      %p435 = pneg %p115
      %p436 = pneg %p139
      %p437 = pneg %p136
      %p438 = pneg %p160
      %p439 = pneg %p157
      %p440 = pneg %p181
      %p441 = pneg %p178
      %p442 = pneg %p202
      %p443 = pneg %p199
      %p444 = pneg %p223
      %p445 = pneg %p220
      %p446 = pneg %p244
      %p447 = pneg %p241
      %p448 = pneg %p265
      %p449 = pneg %p262
      %p450 = pneg %p286
      %p451 = pneg %p283
      %p452 = pneg %p307
      %p453 = pneg %p304
      %p454 = pneg %p333
      %p455 = pneg %p330
      %p456 = scmp.lt.s32.totalorder %s24, 1
      %s457 = scalar_select %p456, %s24, 1
      %s458 = smul.addr %s457, 3
      %s459 = smul.addr %s458, 4
      %s460 = scalar_lea.vmem %s13, %s459
      %p461 = scmp.lt.s32.totalorder %s24, 1
      %s462 = scalar_select %p461, %s24, 1
      %s463 = smul.addr %s462, 3
      %s464 = smul.addr %s463, 4
      %s465 = scalar_lea.vmem %s0, %s464
      %p466 = scmp.lt.s32.totalorder %s24, 1
      %s467 = scalar_select %p466, %s24, 1
      %s468 = smul.addr %s467, 3
      %s469 = smul.addr %s468, 4
      %s470 = scalar_lea.vmem %s1, %s469
      %p471 = scmp.lt.s32.totalorder %s24, 1
      %s472 = scalar_select %p471, %s24, 1
      %s473 = smul.addr %s472, 3
      %s474 = smul.addr %s473, 4
      %s475 = scalar_lea.vmem %s2, %s474
      %p476 = scmp.lt.s32.totalorder %s24, 1
      %s477 = scalar_select %p476, %s24, 1
      %s478 = smul.addr %s477, 3
      %s479 = smul.addr %s478, 4
      %s480 = scalar_lea.vmem %s13, %s479
      %v481 = vld [vmem:[%s12] sm:$0x7]
      %vm482 = vcmask 154624
      %483 = vst.msk [vmem:[#allocation2] sm:$0xff] %vm482, 0.0
      %vm484 = vcmask 703896
      %485 = vst.msk [vmem:[#allocation2 + $0x10] sm:$0xff] %vm484, 0.0
      %486 = vst.msk [vmem:[#allocation3] sm:$0xff] %vm482, 0.0
      %487 = vst.msk [vmem:[#allocation3 + $0x10] sm:$0xff] %vm484, 0.0
      %488 = vst.msk [vmem:[#allocation4] sm:$0xff] %vm482, 0.0
      %489 = vst.msk [vmem:[#allocation4 + $0x10] sm:$0xff] %vm484, 0.0
      %v490 = vld [vmem:[%s465] sm:$0xff]
      %v491 = vld [vmem:[%s465 + $0x8] sm:$0xf]
      %v494 = vcombine.high %v490, %v490
      %495 = vrot.lane.b32.xlu0 %v490, 19
      %v496 = vpop.permute.xlu0 %495
      %497 = vrot.lane.b32.xlu0 %v494, 19
      %v498 = vpop.permute.xlu0 %497
      %499 = vrot.lane.b32.xlu0 %v491, 19
      %v500 = vpop.permute.xlu0 %499
      %v501 = vsel %vm482, %v496, %v498
      %v502 = vsel %vm482, %v498, %v500
      %vm506 = vcmask 1043608
      %507 = vst.msk [vmem:[#allocation2] sm:$0xf] %vm506, %v496
      %508 = vst [vmem:[#allocation2 + $0x8] sm:$0xf] %v501
      %vm509 = vcmask 412672
      %510 = vst.msk [vmem:[#allocation2 + $0x10] sm:$0xf] %vm509, %v502
      %v511 = vld [vmem:[%s470] sm:$0xff]
      %v512 = vld [vmem:[%s470 + $0x8] sm:$0xf]
      %v515 = vcombine.low %v511, %v511
      %v516 = vcombine.low %v512, %v512
      %517 = vrot.lane.b32.xlu0 %v515, 19
      %v518 = vpop.permute.xlu0 %517
      %519 = vrot.lane.b32.xlu0 %v511, 19
      %v520 = vpop.permute.xlu0 %519
      %521 = vrot.lane.b32.xlu0 %v516, 19
      %v522 = vpop.permute.xlu0 %521
      %v523 = vsel %vm482, %v518, %v520
      %v524 = vsel %vm482, %v520, %v522
      %vm528 = vcmask 1047708
      %529 = vst.msk [vmem:[#allocation2] sm:$0xf0] %vm528, %v518
      %530 = vst [vmem:[#allocation2 + $0x8] sm:$0xf0] %v523
      %vm531 = vcmask 416772
      %532 = vst.msk [vmem:[#allocation2 + $0x10] sm:$0xf0] %vm531, %v524
      %v533 = vld [vmem:[%s3] sm:$0xff]
      %v534 = vld [vmem:[#allocation2] sm:$0xff]
      %v535 = vld [vmem:[#allocation2 + $0x8] sm:$0xff]
      %v536 = vld [vmem:[#allocation2 + $0x10] sm:$0xff]
      %538 = vrot.lane.b32.xlu0 %v533, 120
      %v539 = vpop.permute.xlu0 %538
      %543 = vrot.lane.b32.xlu0 %v534, 127
      %v544 = vpop.permute.xlu0 %543
      %545 = vrot.lane.b32.xlu0 %v535, 127
      %v546 = vpop.permute.xlu0 %545
      %547 = vrot.lane.b32.xlu0 %v536, 127
      %v548 = vpop.permute.xlu0 %547
      %vm549 = vcmask 1039360
      %v550 = vsel %vm549, %v544, %v546
      %v551 = vsel %vm549, %v546, %v548
      %vm555 = vcmask 64512
      %v556 = vsel %vm555, %v539, 0
      %558 = vmatprep.subr.mxu0 0.0
      %559 = vmatpush1.msra.mxu0 0.0
      %560 = vmatprep.subr.mxu0 0.0
      %561 = vmatpush1.msra.mxu0 0.0
      %562 = vmatprep.subr.mxu0 0.0
      %563 = vmatpush1.msra.mxu0 0.0
      %564 = vmatprep.subr.mxu0 0.0
      %565 = vmatpush1.msra.mxu0 0.0
      %566 = vmatprep.subr.mxu0 0.0
      %567 = vmatpush1.msra.mxu0 0.0
      %568 = vmatprep.subr.mxu0 0.0
      %569 = vmatpush1.msra.mxu0 0.0
      %570 = vmatprep.subr.mxu0 0.0
      %571 = vmatpush1.msra.mxu0 0.0
      %572 = vmatprep.subr.mxu0 0.0
      %573 = vmatpush1.msra.mxu0 0.0
      %574 = vmatprep.subr.mxu0 0.0
      %575 = vmatpush1.msra.mxu0 0.0
      %576 = vmatprep.subr.mxu0 0.0
      %577 = vmatpush1.msra.mxu0 0.0
      %578 = vmatprep.subr.mxu0 0.0
      %579 = vmatpush1.msra.mxu0 0.0
      %580 = vmatprep.subr.mxu0 0.0
      %581 = vmatpush1.msra.mxu0 0.0
      %582 = vmatprep.subr.mxu0 0.0
      %583 = vmatpush1.msra.mxu0 0.0
      %584 = vmatprep.subr.mxu0 0.0
      %585 = vmatpush1.msra.mxu0 0.0
      %586 = vmatprep.subr.mxu0 0.0
      %587 = vmatpush1.msra.mxu0 0.0
      %588 = vmatprep.subr.mxu0 %v551
      %589 = vmatpush1.msra.mxu0 %v550
      %590 = vmatprep.subr.mxu0 0.0
      %591 = vmatpush2.msra.mxu0 0.0
      %592 = vmatprep.subr.mxu0 0.0
      %593 = vmatpush2.msra.mxu0 0.0
      %594 = vmatprep.subr.mxu0 0.0
      %595 = vmatpush2.msra.mxu0 0.0
      %596 = vmatprep.subr.mxu0 0.0
      %597 = vmatpush2.msra.mxu0 0.0
      %598 = vmatprep.subr.mxu0 0.0
      %599 = vmatpush2.msra.mxu0 0.0
      %600 = vmatprep.subr.mxu0 0.0
      %601 = vmatpush2.msra.mxu0 0.0
      %602 = vmatprep.subr.mxu0 0.0
      %603 = vmatpush2.msra.mxu0 0.0
      %604 = vmatprep.subr.mxu0 0.0
      %605 = vmatpush2.msra.mxu0 0.0
      %606 = vmatprep.subr.mxu0 0.0
      %607 = vmatpush2.msra.mxu0 0.0
      %608 = vmatprep.subr.mxu0 0.0
      %609 = vmatpush2.msra.mxu0 0.0
      %610 = vmatprep.subr.mxu0 0.0
      %611 = vmatpush2.msra.mxu0 0.0
      %612 = vmatprep.subr.mxu0 0.0
      %613 = vmatpush2.msra.mxu0 0.0
      %614 = vmatprep.subr.mxu0 0.0
      %615 = vmatpush2.msra.mxu0 0.0
      %616 = vmatprep.subr.mxu0 0.0
      %617 = vmatpush2.msra.mxu0 0.0
      %618 = vmatprep.subr.mxu0 0.0
      %619 = vmatpush2.msra.mxu0 0.0
      %620 = vmatprep.subr.mxu0 0.0
      %621 = vmatpush2.msra.mxu0 0.0
      %622 = vmatprep.mubr.f32.mxu0 0.0
      %623 = vmatmul.mubr.f32.gmra.mxu0 %v556
      %v624 = vpop.f32.mrf.mxu0
      %v625 = vadd.f32 0.0, %v624
      %v626 = vpop.f32.mrf.mxu0
      %v627 = vadd.f32 0.0, %v626
      %628 = vdwg.mxu0
      %629 = vmatprep.subr.mxu0 0.0
      %630 = vmatpush1.msra.mxu0 0.0
      %631 = vmatprep.subr.mxu0 0.0
      %632 = vmatpush1.msra.mxu0 0.0
      %633 = vmatprep.subr.mxu0 0.0
      %634 = vmatpush1.msra.mxu0 0.0
      %635 = vmatprep.subr.mxu0 0.0
      %636 = vmatpush1.msra.mxu0 0.0
      %637 = vmatprep.subr.mxu0 0.0
      %638 = vmatpush1.msra.mxu0 0.0
      %639 = vmatprep.subr.mxu0 0.0
      %640 = vmatpush1.msra.mxu0 0.0
      %641 = vmatprep.subr.mxu0 0.0
      %642 = vmatpush1.msra.mxu0 0.0
      %643 = vmatprep.subr.mxu0 0.0
      %644 = vmatpush1.msra.mxu0 0.0
      %645 = vmatprep.subr.mxu0 0.0
      %646 = vmatpush1.msra.mxu0 0.0
      %647 = vmatprep.subr.mxu0 0.0
      %648 = vmatpush1.msra.mxu0 0.0
      %649 = vmatprep.subr.mxu0 0.0
      %650 = vmatpush1.msra.mxu0 0.0
      %651 = vmatprep.subr.mxu0 0.0
      %652 = vmatpush1.msra.mxu0 0.0
      %653 = vmatprep.subr.mxu0 0.0
      %654 = vmatpush1.msra.mxu0 0.0
      %655 = vmatprep.subr.mxu0 0.0
      %656 = vmatpush1.msra.mxu0 0.0
      %657 = vmatprep.subr.mxu0 0.0
      %658 = vmatpush1.msra.mxu0 0.0
      %659 = vmatprep.subr.mxu0 0.0
      %660 = vmatpush1.msra.mxu0 %v548
      %661 = vmatprep.subr.mxu0 0.0
      %662 = vmatpush2.msra.mxu0 0.0
      %663 = vmatprep.subr.mxu0 0.0
      %664 = vmatpush2.msra.mxu0 0.0
      %665 = vmatprep.subr.mxu0 0.0
      %666 = vmatpush2.msra.mxu0 0.0
      %667 = vmatprep.subr.mxu0 0.0
      %668 = vmatpush2.msra.mxu0 0.0
      %669 = vmatprep.subr.mxu0 0.0
      %670 = vmatpush2.msra.mxu0 0.0
      %671 = vmatprep.subr.mxu0 0.0
      %672 = vmatpush2.msra.mxu0 0.0
      %673 = vmatprep.subr.mxu0 0.0
      %674 = vmatpush2.msra.mxu0 0.0
      %675 = vmatprep.subr.mxu0 0.0
      %676 = vmatpush2.msra.mxu0 0.0
      %677 = vmatprep.subr.mxu0 0.0
      %678 = vmatpush2.msra.mxu0 0.0
      %679 = vmatprep.subr.mxu0 0.0
      %680 = vmatpush2.msra.mxu0 0.0
      %681 = vmatprep.subr.mxu0 0.0
      %682 = vmatpush2.msra.mxu0 0.0
      %683 = vmatprep.subr.mxu0 0.0
      %684 = vmatpush2.msra.mxu0 0.0
      %685 = vmatprep.subr.mxu0 0.0
      %686 = vmatpush2.msra.mxu0 0.0
      %687 = vmatprep.subr.mxu0 0.0
      %688 = vmatpush2.msra.mxu0 0.0
      %689 = vmatprep.subr.mxu0 0.0
      %690 = vmatpush2.msra.mxu0 0.0
      %691 = vmatprep.subr.mxu0 0.0
      %692 = vmatpush2.msra.mxu0 0.0
      %693 = vmatprep.mubr.f32.mxu0 0.0
      %694 = vmatmul.mubr.f32.gmra.mxu0 %v556
      %v695 = vpop.f32.mrf.mxu0
      %v696 = vadd.f32 0.0, %v695
      %v697 = vpop.f32.mrf.mxu0
      %698 = vdwg.mxu0
      %v699 = vsel %vm555, %v533, 0
      %701 = vmatprep.subr.mxu0 0.0
      %702 = vmatpush1.msra.mxu0 0.0
      %703 = vmatprep.subr.mxu0 0.0
      %704 = vmatpush1.msra.mxu0 0.0
      %705 = vmatprep.subr.mxu0 0.0
      %706 = vmatpush1.msra.mxu0 0.0
      %707 = vmatprep.subr.mxu0 0.0
      %708 = vmatpush1.msra.mxu0 0.0
      %709 = vmatprep.subr.mxu0 0.0
      %710 = vmatpush1.msra.mxu0 0.0
      %711 = vmatprep.subr.mxu0 0.0
      %712 = vmatpush1.msra.mxu0 0.0
      %713 = vmatprep.subr.mxu0 0.0
      %714 = vmatpush1.msra.mxu0 0.0
      %715 = vmatprep.subr.mxu0 0.0
      %716 = vmatpush1.msra.mxu0 0.0
      %717 = vmatprep.subr.mxu0 0.0
      %718 = vmatpush1.msra.mxu0 0.0
      %719 = vmatprep.subr.mxu0 0.0
      %720 = vmatpush1.msra.mxu0 0.0
      %721 = vmatprep.subr.mxu0 0.0
      %722 = vmatpush1.msra.mxu0 0.0
      %723 = vmatprep.subr.mxu0 0.0
      %724 = vmatpush1.msra.mxu0 0.0
      %725 = vmatprep.subr.mxu0 0.0
      %726 = vmatpush1.msra.mxu0 0.0
      %727 = vmatprep.subr.mxu0 0.0
      %728 = vmatpush1.msra.mxu0 0.0
      %729 = vmatprep.subr.mxu0 0.0
      %730 = vmatpush1.msra.mxu0 0.0
      %731 = vmatprep.subr.mxu0 %v535
      %732 = vmatpush1.msra.mxu0 %v534
      %733 = vmatprep.subr.mxu0 0.0
      %734 = vmatpush2.msra.mxu0 0.0
      %735 = vmatprep.subr.mxu0 0.0
      %736 = vmatpush2.msra.mxu0 0.0
      %737 = vmatprep.subr.mxu0 0.0
      %738 = vmatpush2.msra.mxu0 0.0
      %739 = vmatprep.subr.mxu0 0.0
      %740 = vmatpush2.msra.mxu0 0.0
      %741 = vmatprep.subr.mxu0 0.0
      %742 = vmatpush2.msra.mxu0 0.0
      %743 = vmatprep.subr.mxu0 0.0
      %744 = vmatpush2.msra.mxu0 0.0
      %745 = vmatprep.subr.mxu0 0.0
      %746 = vmatpush2.msra.mxu0 0.0
      %747 = vmatprep.subr.mxu0 0.0
      %748 = vmatpush2.msra.mxu0 0.0
      %749 = vmatprep.subr.mxu0 0.0
      %750 = vmatpush2.msra.mxu0 0.0
      %751 = vmatprep.subr.mxu0 0.0
      %752 = vmatpush2.msra.mxu0 0.0
      %753 = vmatprep.subr.mxu0 0.0
      %754 = vmatpush2.msra.mxu0 0.0
      %755 = vmatprep.subr.mxu0 0.0
      %756 = vmatpush2.msra.mxu0 0.0
      %757 = vmatprep.subr.mxu0 0.0
      %758 = vmatpush2.msra.mxu0 0.0
      %759 = vmatprep.subr.mxu0 0.0
      %760 = vmatpush2.msra.mxu0 0.0
      %761 = vmatprep.subr.mxu0 0.0
      %762 = vmatpush2.msra.mxu0 0.0
      %763 = vmatprep.subr.mxu0 0.0
      %764 = vmatpush2.msra.mxu0 0.0
      %765 = vmatprep.mubr.f32.mxu0 0.0
      %766 = vmatmul.mubr.f32.gmra.mxu0 %v699
      %v767 = vpop.f32.mrf.mxu0
      %v768 = vadd.f32 %v625, %v767
      %v769 = vpop.f32.mrf.mxu0
      %v770 = vadd.f32 %v627, %v769
      %771 = vdwg.mxu0
      %772 = vmatprep.subr.mxu0 0.0
      %773 = vmatpush1.msra.mxu0 0.0
      %774 = vmatprep.subr.mxu0 0.0
      %775 = vmatpush1.msra.mxu0 0.0
      %776 = vmatprep.subr.mxu0 0.0
      %777 = vmatpush1.msra.mxu0 0.0
      %778 = vmatprep.subr.mxu0 0.0
      %779 = vmatpush1.msra.mxu0 0.0
      %780 = vmatprep.subr.mxu0 0.0
      %781 = vmatpush1.msra.mxu0 0.0
      %782 = vmatprep.subr.mxu0 0.0
      %783 = vmatpush1.msra.mxu0 0.0
      %784 = vmatprep.subr.mxu0 0.0
      %785 = vmatpush1.msra.mxu0 0.0
      %786 = vmatprep.subr.mxu0 0.0
      %787 = vmatpush1.msra.mxu0 0.0
      %788 = vmatprep.subr.mxu0 0.0
      %789 = vmatpush1.msra.mxu0 0.0
      %790 = vmatprep.subr.mxu0 0.0
      %791 = vmatpush1.msra.mxu0 0.0
      %792 = vmatprep.subr.mxu0 0.0
      %793 = vmatpush1.msra.mxu0 0.0
      %794 = vmatprep.subr.mxu0 0.0
      %795 = vmatpush1.msra.mxu0 0.0
      %796 = vmatprep.subr.mxu0 0.0
      %797 = vmatpush1.msra.mxu0 0.0
      %798 = vmatprep.subr.mxu0 0.0
      %799 = vmatpush1.msra.mxu0 0.0
      %800 = vmatprep.subr.mxu0 0.0
      %801 = vmatpush1.msra.mxu0 0.0
      %802 = vmatprep.subr.mxu0 0.0
      %803 = vmatpush1.msra.mxu0 %v536
      %804 = vmatprep.subr.mxu0 0.0
      %805 = vmatpush2.msra.mxu0 0.0
      %806 = vmatprep.subr.mxu0 0.0
      %807 = vmatpush2.msra.mxu0 0.0
      %808 = vmatprep.subr.mxu0 0.0
      %809 = vmatpush2.msra.mxu0 0.0
      %810 = vmatprep.subr.mxu0 0.0
      %811 = vmatpush2.msra.mxu0 0.0
      %812 = vmatprep.subr.mxu0 0.0
      %813 = vmatpush2.msra.mxu0 0.0
      %814 = vmatprep.subr.mxu0 0.0
      %815 = vmatpush2.msra.mxu0 0.0
      %816 = vmatprep.subr.mxu0 0.0
      %817 = vmatpush2.msra.mxu0 0.0
      %818 = vmatprep.subr.mxu0 0.0
      %819 = vmatpush2.msra.mxu0 0.0
      %820 = vmatprep.subr.mxu0 0.0
      %821 = vmatpush2.msra.mxu0 0.0
      %822 = vmatprep.subr.mxu0 0.0
      %823 = vmatpush2.msra.mxu0 0.0
      %824 = vmatprep.subr.mxu0 0.0
      %825 = vmatpush2.msra.mxu0 0.0
      %826 = vmatprep.subr.mxu0 0.0
      %827 = vmatpush2.msra.mxu0 0.0
      %828 = vmatprep.subr.mxu0 0.0
      %829 = vmatpush2.msra.mxu0 0.0
      %830 = vmatprep.subr.mxu0 0.0
      %831 = vmatpush2.msra.mxu0 0.0
      %832 = vmatprep.subr.mxu0 0.0
      %833 = vmatpush2.msra.mxu0 0.0
      %834 = vmatprep.subr.mxu0 0.0
      %835 = vmatpush2.msra.mxu0 0.0
      %836 = vmatprep.mubr.f32.mxu0 0.0
      %837 = vmatmul.mubr.f32.gmra.mxu0 %v699
      %v838 = vpop.f32.mrf.mxu0
      %v839 = vadd.f32 %v696, %v838
      %v840 = vpop.f32.mrf.mxu0
      %841 = vdwg.mxu0
      %842 = vrot.lane.b32.xlu0 %v533, 112
      %v843 = vpop.permute.xlu0 %842
      %844 = vrot.lane.b32.xlu0 %v534, 126
      %v845 = vpop.permute.xlu0 %844
      %846 = vrot.lane.b32.xlu0 %v535, 126
      %v847 = vpop.permute.xlu0 %846
      %848 = vrot.lane.b32.xlu0 %v536, 126
      %v849 = vpop.permute.xlu0 %848
      %vm850 = vcmask 1031168
      %v851 = vsel %vm850, %v845, %v847
      %v852 = vsel %vm850, %v847, %v849
      %v856 = vsel %vm555, %v843, 0
      %858 = vmatprep.subr.mxu0 0.0
      %859 = vmatpush1.msra.mxu0 0.0
      %860 = vmatprep.subr.mxu0 0.0
      %861 = vmatpush1.msra.mxu0 0.0
      %862 = vmatprep.subr.mxu0 0.0
      %863 = vmatpush1.msra.mxu0 0.0
      %864 = vmatprep.subr.mxu0 0.0
      %865 = vmatpush1.msra.mxu0 0.0
      %866 = vmatprep.subr.mxu0 0.0
      %867 = vmatpush1.msra.mxu0 0.0
      %868 = vmatprep.subr.mxu0 0.0
      %869 = vmatpush1.msra.mxu0 0.0
      %870 = vmatprep.subr.mxu0 0.0
      %871 = vmatpush1.msra.mxu0 0.0
      %872 = vmatprep.subr.mxu0 0.0
      %873 = vmatpush1.msra.mxu0 0.0
      %874 = vmatprep.subr.mxu0 0.0
      %875 = vmatpush1.msra.mxu0 0.0
      %876 = vmatprep.subr.mxu0 0.0
      %877 = vmatpush1.msra.mxu0 0.0
      %878 = vmatprep.subr.mxu0 0.0
      %879 = vmatpush1.msra.mxu0 0.0
      %880 = vmatprep.subr.mxu0 0.0
      %881 = vmatpush1.msra.mxu0 0.0
      %882 = vmatprep.subr.mxu0 0.0
      %883 = vmatpush1.msra.mxu0 0.0
      %884 = vmatprep.subr.mxu0 0.0
      %885 = vmatpush1.msra.mxu0 0.0
      %886 = vmatprep.subr.mxu0 0.0
      %887 = vmatpush1.msra.mxu0 0.0
      %888 = vmatprep.subr.mxu0 %v852
      %889 = vmatpush1.msra.mxu0 %v851
      %890 = vmatprep.subr.mxu0 0.0
      %891 = vmatpush2.msra.mxu0 0.0
      %892 = vmatprep.subr.mxu0 0.0
      %893 = vmatpush2.msra.mxu0 0.0
      %894 = vmatprep.subr.mxu0 0.0
      %895 = vmatpush2.msra.mxu0 0.0
      %896 = vmatprep.subr.mxu0 0.0
      %897 = vmatpush2.msra.mxu0 0.0
      %898 = vmatprep.subr.mxu0 0.0
      %899 = vmatpush2.msra.mxu0 0.0
      %900 = vmatprep.subr.mxu0 0.0
      %901 = vmatpush2.msra.mxu0 0.0
      %902 = vmatprep.subr.mxu0 0.0
      %903 = vmatpush2.msra.mxu0 0.0
      %904 = vmatprep.subr.mxu0 0.0
      %905 = vmatpush2.msra.mxu0 0.0
      %906 = vmatprep.subr.mxu0 0.0
      %907 = vmatpush2.msra.mxu0 0.0
      %908 = vmatprep.subr.mxu0 0.0
      %909 = vmatpush2.msra.mxu0 0.0
      %910 = vmatprep.subr.mxu0 0.0
      %911 = vmatpush2.msra.mxu0 0.0
      %912 = vmatprep.subr.mxu0 0.0
      %913 = vmatpush2.msra.mxu0 0.0
      %914 = vmatprep.subr.mxu0 0.0
      %915 = vmatpush2.msra.mxu0 0.0
      %916 = vmatprep.subr.mxu0 0.0
      %917 = vmatpush2.msra.mxu0 0.0
      %918 = vmatprep.subr.mxu0 0.0
      %919 = vmatpush2.msra.mxu0 0.0
      %920 = vmatprep.subr.mxu0 0.0
      %921 = vmatpush2.msra.mxu0 0.0
      %922 = vmatprep.mubr.f32.mxu0 0.0
      %923 = vmatmul.mubr.f32.gmra.mxu0 %v856
      %v924 = vpop.f32.mrf.mxu0
      %v925 = vadd.f32 0.0, %v924
      %v926 = vpop.f32.mrf.mxu0
      %v927 = vadd.f32 0.0, %v926
      %928 = vdwg.mxu0
      %929 = vmatprep.subr.mxu0 0.0
      %930 = vmatpush1.msra.mxu0 0.0
      %931 = vmatprep.subr.mxu0 0.0
      %932 = vmatpush1.msra.mxu0 0.0
      %933 = vmatprep.subr.mxu0 0.0
      %934 = vmatpush1.msra.mxu0 0.0
      %935 = vmatprep.subr.mxu0 0.0
      %936 = vmatpush1.msra.mxu0 0.0
      %937 = vmatprep.subr.mxu0 0.0
      %938 = vmatpush1.msra.mxu0 0.0
      %939 = vmatprep.subr.mxu0 0.0
      %940 = vmatpush1.msra.mxu0 0.0
      %941 = vmatprep.subr.mxu0 0.0
      %942 = vmatpush1.msra.mxu0 0.0
      %943 = vmatprep.subr.mxu0 0.0
      %944 = vmatpush1.msra.mxu0 0.0
      %945 = vmatprep.subr.mxu0 0.0
      %946 = vmatpush1.msra.mxu0 0.0
      %947 = vmatprep.subr.mxu0 0.0
      %948 = vmatpush1.msra.mxu0 0.0
      %949 = vmatprep.subr.mxu0 0.0
      %950 = vmatpush1.msra.mxu0 0.0
      %951 = vmatprep.subr.mxu0 0.0
      %952 = vmatpush1.msra.mxu0 0.0
      %953 = vmatprep.subr.mxu0 0.0
      %954 = vmatpush1.msra.mxu0 0.0
      %955 = vmatprep.subr.mxu0 0.0
      %956 = vmatpush1.msra.mxu0 0.0
      %957 = vmatprep.subr.mxu0 0.0
      %958 = vmatpush1.msra.mxu0 0.0
      %959 = vmatprep.subr.mxu0 0.0
      %960 = vmatpush1.msra.mxu0 %v849
      %961 = vmatprep.subr.mxu0 0.0
      %962 = vmatpush2.msra.mxu0 0.0
      %963 = vmatprep.subr.mxu0 0.0
      %964 = vmatpush2.msra.mxu0 0.0
      %965 = vmatprep.subr.mxu0 0.0
      %966 = vmatpush2.msra.mxu0 0.0
      %967 = vmatprep.subr.mxu0 0.0
      %968 = vmatpush2.msra.mxu0 0.0
      %969 = vmatprep.subr.mxu0 0.0
      %970 = vmatpush2.msra.mxu0 0.0
      %971 = vmatprep.subr.mxu0 0.0
      %972 = vmatpush2.msra.mxu0 0.0
      %973 = vmatprep.subr.mxu0 0.0
      %974 = vmatpush2.msra.mxu0 0.0
      %975 = vmatprep.subr.mxu0 0.0
      %976 = vmatpush2.msra.mxu0 0.0
      %977 = vmatprep.subr.mxu0 0.0
      %978 = vmatpush2.msra.mxu0 0.0
      %979 = vmatprep.subr.mxu0 0.0
      %980 = vmatpush2.msra.mxu0 0.0
      %981 = vmatprep.subr.mxu0 0.0
      %982 = vmatpush2.msra.mxu0 0.0
      %983 = vmatprep.subr.mxu0 0.0
      %984 = vmatpush2.msra.mxu0 0.0
      %985 = vmatprep.subr.mxu0 0.0
      %986 = vmatpush2.msra.mxu0 0.0
      %987 = vmatprep.subr.mxu0 0.0
      %988 = vmatpush2.msra.mxu0 0.0
      %989 = vmatprep.subr.mxu0 0.0
      %990 = vmatpush2.msra.mxu0 0.0
      %991 = vmatprep.subr.mxu0 0.0
      %992 = vmatpush2.msra.mxu0 0.0
      %993 = vmatprep.mubr.f32.mxu0 0.0
      %994 = vmatmul.mubr.f32.gmra.mxu0 %v856
      %v995 = vpop.f32.mrf.mxu0
      %v996 = vadd.f32 0.0, %v995
      %v997 = vpop.f32.mrf.mxu0
      %998 = vdwg.mxu0
      %v999 = vadd.f32 %v768, %v925
      %v1000 = vadd.f32 %v770, %v927
      %v1001 = vadd.f32 %v839, %v996
      %1002 = vrot.lane.b32.xlu0 %v533, 104
      %v1003 = vpop.permute.xlu0 %1002
      %1004 = vrot.lane.b32.xlu0 %v534, 110
      %v1005 = vpop.permute.xlu0 %1004
      %1006 = vrot.lane.b32.xlu0 %v535, 110
      %v1007 = vpop.permute.xlu0 %1006
      %1008 = vrot.lane.b32.xlu0 %v536, 110
      %v1009 = vpop.permute.xlu0 %1008
      %vm1010 = vcmask 900096
      %v1011 = vsel %vm1010, %v1005, %v1007
      %v1012 = vsel %vm1010, %v1007, %v1009
      %v1016 = vsel %vm555, %v1003, 0
      %1018 = vmatprep.subr.mxu0 0.0
      %1019 = vmatpush1.msra.mxu0 0.0
      %1020 = vmatprep.subr.mxu0 0.0
      %1021 = vmatpush1.msra.mxu0 0.0
      %1022 = vmatprep.subr.mxu0 0.0
      %1023 = vmatpush1.msra.mxu0 0.0
      %1024 = vmatprep.subr.mxu0 0.0
      %1025 = vmatpush1.msra.mxu0 0.0
      %1026 = vmatprep.subr.mxu0 0.0
      %1027 = vmatpush1.msra.mxu0 0.0
      %1028 = vmatprep.subr.mxu0 0.0
      %1029 = vmatpush1.msra.mxu0 0.0
      %1030 = vmatprep.subr.mxu0 0.0
      %1031 = vmatpush1.msra.mxu0 0.0
      %1032 = vmatprep.subr.mxu0 0.0
      %1033 = vmatpush1.msra.mxu0 0.0
      %1034 = vmatprep.subr.mxu0 0.0
      %1035 = vmatpush1.msra.mxu0 0.0
      %1036 = vmatprep.subr.mxu0 0.0
      %1037 = vmatpush1.msra.mxu0 0.0
      %1038 = vmatprep.subr.mxu0 0.0
      %1039 = vmatpush1.msra.mxu0 0.0
      %1040 = vmatprep.subr.mxu0 0.0
      %1041 = vmatpush1.msra.mxu0 0.0
      %1042 = vmatprep.subr.mxu0 0.0
      %1043 = vmatpush1.msra.mxu0 0.0
      %1044 = vmatprep.subr.mxu0 0.0
      %1045 = vmatpush1.msra.mxu0 0.0
      %1046 = vmatprep.subr.mxu0 0.0
      %1047 = vmatpush1.msra.mxu0 0.0
      %1048 = vmatprep.subr.mxu0 %v1012
      %1049 = vmatpush1.msra.mxu0 %v1011
      %1050 = vmatprep.subr.mxu0 0.0
      %1051 = vmatpush2.msra.mxu0 0.0
      %1052 = vmatprep.subr.mxu0 0.0
      %1053 = vmatpush2.msra.mxu0 0.0
      %1054 = vmatprep.subr.mxu0 0.0
      %1055 = vmatpush2.msra.mxu0 0.0
      %1056 = vmatprep.subr.mxu0 0.0
      %1057 = vmatpush2.msra.mxu0 0.0
      %1058 = vmatprep.subr.mxu0 0.0
      %1059 = vmatpush2.msra.mxu0 0.0
      %1060 = vmatprep.subr.mxu0 0.0
      %1061 = vmatpush2.msra.mxu0 0.0
      %1062 = vmatprep.subr.mxu0 0.0
      %1063 = vmatpush2.msra.mxu0 0.0
      %1064 = vmatprep.subr.mxu0 0.0
      %1065 = vmatpush2.msra.mxu0 0.0
      %1066 = vmatprep.subr.mxu0 0.0
      %1067 = vmatpush2.msra.mxu0 0.0
      %1068 = vmatprep.subr.mxu0 0.0
      %1069 = vmatpush2.msra.mxu0 0.0
      %1070 = vmatprep.subr.mxu0 0.0
      %1071 = vmatpush2.msra.mxu0 0.0
      %1072 = vmatprep.subr.mxu0 0.0
      %1073 = vmatpush2.msra.mxu0 0.0
      %1074 = vmatprep.subr.mxu0 0.0
      %1075 = vmatpush2.msra.mxu0 0.0
      %1076 = vmatprep.subr.mxu0 0.0
      %1077 = vmatpush2.msra.mxu0 0.0
      %1078 = vmatprep.subr.mxu0 0.0
      %1079 = vmatpush2.msra.mxu0 0.0
      %1080 = vmatprep.subr.mxu0 0.0
      %1081 = vmatpush2.msra.mxu0 0.0
      %1082 = vmatprep.mubr.f32.mxu0 0.0
      %1083 = vmatmul.mubr.f32.gmra.mxu0 %v1016
      %v1084 = vpop.f32.mrf.mxu0
      %v1085 = vadd.f32 0.0, %v1084
      %v1086 = vpop.f32.mrf.mxu0
      %v1087 = vadd.f32 0.0, %v1086
      %1088 = vdwg.mxu0
      %1089 = vmatprep.subr.mxu0 0.0
      %1090 = vmatpush1.msra.mxu0 0.0
      %1091 = vmatprep.subr.mxu0 0.0
      %1092 = vmatpush1.msra.mxu0 0.0
      %1093 = vmatprep.subr.mxu0 0.0
      %1094 = vmatpush1.msra.mxu0 0.0
      %1095 = vmatprep.subr.mxu0 0.0
      %1096 = vmatpush1.msra.mxu0 0.0
      %1097 = vmatprep.subr.mxu0 0.0
      %1098 = vmatpush1.msra.mxu0 0.0
      %1099 = vmatprep.subr.mxu0 0.0
      %1100 = vmatpush1.msra.mxu0 0.0
      %1101 = vmatprep.subr.mxu0 0.0
      %1102 = vmatpush1.msra.mxu0 0.0
      %1103 = vmatprep.subr.mxu0 0.0
      %1104 = vmatpush1.msra.mxu0 0.0
      %1105 = vmatprep.subr.mxu0 0.0
      %1106 = vmatpush1.msra.mxu0 0.0
      %1107 = vmatprep.subr.mxu0 0.0
      %1108 = vmatpush1.msra.mxu0 0.0
      %1109 = vmatprep.subr.mxu0 0.0
      %1110 = vmatpush1.msra.mxu0 0.0
      %1111 = vmatprep.subr.mxu0 0.0
      %1112 = vmatpush1.msra.mxu0 0.0
      %1113 = vmatprep.subr.mxu0 0.0
      %1114 = vmatpush1.msra.mxu0 0.0
      %1115 = vmatprep.subr.mxu0 0.0
      %1116 = vmatpush1.msra.mxu0 0.0
      %1117 = vmatprep.subr.mxu0 0.0
      %1118 = vmatpush1.msra.mxu0 0.0
      %1119 = vmatprep.subr.mxu0 0.0
      %1120 = vmatpush1.msra.mxu0 %v1009
      %1121 = vmatprep.subr.mxu0 0.0
      %1122 = vmatpush2.msra.mxu0 0.0
      %1123 = vmatprep.subr.mxu0 0.0
      %1124 = vmatpush2.msra.mxu0 0.0
      %1125 = vmatprep.subr.mxu0 0.0
      %1126 = vmatpush2.msra.mxu0 0.0
      %1127 = vmatprep.subr.mxu0 0.0
      %1128 = vmatpush2.msra.mxu0 0.0
      %1129 = vmatprep.subr.mxu0 0.0
      %1130 = vmatpush2.msra.mxu0 0.0
      %1131 = vmatprep.subr.mxu0 0.0
      %1132 = vmatpush2.msra.mxu0 0.0
      %1133 = vmatprep.subr.mxu0 0.0
      %1134 = vmatpush2.msra.mxu0 0.0
      %1135 = vmatprep.subr.mxu0 0.0
      %1136 = vmatpush2.msra.mxu0 0.0
      %1137 = vmatprep.subr.mxu0 0.0
      %1138 = vmatpush2.msra.mxu0 0.0
      %1139 = vmatprep.subr.mxu0 0.0
      %1140 = vmatpush2.msra.mxu0 0.0
      %1141 = vmatprep.subr.mxu0 0.0
      %1142 = vmatpush2.msra.mxu0 0.0
      %1143 = vmatprep.subr.mxu0 0.0
      %1144 = vmatpush2.msra.mxu0 0.0
      %1145 = vmatprep.subr.mxu0 0.0
      %1146 = vmatpush2.msra.mxu0 0.0
      %1147 = vmatprep.subr.mxu0 0.0
      %1148 = vmatpush2.msra.mxu0 0.0
      %1149 = vmatprep.subr.mxu0 0.0
      %1150 = vmatpush2.msra.mxu0 0.0
      %1151 = vmatprep.subr.mxu0 0.0
      %1152 = vmatpush2.msra.mxu0 0.0
      %1153 = vmatprep.mubr.f32.mxu0 0.0
      %1154 = vmatmul.mubr.f32.gmra.mxu0 %v1016
      %v1155 = vpop.f32.mrf.mxu0
      %v1156 = vadd.f32 0.0, %v1155
      %v1157 = vpop.f32.mrf.mxu0
      %1158 = vdwg.mxu0
      %v1159 = vadd.f32 %v999, %v1085
      %v1160 = vadd.f32 %v1000, %v1087
      %v1161 = vadd.f32 %v1001, %v1156
      %1162 = vrot.lane.b32.xlu0 %v533, 96
      %v1163 = vpop.permute.xlu0 %1162
      %1164 = vrot.lane.b32.xlu0 %v534, 109
      %v1165 = vpop.permute.xlu0 %1164
      %1166 = vrot.lane.b32.xlu0 %v535, 109
      %v1167 = vpop.permute.xlu0 %1166
      %1168 = vrot.lane.b32.xlu0 %v536, 109
      %v1169 = vpop.permute.xlu0 %1168
      %vm1170 = vcmask 891904
      %v1171 = vsel %vm1170, %v1165, %v1167
      %v1172 = vsel %vm1170, %v1167, %v1169
      %v1176 = vsel %vm555, %v1163, 0
      %1178 = vmatprep.subr.mxu0 0.0
      %1179 = vmatpush1.msra.mxu0 0.0
      %1180 = vmatprep.subr.mxu0 0.0
      %1181 = vmatpush1.msra.mxu0 0.0
      %1182 = vmatprep.subr.mxu0 0.0
      %1183 = vmatpush1.msra.mxu0 0.0
      %1184 = vmatprep.subr.mxu0 0.0
      %1185 = vmatpush1.msra.mxu0 0.0
      %1186 = vmatprep.subr.mxu0 0.0
      %1187 = vmatpush1.msra.mxu0 0.0
      %1188 = vmatprep.subr.mxu0 0.0
      %1189 = vmatpush1.msra.mxu0 0.0
      %1190 = vmatprep.subr.mxu0 0.0
      %1191 = vmatpush1.msra.mxu0 0.0
      %1192 = vmatprep.subr.mxu0 0.0
      %1193 = vmatpush1.msra.mxu0 0.0
      %1194 = vmatprep.subr.mxu0 0.0
      %1195 = vmatpush1.msra.mxu0 0.0
      %1196 = vmatprep.subr.mxu0 0.0
      %1197 = vmatpush1.msra.mxu0 0.0
      %1198 = vmatprep.subr.mxu0 0.0
      %1199 = vmatpush1.msra.mxu0 0.0
      %1200 = vmatprep.subr.mxu0 0.0
      %1201 = vmatpush1.msra.mxu0 0.0
      %1202 = vmatprep.subr.mxu0 0.0
      %1203 = vmatpush1.msra.mxu0 0.0
      %1204 = vmatprep.subr.mxu0 0.0
      %1205 = vmatpush1.msra.mxu0 0.0
      %1206 = vmatprep.subr.mxu0 0.0
      %1207 = vmatpush1.msra.mxu0 0.0
      %1208 = vmatprep.subr.mxu0 %v1172
      %1209 = vmatpush1.msra.mxu0 %v1171
      %1210 = vmatprep.subr.mxu0 0.0
      %1211 = vmatpush2.msra.mxu0 0.0
      %1212 = vmatprep.subr.mxu0 0.0
      %1213 = vmatpush2.msra.mxu0 0.0
      %1214 = vmatprep.subr.mxu0 0.0
      %1215 = vmatpush2.msra.mxu0 0.0
      %1216 = vmatprep.subr.mxu0 0.0
      %1217 = vmatpush2.msra.mxu0 0.0
      %1218 = vmatprep.subr.mxu0 0.0
      %1219 = vmatpush2.msra.mxu0 0.0
      %1220 = vmatprep.subr.mxu0 0.0
      %1221 = vmatpush2.msra.mxu0 0.0
      %1222 = vmatprep.subr.mxu0 0.0
      %1223 = vmatpush2.msra.mxu0 0.0
      %1224 = vmatprep.subr.mxu0 0.0
      %1225 = vmatpush2.msra.mxu0 0.0
      %1226 = vmatprep.subr.mxu0 0.0
      %1227 = vmatpush2.msra.mxu0 0.0
      %1228 = vmatprep.subr.mxu0 0.0
      %1229 = vmatpush2.msra.mxu0 0.0
      %1230 = vmatprep.subr.mxu0 0.0
      %1231 = vmatpush2.msra.mxu0 0.0
      %1232 = vmatprep.subr.mxu0 0.0
      %1233 = vmatpush2.msra.mxu0 0.0
      %1234 = vmatprep.subr.mxu0 0.0
      %1235 = vmatpush2.msra.mxu0 0.0
      %1236 = vmatprep.subr.mxu0 0.0
      %1237 = vmatpush2.msra.mxu0 0.0
      %1238 = vmatprep.subr.mxu0 0.0
      %1239 = vmatpush2.msra.mxu0 0.0
      %1240 = vmatprep.subr.mxu0 0.0
      %1241 = vmatpush2.msra.mxu0 0.0
      %1242 = vmatprep.mubr.f32.mxu0 0.0
      %1243 = vmatmul.mubr.f32.gmra.mxu0 %v1176
      %v1244 = vpop.f32.mrf.mxu0
      %v1245 = vadd.f32 0.0, %v1244
      %v1246 = vpop.f32.mrf.mxu0
      %v1247 = vadd.f32 0.0, %v1246
      %1248 = vdwg.mxu0
      %1249 = vmatprep.subr.mxu0 0.0
      %1250 = vmatpush1.msra.mxu0 0.0
      %1251 = vmatprep.subr.mxu0 0.0
      %1252 = vmatpush1.msra.mxu0 0.0
      %1253 = vmatprep.subr.mxu0 0.0
      %1254 = vmatpush1.msra.mxu0 0.0
      %1255 = vmatprep.subr.mxu0 0.0
      %1256 = vmatpush1.msra.mxu0 0.0
      %1257 = vmatprep.subr.mxu0 0.0
      %1258 = vmatpush1.msra.mxu0 0.0
      %1259 = vmatprep.subr.mxu0 0.0
      %1260 = vmatpush1.msra.mxu0 0.0
      %1261 = vmatprep.subr.mxu0 0.0
      %1262 = vmatpush1.msra.mxu0 0.0
      %1263 = vmatprep.subr.mxu0 0.0
      %1264 = vmatpush1.msra.mxu0 0.0
      %1265 = vmatprep.subr.mxu0 0.0
      %1266 = vmatpush1.msra.mxu0 0.0
      %1267 = vmatprep.subr.mxu0 0.0
      %1268 = vmatpush1.msra.mxu0 0.0
      %1269 = vmatprep.subr.mxu0 0.0
      %1270 = vmatpush1.msra.mxu0 0.0
      %1271 = vmatprep.subr.mxu0 0.0
      %1272 = vmatpush1.msra.mxu0 0.0
      %1273 = vmatprep.subr.mxu0 0.0
      %1274 = vmatpush1.msra.mxu0 0.0
      %1275 = vmatprep.subr.mxu0 0.0
      %1276 = vmatpush1.msra.mxu0 0.0
      %1277 = vmatprep.subr.mxu0 0.0
      %1278 = vmatpush1.msra.mxu0 0.0
      %1279 = vmatprep.subr.mxu0 0.0
      %1280 = vmatpush1.msra.mxu0 %v1169
      %1281 = vmatprep.subr.mxu0 0.0
      %1282 = vmatpush2.msra.mxu0 0.0
      %1283 = vmatprep.subr.mxu0 0.0
      %1284 = vmatpush2.msra.mxu0 0.0
      %1285 = vmatprep.subr.mxu0 0.0
      %1286 = vmatpush2.msra.mxu0 0.0
      %1287 = vmatprep.subr.mxu0 0.0
      %1288 = vmatpush2.msra.mxu0 0.0
      %1289 = vmatprep.subr.mxu0 0.0
      %1290 = vmatpush2.msra.mxu0 0.0
      %1291 = vmatprep.subr.mxu0 0.0
      %1292 = vmatpush2.msra.mxu0 0.0
      %1293 = vmatprep.subr.mxu0 0.0
      %1294 = vmatpush2.msra.mxu0 0.0
      %1295 = vmatprep.subr.mxu0 0.0
      %1296 = vmatpush2.msra.mxu0 0.0
      %1297 = vmatprep.subr.mxu0 0.0
      %1298 = vmatpush2.msra.mxu0 0.0
      %1299 = vmatprep.subr.mxu0 0.0
      %1300 = vmatpush2.msra.mxu0 0.0
      %1301 = vmatprep.subr.mxu0 0.0
      %1302 = vmatpush2.msra.mxu0 0.0
      %1303 = vmatprep.subr.mxu0 0.0
      %1304 = vmatpush2.msra.mxu0 0.0
      %1305 = vmatprep.subr.mxu0 0.0
      %1306 = vmatpush2.msra.mxu0 0.0
      %1307 = vmatprep.subr.mxu0 0.0
      %1308 = vmatpush2.msra.mxu0 0.0
      %1309 = vmatprep.subr.mxu0 0.0
      %1310 = vmatpush2.msra.mxu0 0.0
      %1311 = vmatprep.subr.mxu0 0.0
      %1312 = vmatpush2.msra.mxu0 0.0
      %1313 = vmatprep.mubr.f32.mxu0 0.0
      %1314 = vmatmul.mubr.f32.gmra.mxu0 %v1176
      %v1315 = vpop.f32.mrf.mxu0
      %v1316 = vadd.f32 0.0, %v1315
      %v1317 = vpop.f32.mrf.mxu0
      %1318 = vdwg.mxu0
      %v1319 = vadd.f32 %v1159, %v1245
      %v1320 = vadd.f32 %v1160, %v1247
      %v1321 = vadd.f32 %v1161, %v1316
      %1322 = vrot.lane.b32.xlu0 %v533, 88
      %v1323 = vpop.permute.xlu0 %1322
      %1324 = vrot.lane.b32.xlu0 %v534, 108
      %v1325 = vpop.permute.xlu0 %1324
      %1326 = vrot.lane.b32.xlu0 %v535, 108
      %v1327 = vpop.permute.xlu0 %1326
      %1328 = vrot.lane.b32.xlu0 %v536, 108
      %v1329 = vpop.permute.xlu0 %1328
      %vm1330 = vcmask 883712
      %v1331 = vsel %vm1330, %v1325, %v1327
      %v1332 = vsel %vm1330, %v1327, %v1329
      %v1336 = vsel %vm555, %v1323, 0
      %1338 = vmatprep.subr.mxu0 0.0
      %1339 = vmatpush1.msra.mxu0 0.0
      %1340 = vmatprep.subr.mxu0 0.0
      %1341 = vmatpush1.msra.mxu0 0.0
      %1342 = vmatprep.subr.mxu0 0.0
      %1343 = vmatpush1.msra.mxu0 0.0
      %1344 = vmatprep.subr.mxu0 0.0
      %1345 = vmatpush1.msra.mxu0 0.0
      %1346 = vmatprep.subr.mxu0 0.0
      %1347 = vmatpush1.msra.mxu0 0.0
      %1348 = vmatprep.subr.mxu0 0.0
      %1349 = vmatpush1.msra.mxu0 0.0
      %1350 = vmatprep.subr.mxu0 0.0
      %1351 = vmatpush1.msra.mxu0 0.0
      %1352 = vmatprep.subr.mxu0 0.0
      %1353 = vmatpush1.msra.mxu0 0.0
      %1354 = vmatprep.subr.mxu0 0.0
      %1355 = vmatpush1.msra.mxu0 0.0
      %1356 = vmatprep.subr.mxu0 0.0
      %1357 = vmatpush1.msra.mxu0 0.0
      %1358 = vmatprep.subr.mxu0 0.0
      %1359 = vmatpush1.msra.mxu0 0.0
      %1360 = vmatprep.subr.mxu0 0.0
      %1361 = vmatpush1.msra.mxu0 0.0
      %1362 = vmatprep.subr.mxu0 0.0
      %1363 = vmatpush1.msra.mxu0 0.0
      %1364 = vmatprep.subr.mxu0 0.0
      %1365 = vmatpush1.msra.mxu0 0.0
      %1366 = vmatprep.subr.mxu0 0.0
      %1367 = vmatpush1.msra.mxu0 0.0
      %1368 = vmatprep.subr.mxu0 %v1332
      %1369 = vmatpush1.msra.mxu0 %v1331
      %1370 = vmatprep.subr.mxu0 0.0
      %1371 = vmatpush2.msra.mxu0 0.0
      %1372 = vmatprep.subr.mxu0 0.0
      %1373 = vmatpush2.msra.mxu0 0.0
      %1374 = vmatprep.subr.mxu0 0.0
      %1375 = vmatpush2.msra.mxu0 0.0
      %1376 = vmatprep.subr.mxu0 0.0
      %1377 = vmatpush2.msra.mxu0 0.0
      %1378 = vmatprep.subr.mxu0 0.0
      %1379 = vmatpush2.msra.mxu0 0.0
      %1380 = vmatprep.subr.mxu0 0.0
      %1381 = vmatpush2.msra.mxu0 0.0
      %1382 = vmatprep.subr.mxu0 0.0
      %1383 = vmatpush2.msra.mxu0 0.0
      %1384 = vmatprep.subr.mxu0 0.0
      %1385 = vmatpush2.msra.mxu0 0.0
      %1386 = vmatprep.subr.mxu0 0.0
      %1387 = vmatpush2.msra.mxu0 0.0
      %1388 = vmatprep.subr.mxu0 0.0
      %1389 = vmatpush2.msra.mxu0 0.0
      %1390 = vmatprep.subr.mxu0 0.0
      %1391 = vmatpush2.msra.mxu0 0.0
      %1392 = vmatprep.subr.mxu0 0.0
      %1393 = vmatpush2.msra.mxu0 0.0
      %1394 = vmatprep.subr.mxu0 0.0
      %1395 = vmatpush2.msra.mxu0 0.0
      %1396 = vmatprep.subr.mxu0 0.0
      %1397 = vmatpush2.msra.mxu0 0.0
      %1398 = vmatprep.subr.mxu0 0.0
      %1399 = vmatpush2.msra.mxu0 0.0
      %1400 = vmatprep.subr.mxu0 0.0
      %1401 = vmatpush2.msra.mxu0 0.0
      %1402 = vmatprep.mubr.f32.mxu0 0.0
      %1403 = vmatmul.mubr.f32.gmra.mxu0 %v1336
      %v1404 = vpop.f32.mrf.mxu0
      %v1405 = vadd.f32 0.0, %v1404
      %v1406 = vpop.f32.mrf.mxu0
      %v1407 = vadd.f32 0.0, %v1406
      %1408 = vdwg.mxu0
      %1409 = vmatprep.subr.mxu0 0.0
      %1410 = vmatpush1.msra.mxu0 0.0
      %1411 = vmatprep.subr.mxu0 0.0
      %1412 = vmatpush1.msra.mxu0 0.0
      %1413 = vmatprep.subr.mxu0 0.0
      %1414 = vmatpush1.msra.mxu0 0.0
      %1415 = vmatprep.subr.mxu0 0.0
      %1416 = vmatpush1.msra.mxu0 0.0
      %1417 = vmatprep.subr.mxu0 0.0
      %1418 = vmatpush1.msra.mxu0 0.0
      %1419 = vmatprep.subr.mxu0 0.0
      %1420 = vmatpush1.msra.mxu0 0.0
      %1421 = vmatprep.subr.mxu0 0.0
      %1422 = vmatpush1.msra.mxu0 0.0
      %1423 = vmatprep.subr.mxu0 0.0
      %1424 = vmatpush1.msra.mxu0 0.0
      %1425 = vmatprep.subr.mxu0 0.0
      %1426 = vmatpush1.msra.mxu0 0.0
      %1427 = vmatprep.subr.mxu0 0.0
      %1428 = vmatpush1.msra.mxu0 0.0
      %1429 = vmatprep.subr.mxu0 0.0
      %1430 = vmatpush1.msra.mxu0 0.0
      %1431 = vmatprep.subr.mxu0 0.0
      %1432 = vmatpush1.msra.mxu0 0.0
      %1433 = vmatprep.subr.mxu0 0.0
      %1434 = vmatpush1.msra.mxu0 0.0
      %1435 = vmatprep.subr.mxu0 0.0
      %1436 = vmatpush1.msra.mxu0 0.0
      %1437 = vmatprep.subr.mxu0 0.0
      %1438 = vmatpush1.msra.mxu0 0.0
      %1439 = vmatprep.subr.mxu0 0.0
      %1440 = vmatpush1.msra.mxu0 %v1329
      %1441 = vmatprep.subr.mxu0 0.0
      %1442 = vmatpush2.msra.mxu0 0.0
      %1443 = vmatprep.subr.mxu0 0.0
      %1444 = vmatpush2.msra.mxu0 0.0
      %1445 = vmatprep.subr.mxu0 0.0
      %1446 = vmatpush2.msra.mxu0 0.0
      %1447 = vmatprep.subr.mxu0 0.0
      %1448 = vmatpush2.msra.mxu0 0.0
      %1449 = vmatprep.subr.mxu0 0.0
      %1450 = vmatpush2.msra.mxu0 0.0
      %1451 = vmatprep.subr.mxu0 0.0
      %1452 = vmatpush2.msra.mxu0 0.0
      %1453 = vmatprep.subr.mxu0 0.0
      %1454 = vmatpush2.msra.mxu0 0.0
      %1455 = vmatprep.subr.mxu0 0.0
      %1456 = vmatpush2.msra.mxu0 0.0
      %1457 = vmatprep.subr.mxu0 0.0
      %1458 = vmatpush2.msra.mxu0 0.0
      %1459 = vmatprep.subr.mxu0 0.0
      %1460 = vmatpush2.msra.mxu0 0.0
      %1461 = vmatprep.subr.mxu0 0.0
      %1462 = vmatpush2.msra.mxu0 0.0
      %1463 = vmatprep.subr.mxu0 0.0
      %1464 = vmatpush2.msra.mxu0 0.0
      %1465 = vmatprep.subr.mxu0 0.0
      %1466 = vmatpush2.msra.mxu0 0.0
      %1467 = vmatprep.subr.mxu0 0.0
      %1468 = vmatpush2.msra.mxu0 0.0
      %1469 = vmatprep.subr.mxu0 0.0
      %1470 = vmatpush2.msra.mxu0 0.0
      %1471 = vmatprep.subr.mxu0 0.0
      %1472 = vmatpush2.msra.mxu0 0.0
      %1473 = vmatprep.mubr.f32.mxu0 0.0
      %1474 = vmatmul.mubr.f32.gmra.mxu0 %v1336
      %v1475 = vpop.f32.mrf.mxu0
      %v1476 = vadd.f32 0.0, %v1475
      %v1477 = vpop.f32.mrf.mxu0
      %1478 = vdwg.mxu0
      %v1479 = vadd.f32 %v1319, %v1405
      %v1480 = vadd.f32 %v1320, %v1407
      %v1481 = vadd.f32 %v1321, %v1476
      %1482 = vrot.lane.b32.xlu0 %v533, 80
      %v1483 = vpop.permute.xlu0 %1482
      %1484 = vrot.lane.b32.xlu0 %v534, 92
      %v1485 = vpop.permute.xlu0 %1484
      %1486 = vrot.lane.b32.xlu0 %v535, 92
      %v1487 = vpop.permute.xlu0 %1486
      %1488 = vrot.lane.b32.xlu0 %v536, 92
      %v1489 = vpop.permute.xlu0 %1488
      %vm1490 = vcmask 752640
      %v1491 = vsel %vm1490, %v1485, %v1487
      %v1492 = vsel %vm1490, %v1487, %v1489
      %v1496 = vsel %vm555, %v1483, 0
      %1498 = vmatprep.subr.mxu0 0.0
      %1499 = vmatpush1.msra.mxu0 0.0
      %1500 = vmatprep.subr.mxu0 0.0
      %1501 = vmatpush1.msra.mxu0 0.0
      %1502 = vmatprep.subr.mxu0 0.0
      %1503 = vmatpush1.msra.mxu0 0.0
      %1504 = vmatprep.subr.mxu0 0.0
      %1505 = vmatpush1.msra.mxu0 0.0
      %1506 = vmatprep.subr.mxu0 0.0
      %1507 = vmatpush1.msra.mxu0 0.0
      %1508 = vmatprep.subr.mxu0 0.0
      %1509 = vmatpush1.msra.mxu0 0.0
      %1510 = vmatprep.subr.mxu0 0.0
      %1511 = vmatpush1.msra.mxu0 0.0
      %1512 = vmatprep.subr.mxu0 0.0
      %1513 = vmatpush1.msra.mxu0 0.0
      %1514 = vmatprep.subr.mxu0 0.0
      %1515 = vmatpush1.msra.mxu0 0.0
      %1516 = vmatprep.subr.mxu0 0.0
      %1517 = vmatpush1.msra.mxu0 0.0
      %1518 = vmatprep.subr.mxu0 0.0
      %1519 = vmatpush1.msra.mxu0 0.0
      %1520 = vmatprep.subr.mxu0 0.0
      %1521 = vmatpush1.msra.mxu0 0.0
      %1522 = vmatprep.subr.mxu0 0.0
      %1523 = vmatpush1.msra.mxu0 0.0
      %1524 = vmatprep.subr.mxu0 0.0
      %1525 = vmatpush1.msra.mxu0 0.0
      %1526 = vmatprep.subr.mxu0 0.0
      %1527 = vmatpush1.msra.mxu0 0.0
      %1528 = vmatprep.subr.mxu0 %v1492
      %1529 = vmatpush1.msra.mxu0 %v1491
      %1530 = vmatprep.subr.mxu0 0.0
      %1531 = vmatpush2.msra.mxu0 0.0
      %1532 = vmatprep.subr.mxu0 0.0
      %1533 = vmatpush2.msra.mxu0 0.0
      %1534 = vmatprep.subr.mxu0 0.0
      %1535 = vmatpush2.msra.mxu0 0.0
      %1536 = vmatprep.subr.mxu0 0.0
      %1537 = vmatpush2.msra.mxu0 0.0
      %1538 = vmatprep.subr.mxu0 0.0
      %1539 = vmatpush2.msra.mxu0 0.0
      %1540 = vmatprep.subr.mxu0 0.0
      %1541 = vmatpush2.msra.mxu0 0.0
      %1542 = vmatprep.subr.mxu0 0.0
      %1543 = vmatpush2.msra.mxu0 0.0
      %1544 = vmatprep.subr.mxu0 0.0
      %1545 = vmatpush2.msra.mxu0 0.0
      %1546 = vmatprep.subr.mxu0 0.0
      %1547 = vmatpush2.msra.mxu0 0.0
      %1548 = vmatprep.subr.mxu0 0.0
      %1549 = vmatpush2.msra.mxu0 0.0
      %1550 = vmatprep.subr.mxu0 0.0
      %1551 = vmatpush2.msra.mxu0 0.0
      %1552 = vmatprep.subr.mxu0 0.0
      %1553 = vmatpush2.msra.mxu0 0.0
      %1554 = vmatprep.subr.mxu0 0.0
      %1555 = vmatpush2.msra.mxu0 0.0
      %1556 = vmatprep.subr.mxu0 0.0
      %1557 = vmatpush2.msra.mxu0 0.0
      %1558 = vmatprep.subr.mxu0 0.0
      %1559 = vmatpush2.msra.mxu0 0.0
      %1560 = vmatprep.subr.mxu0 0.0
      %1561 = vmatpush2.msra.mxu0 0.0
      %1562 = vmatprep.mubr.f32.mxu0 0.0
      %1563 = vmatmul.mubr.f32.gmra.mxu0 %v1496
      %v1564 = vpop.f32.mrf.mxu0
      %v1565 = vadd.f32 0.0, %v1564
      %v1566 = vpop.f32.mrf.mxu0
      %v1567 = vadd.f32 0.0, %v1566
      %1568 = vdwg.mxu0
      %1569 = vmatprep.subr.mxu0 0.0
      %1570 = vmatpush1.msra.mxu0 0.0
      %1571 = vmatprep.subr.mxu0 0.0
      %1572 = vmatpush1.msra.mxu0 0.0
      %1573 = vmatprep.subr.mxu0 0.0
      %1574 = vmatpush1.msra.mxu0 0.0
      %1575 = vmatprep.subr.mxu0 0.0
      %1576 = vmatpush1.msra.mxu0 0.0
      %1577 = vmatprep.subr.mxu0 0.0
      %1578 = vmatpush1.msra.mxu0 0.0
      %1579 = vmatprep.subr.mxu0 0.0
      %1580 = vmatpush1.msra.mxu0 0.0
      %1581 = vmatprep.subr.mxu0 0.0
      %1582 = vmatpush1.msra.mxu0 0.0
      %1583 = vmatprep.subr.mxu0 0.0
      %1584 = vmatpush1.msra.mxu0 0.0
      %1585 = vmatprep.subr.mxu0 0.0
      %1586 = vmatpush1.msra.mxu0 0.0
      %1587 = vmatprep.subr.mxu0 0.0
      %1588 = vmatpush1.msra.mxu0 0.0
      %1589 = vmatprep.subr.mxu0 0.0
      %1590 = vmatpush1.msra.mxu0 0.0
      %1591 = vmatprep.subr.mxu0 0.0
      %1592 = vmatpush1.msra.mxu0 0.0
      %1593 = vmatprep.subr.mxu0 0.0
      %1594 = vmatpush1.msra.mxu0 0.0
      %1595 = vmatprep.subr.mxu0 0.0
      %1596 = vmatpush1.msra.mxu0 0.0
      %1597 = vmatprep.subr.mxu0 0.0
      %1598 = vmatpush1.msra.mxu0 0.0
      %1599 = vmatprep.subr.mxu0 0.0
      %1600 = vmatpush1.msra.mxu0 %v1489
      %1601 = vmatprep.subr.mxu0 0.0
      %1602 = vmatpush2.msra.mxu0 0.0
      %1603 = vmatprep.subr.mxu0 0.0
      %1604 = vmatpush2.msra.mxu0 0.0
      %1605 = vmatprep.subr.mxu0 0.0
      %1606 = vmatpush2.msra.mxu0 0.0
      %1607 = vmatprep.subr.mxu0 0.0
      %1608 = vmatpush2.msra.mxu0 0.0
      %1609 = vmatprep.subr.mxu0 0.0
      %1610 = vmatpush2.msra.mxu0 0.0
      %1611 = vmatprep.subr.mxu0 0.0
      %1612 = vmatpush2.msra.mxu0 0.0
      %1613 = vmatprep.subr.mxu0 0.0
      %1614 = vmatpush2.msra.mxu0 0.0
      %1615 = vmatprep.subr.mxu0 0.0
      %1616 = vmatpush2.msra.mxu0 0.0
      %1617 = vmatprep.subr.mxu0 0.0
      %1618 = vmatpush2.msra.mxu0 0.0
      %1619 = vmatprep.subr.mxu0 0.0
      %1620 = vmatpush2.msra.mxu0 0.0
      %1621 = vmatprep.subr.mxu0 0.0
      %1622 = vmatpush2.msra.mxu0 0.0
      %1623 = vmatprep.subr.mxu0 0.0
      %1624 = vmatpush2.msra.mxu0 0.0
      %1625 = vmatprep.subr.mxu0 0.0
      %1626 = vmatpush2.msra.mxu0 0.0
      %1627 = vmatprep.subr.mxu0 0.0
      %1628 = vmatpush2.msra.mxu0 0.0
      %1629 = vmatprep.subr.mxu0 0.0
      %1630 = vmatpush2.msra.mxu0 0.0
      %1631 = vmatprep.subr.mxu0 0.0
      %1632 = vmatpush2.msra.mxu0 0.0
      %1633 = vmatprep.mubr.f32.mxu0 0.0
      %1634 = vmatmul.mubr.f32.gmra.mxu0 %v1496
      %v1635 = vpop.f32.mrf.mxu0
      %v1636 = vadd.f32 0.0, %v1635
      %v1637 = vpop.f32.mrf.mxu0
      %1638 = vdwg.mxu0
      %v1639 = vadd.f32 %v1479, %v1565
      %v1640 = vadd.f32 %v1480, %v1567
      %v1641 = vadd.f32 %v1481, %v1636
      %1642 = vrot.lane.b32.xlu0 %v533, 72
      %v1643 = vpop.permute.xlu0 %1642
      %1644 = vrot.lane.b32.xlu0 %v534, 91
      %v1645 = vpop.permute.xlu0 %1644
      %1646 = vrot.lane.b32.xlu0 %v535, 91
      %v1647 = vpop.permute.xlu0 %1646
      %1648 = vrot.lane.b32.xlu0 %v536, 91
      %v1649 = vpop.permute.xlu0 %1648
      %vm1650 = vcmask 744448
      %v1651 = vsel %vm1650, %v1645, %v1647
      %v1652 = vsel %vm1650, %v1647, %v1649
      %v1656 = vsel %vm555, %v1643, 0
      %1658 = vmatprep.subr.mxu0 0.0
      %1659 = vmatpush1.msra.mxu0 0.0
      %1660 = vmatprep.subr.mxu0 0.0
      %1661 = vmatpush1.msra.mxu0 0.0
      %1662 = vmatprep.subr.mxu0 0.0
      %1663 = vmatpush1.msra.mxu0 0.0
      %1664 = vmatprep.subr.mxu0 0.0
      %1665 = vmatpush1.msra.mxu0 0.0
      %1666 = vmatprep.subr.mxu0 0.0
      %1667 = vmatpush1.msra.mxu0 0.0
      %1668 = vmatprep.subr.mxu0 0.0
      %1669 = vmatpush1.msra.mxu0 0.0
      %1670 = vmatprep.subr.mxu0 0.0
      %1671 = vmatpush1.msra.mxu0 0.0
      %1672 = vmatprep.subr.mxu0 0.0
      %1673 = vmatpush1.msra.mxu0 0.0
      %1674 = vmatprep.subr.mxu0 0.0
      %1675 = vmatpush1.msra.mxu0 0.0
      %1676 = vmatprep.subr.mxu0 0.0
      %1677 = vmatpush1.msra.mxu0 0.0
      %1678 = vmatprep.subr.mxu0 0.0
      %1679 = vmatpush1.msra.mxu0 0.0
      %1680 = vmatprep.subr.mxu0 0.0
      %1681 = vmatpush1.msra.mxu0 0.0
      %1682 = vmatprep.subr.mxu0 0.0
      %1683 = vmatpush1.msra.mxu0 0.0
      %1684 = vmatprep.subr.mxu0 0.0
      %1685 = vmatpush1.msra.mxu0 0.0
      %1686 = vmatprep.subr.mxu0 0.0
      %1687 = vmatpush1.msra.mxu0 0.0
      %1688 = vmatprep.subr.mxu0 %v1652
      %1689 = vmatpush1.msra.mxu0 %v1651
      %1690 = vmatprep.subr.mxu0 0.0
      %1691 = vmatpush2.msra.mxu0 0.0
      %1692 = vmatprep.subr.mxu0 0.0
      %1693 = vmatpush2.msra.mxu0 0.0
      %1694 = vmatprep.subr.mxu0 0.0
      %1695 = vmatpush2.msra.mxu0 0.0
      %1696 = vmatprep.subr.mxu0 0.0
      %1697 = vmatpush2.msra.mxu0 0.0
      %1698 = vmatprep.subr.mxu0 0.0
      %1699 = vmatpush2.msra.mxu0 0.0
      %1700 = vmatprep.subr.mxu0 0.0
      %1701 = vmatpush2.msra.mxu0 0.0
      %1702 = vmatprep.subr.mxu0 0.0
      %1703 = vmatpush2.msra.mxu0 0.0
      %1704 = vmatprep.subr.mxu0 0.0
      %1705 = vmatpush2.msra.mxu0 0.0
      %1706 = vmatprep.subr.mxu0 0.0
      %1707 = vmatpush2.msra.mxu0 0.0
      %1708 = vmatprep.subr.mxu0 0.0
      %1709 = vmatpush2.msra.mxu0 0.0
      %1710 = vmatprep.subr.mxu0 0.0
      %1711 = vmatpush2.msra.mxu0 0.0
      %1712 = vmatprep.subr.mxu0 0.0
      %1713 = vmatpush2.msra.mxu0 0.0
      %1714 = vmatprep.subr.mxu0 0.0
      %1715 = vmatpush2.msra.mxu0 0.0
      %1716 = vmatprep.subr.mxu0 0.0
      %1717 = vmatpush2.msra.mxu0 0.0
      %1718 = vmatprep.subr.mxu0 0.0
      %1719 = vmatpush2.msra.mxu0 0.0
      %1720 = vmatprep.subr.mxu0 0.0
      %1721 = vmatpush2.msra.mxu0 0.0
      %1722 = vmatprep.mubr.f32.mxu0 0.0
      %1723 = vmatmul.mubr.f32.gmra.mxu0 %v1656
      %v1724 = vpop.f32.mrf.mxu0
      %v1725 = vadd.f32 0.0, %v1724
      %v1726 = vpop.f32.mrf.mxu0
      %v1727 = vadd.f32 0.0, %v1726
      %1728 = vdwg.mxu0
      %1729 = vmatprep.subr.mxu0 0.0
      %1730 = vmatpush1.msra.mxu0 0.0
      %1731 = vmatprep.subr.mxu0 0.0
      %1732 = vmatpush1.msra.mxu0 0.0
      %1733 = vmatprep.subr.mxu0 0.0
      %1734 = vmatpush1.msra.mxu0 0.0
      %1735 = vmatprep.subr.mxu0 0.0
      %1736 = vmatpush1.msra.mxu0 0.0
      %1737 = vmatprep.subr.mxu0 0.0
      %1738 = vmatpush1.msra.mxu0 0.0
      %1739 = vmatprep.subr.mxu0 0.0
      %1740 = vmatpush1.msra.mxu0 0.0
      %1741 = vmatprep.subr.mxu0 0.0
      %1742 = vmatpush1.msra.mxu0 0.0
      %1743 = vmatprep.subr.mxu0 0.0
      %1744 = vmatpush1.msra.mxu0 0.0
      %1745 = vmatprep.subr.mxu0 0.0
      %1746 = vmatpush1.msra.mxu0 0.0
      %1747 = vmatprep.subr.mxu0 0.0
      %1748 = vmatpush1.msra.mxu0 0.0
      %1749 = vmatprep.subr.mxu0 0.0
      %1750 = vmatpush1.msra.mxu0 0.0
      %1751 = vmatprep.subr.mxu0 0.0
      %1752 = vmatpush1.msra.mxu0 0.0
      %1753 = vmatprep.subr.mxu0 0.0
      %1754 = vmatpush1.msra.mxu0 0.0
      %1755 = vmatprep.subr.mxu0 0.0
      %1756 = vmatpush1.msra.mxu0 0.0
      %1757 = vmatprep.subr.mxu0 0.0
      %1758 = vmatpush1.msra.mxu0 0.0
      %1759 = vmatprep.subr.mxu0 0.0
      %1760 = vmatpush1.msra.mxu0 %v1649
      %1761 = vmatprep.subr.mxu0 0.0
      %1762 = vmatpush2.msra.mxu0 0.0
      %1763 = vmatprep.subr.mxu0 0.0
      %1764 = vmatpush2.msra.mxu0 0.0
      %1765 = vmatprep.subr.mxu0 0.0
      %1766 = vmatpush2.msra.mxu0 0.0
      %1767 = vmatprep.subr.mxu0 0.0
      %1768 = vmatpush2.msra.mxu0 0.0
      %1769 = vmatprep.subr.mxu0 0.0
      %1770 = vmatpush2.msra.mxu0 0.0
      %1771 = vmatprep.subr.mxu0 0.0
      %1772 = vmatpush2.msra.mxu0 0.0
      %1773 = vmatprep.subr.mxu0 0.0
      %1774 = vmatpush2.msra.mxu0 0.0
      %1775 = vmatprep.subr.mxu0 0.0
      %1776 = vmatpush2.msra.mxu0 0.0
      %1777 = vmatprep.subr.mxu0 0.0
      %1778 = vmatpush2.msra.mxu0 0.0
      %1779 = vmatprep.subr.mxu0 0.0
      %1780 = vmatpush2.msra.mxu0 0.0
      %1781 = vmatprep.subr.mxu0 0.0
      %1782 = vmatpush2.msra.mxu0 0.0
      %1783 = vmatprep.subr.mxu0 0.0
      %1784 = vmatpush2.msra.mxu0 0.0
      %1785 = vmatprep.subr.mxu0 0.0
      %1786 = vmatpush2.msra.mxu0 0.0
      %1787 = vmatprep.subr.mxu0 0.0
      %1788 = vmatpush2.msra.mxu0 0.0
      %1789 = vmatprep.subr.mxu0 0.0
      %1790 = vmatpush2.msra.mxu0 0.0
      %1791 = vmatprep.subr.mxu0 0.0
      %1792 = vmatpush2.msra.mxu0 0.0
      %1793 = vmatprep.mubr.f32.mxu0 0.0
      %1794 = vmatmul.mubr.f32.gmra.mxu0 %v1656
      %v1795 = vpop.f32.mrf.mxu0
      %v1796 = vadd.f32 0.0, %v1795
      %v1797 = vpop.f32.mrf.mxu0
      %1798 = vdwg.mxu0
      %v1799 = vadd.f32 %v1639, %v1725
      %v1800 = vadd.f32 %v1640, %v1727
      %v1801 = vadd.f32 %v1641, %v1796
      %1802 = vrot.lane.b32.xlu0 %v533, 64
      %v1803 = vpop.permute.xlu0 %1802
      %1804 = vrot.lane.b32.xlu0 %v534, 90
      %v1805 = vpop.permute.xlu0 %1804
      %1806 = vrot.lane.b32.xlu0 %v535, 90
      %v1807 = vpop.permute.xlu0 %1806
      %1808 = vrot.lane.b32.xlu0 %v536, 90
      %v1809 = vpop.permute.xlu0 %1808
      %vm1810 = vcmask 736256
      %v1811 = vsel %vm1810, %v1805, %v1807
      %v1812 = vsel %vm1810, %v1807, %v1809
      %v1816 = vsel %vm555, %v1803, 0
      %1818 = vmatprep.subr.mxu0 0.0
      %1819 = vmatpush1.msra.mxu0 0.0
      %1820 = vmatprep.subr.mxu0 0.0
      %1821 = vmatpush1.msra.mxu0 0.0
      %1822 = vmatprep.subr.mxu0 0.0
      %1823 = vmatpush1.msra.mxu0 0.0
      %1824 = vmatprep.subr.mxu0 0.0
      %1825 = vmatpush1.msra.mxu0 0.0
      %1826 = vmatprep.subr.mxu0 0.0
      %1827 = vmatpush1.msra.mxu0 0.0
      %1828 = vmatprep.subr.mxu0 0.0
      %1829 = vmatpush1.msra.mxu0 0.0
      %1830 = vmatprep.subr.mxu0 0.0
      %1831 = vmatpush1.msra.mxu0 0.0
      %1832 = vmatprep.subr.mxu0 0.0
      %1833 = vmatpush1.msra.mxu0 0.0
      %1834 = vmatprep.subr.mxu0 0.0
      %1835 = vmatpush1.msra.mxu0 0.0
      %1836 = vmatprep.subr.mxu0 0.0
      %1837 = vmatpush1.msra.mxu0 0.0
      %1838 = vmatprep.subr.mxu0 0.0
      %1839 = vmatpush1.msra.mxu0 0.0
      %1840 = vmatprep.subr.mxu0 0.0
      %1841 = vmatpush1.msra.mxu0 0.0
      %1842 = vmatprep.subr.mxu0 0.0
      %1843 = vmatpush1.msra.mxu0 0.0
      %1844 = vmatprep.subr.mxu0 0.0
      %1845 = vmatpush1.msra.mxu0 0.0
      %1846 = vmatprep.subr.mxu0 0.0
      %1847 = vmatpush1.msra.mxu0 0.0
      %1848 = vmatprep.subr.mxu0 %v1812
      %1849 = vmatpush1.msra.mxu0 %v1811
      %1850 = vmatprep.subr.mxu0 0.0
      %1851 = vmatpush2.msra.mxu0 0.0
      %1852 = vmatprep.subr.mxu0 0.0
      %1853 = vmatpush2.msra.mxu0 0.0
      %1854 = vmatprep.subr.mxu0 0.0
      %1855 = vmatpush2.msra.mxu0 0.0
      %1856 = vmatprep.subr.mxu0 0.0
      %1857 = vmatpush2.msra.mxu0 0.0
      %1858 = vmatprep.subr.mxu0 0.0
      %1859 = vmatpush2.msra.mxu0 0.0
      %1860 = vmatprep.subr.mxu0 0.0
      %1861 = vmatpush2.msra.mxu0 0.0
      %1862 = vmatprep.subr.mxu0 0.0
      %1863 = vmatpush2.msra.mxu0 0.0
      %1864 = vmatprep.subr.mxu0 0.0
      %1865 = vmatpush2.msra.mxu0 0.0
      %1866 = vmatprep.subr.mxu0 0.0
      %1867 = vmatpush2.msra.mxu0 0.0
      %1868 = vmatprep.subr.mxu0 0.0
      %1869 = vmatpush2.msra.mxu0 0.0
      %1870 = vmatprep.subr.mxu0 0.0
      %1871 = vmatpush2.msra.mxu0 0.0
      %1872 = vmatprep.subr.mxu0 0.0
      %1873 = vmatpush2.msra.mxu0 0.0
      %1874 = vmatprep.subr.mxu0 0.0
      %1875 = vmatpush2.msra.mxu0 0.0
      %1876 = vmatprep.subr.mxu0 0.0
      %1877 = vmatpush2.msra.mxu0 0.0
      %1878 = vmatprep.subr.mxu0 0.0
      %1879 = vmatpush2.msra.mxu0 0.0
      %1880 = vmatprep.subr.mxu0 0.0
      %1881 = vmatpush2.msra.mxu0 0.0
      %1882 = vmatprep.mubr.f32.mxu0 0.0
      %1883 = vmatmul.mubr.f32.gmra.mxu0 %v1816
      %v1884 = vpop.f32.mrf.mxu0
      %v1885 = vadd.f32 0.0, %v1884
      %v1886 = vpop.f32.mrf.mxu0
      %v1887 = vadd.f32 0.0, %v1886
      %1888 = vdwg.mxu0
      %1889 = vmatprep.subr.mxu0 0.0
      %1890 = vmatpush1.msra.mxu0 0.0
      %1891 = vmatprep.subr.mxu0 0.0
      %1892 = vmatpush1.msra.mxu0 0.0
      %1893 = vmatprep.subr.mxu0 0.0
      %1894 = vmatpush1.msra.mxu0 0.0
      %1895 = vmatprep.subr.mxu0 0.0
      %1896 = vmatpush1.msra.mxu0 0.0
      %1897 = vmatprep.subr.mxu0 0.0
      %1898 = vmatpush1.msra.mxu0 0.0
      %1899 = vmatprep.subr.mxu0 0.0
      %1900 = vmatpush1.msra.mxu0 0.0
      %1901 = vmatprep.subr.mxu0 0.0
      %1902 = vmatpush1.msra.mxu0 0.0
      %1903 = vmatprep.subr.mxu0 0.0
      %1904 = vmatpush1.msra.mxu0 0.0
      %1905 = vmatprep.subr.mxu0 0.0
      %1906 = vmatpush1.msra.mxu0 0.0
      %1907 = vmatprep.subr.mxu0 0.0
      %1908 = vmatpush1.msra.mxu0 0.0
      %1909 = vmatprep.subr.mxu0 0.0
      %1910 = vmatpush1.msra.mxu0 0.0
      %1911 = vmatprep.subr.mxu0 0.0
      %1912 = vmatpush1.msra.mxu0 0.0
      %1913 = vmatprep.subr.mxu0 0.0
      %1914 = vmatpush1.msra.mxu0 0.0
      %1915 = vmatprep.subr.mxu0 0.0
      %1916 = vmatpush1.msra.mxu0 0.0
      %1917 = vmatprep.subr.mxu0 0.0
      %1918 = vmatpush1.msra.mxu0 0.0
      %1919 = vmatprep.subr.mxu0 0.0
      %1920 = vmatpush1.msra.mxu0 %v1809
      %1921 = vmatprep.subr.mxu0 0.0
      %1922 = vmatpush2.msra.mxu0 0.0
      %1923 = vmatprep.subr.mxu0 0.0
      %1924 = vmatpush2.msra.mxu0 0.0
      %1925 = vmatprep.subr.mxu0 0.0
      %1926 = vmatpush2.msra.mxu0 0.0
      %1927 = vmatprep.subr.mxu0 0.0
      %1928 = vmatpush2.msra.mxu0 0.0
      %1929 = vmatprep.subr.mxu0 0.0
      %1930 = vmatpush2.msra.mxu0 0.0
      %1931 = vmatprep.subr.mxu0 0.0
      %1932 = vmatpush2.msra.mxu0 0.0
      %1933 = vmatprep.subr.mxu0 0.0
      %1934 = vmatpush2.msra.mxu0 0.0
      %1935 = vmatprep.subr.mxu0 0.0
      %1936 = vmatpush2.msra.mxu0 0.0
      %1937 = vmatprep.subr.mxu0 0.0
      %1938 = vmatpush2.msra.mxu0 0.0
      %1939 = vmatprep.subr.mxu0 0.0
      %1940 = vmatpush2.msra.mxu0 0.0
      %1941 = vmatprep.subr.mxu0 0.0
      %1942 = vmatpush2.msra.mxu0 0.0
      %1943 = vmatprep.subr.mxu0 0.0
      %1944 = vmatpush2.msra.mxu0 0.0
      %1945 = vmatprep.subr.mxu0 0.0
      %1946 = vmatpush2.msra.mxu0 0.0
      %1947 = vmatprep.subr.mxu0 0.0
      %1948 = vmatpush2.msra.mxu0 0.0
      %1949 = vmatprep.subr.mxu0 0.0
      %1950 = vmatpush2.msra.mxu0 0.0
      %1951 = vmatprep.subr.mxu0 0.0
      %1952 = vmatpush2.msra.mxu0 0.0
      %1953 = vmatprep.mubr.f32.mxu0 0.0
      %1954 = vmatmul.mubr.f32.gmra.mxu0 %v1816
      %v1955 = vpop.f32.mrf.mxu0
      %v1956 = vadd.f32 0.0, %v1955
      %v1957 = vpop.f32.mrf.mxu0
      %1958 = vdwg.mxu0
      %v1959 = vadd.f32 %v1799, %v1885
      %v1960 = vadd.f32 %v1800, %v1887
      %v1961 = vadd.f32 %v1801, %v1956
      %v1962 = vld [vmem:[%s4] sm:$0xff]
      %1964 = vset.pattern.permute.xlu0 0
      %1965 = vperm.xlu0 %1964, %v1962
      %v1966 = vpop.permute.xlu0 %1965
      %v1968 = vmul.f32 %v1959, %v1966
      %v1969 = vmul.f32 %v1960, %v1966
      %v1970 = vmul.f32 %v1961, %v1966
      %v1971 = vld [vmem:[%s5] sm:$0xff]
      %1973 = vset.pattern.permute.xlu0 0
      %1974 = vperm.xlu0 %1973, %v1971
      %v1975 = vpop.permute.xlu0 %1974
      %v1977 = vadd.f32 %v1968, %v1975
      %v1978 = vadd.f32 %v1969, %v1975
      %v1979 = vadd.f32 %v1970, %v1975
      %v1980 = vmax.f32 %v1977, 0.0
      %v1981 = vmax.f32 %v1978, 0.0
      %v1982 = vmax.f32 %v1979, 0.0
      %v1984 = vlaneseq
      %v1985 = vshrl.u32 %v1984, 7
      %v1986 = vsub.s32 0, %v1985
      %v1987 = vrot.slane %v481, %v1986
      %v1988 = vlaneseq
      %v1989 = vshrl.u32 %v1988, 7
      %v1990 = vsub.s32 1, %v1989
      %v1991 = vrot.slane %v481, %v1990
      %v1992 = vlaneseq
      %v1993 = vshrl.u32 %v1992, 7
      %v1994 = vsub.s32 2, %v1993
      %v1995 = vrot.slane %v481, %v1994
      %v1999 = vmul.f32 %v1980, %v1987
      %v2000 = vmul.f32 %v1981, %v1991
      %v2001 = vmul.f32 %v1982, %v1995
      %2005 = vrot.lane.b32.xlu0 %v1999, 19
      %v2006 = vpop.permute.xlu0 %2005
      %2007 = vrot.lane.b32.xlu0 %v2000, 19
      %v2008 = vpop.permute.xlu0 %2007
      %2009 = vrot.lane.b32.xlu0 %v2001, 19
      %v2010 = vpop.permute.xlu0 %2009
      %v2011 = vsel %vm482, %v2006, %v2008
      %v2012 = vsel %vm482, %v2008, %v2010
      %vm2016 = vcmask 1047704
      %2017 = vst.msk [vmem:[#allocation3] sm:$0xff] %vm2016, %v2006
      %2018 = vst [vmem:[#allocation3 + $0x8] sm:$0xff] %v2011
      %vm2019 = vcmask 416768
      %2020 = vst.msk [vmem:[#allocation3 + $0x10] sm:$0xff] %vm2019, %v2012
      %v2021 = vld [vmem:[%s6] sm:$0xff]
      %v2022 = vld [vmem:[#allocation3] sm:$0xff]
      %v2023 = vld [vmem:[#allocation3 + $0x8] sm:$0xff]
      %v2024 = vld [vmem:[#allocation3 + $0x10] sm:$0xff]
      %2026 = vrot.lane.b32.xlu0 %v2021, 120
      %v2027 = vpop.permute.xlu0 %2026
      %2031 = vrot.lane.b32.xlu0 %v2022, 127
      %v2032 = vpop.permute.xlu0 %2031
      %2033 = vrot.lane.b32.xlu0 %v2023, 127
      %v2034 = vpop.permute.xlu0 %2033
      %2035 = vrot.lane.b32.xlu0 %v2024, 127
      %v2036 = vpop.permute.xlu0 %2035
      %v2037 = vsel %vm549, %v2032, %v2034
      %v2038 = vsel %vm549, %v2034, %v2036
      %v2042 = vsel %vm555, %v2027, 0
      %2044 = vmatprep.subr.mxu0 0.0
      %2045 = vmatpush1.msra.mxu0 0.0
      %2046 = vmatprep.subr.mxu0 0.0
      %2047 = vmatpush1.msra.mxu0 0.0
      %2048 = vmatprep.subr.mxu0 0.0
      %2049 = vmatpush1.msra.mxu0 0.0
      %2050 = vmatprep.subr.mxu0 0.0
      %2051 = vmatpush1.msra.mxu0 0.0
      %2052 = vmatprep.subr.mxu0 0.0
      %2053 = vmatpush1.msra.mxu0 0.0
      %2054 = vmatprep.subr.mxu0 0.0
      %2055 = vmatpush1.msra.mxu0 0.0
      %2056 = vmatprep.subr.mxu0 0.0
      %2057 = vmatpush1.msra.mxu0 0.0
      %2058 = vmatprep.subr.mxu0 0.0
      %2059 = vmatpush1.msra.mxu0 0.0
      %2060 = vmatprep.subr.mxu0 0.0
      %2061 = vmatpush1.msra.mxu0 0.0
      %2062 = vmatprep.subr.mxu0 0.0
      %2063 = vmatpush1.msra.mxu0 0.0
      %2064 = vmatprep.subr.mxu0 0.0
      %2065 = vmatpush1.msra.mxu0 0.0
      %2066 = vmatprep.subr.mxu0 0.0
      %2067 = vmatpush1.msra.mxu0 0.0
      %2068 = vmatprep.subr.mxu0 0.0
      %2069 = vmatpush1.msra.mxu0 0.0
      %2070 = vmatprep.subr.mxu0 0.0
      %2071 = vmatpush1.msra.mxu0 0.0
      %2072 = vmatprep.subr.mxu0 0.0
      %2073 = vmatpush1.msra.mxu0 0.0
      %2074 = vmatprep.subr.mxu0 %v2038
      %2075 = vmatpush1.msra.mxu0 %v2037
      %2076 = vmatprep.subr.mxu0 0.0
      %2077 = vmatpush2.msra.mxu0 0.0
      %2078 = vmatprep.subr.mxu0 0.0
      %2079 = vmatpush2.msra.mxu0 0.0
      %2080 = vmatprep.subr.mxu0 0.0
      %2081 = vmatpush2.msra.mxu0 0.0
      %2082 = vmatprep.subr.mxu0 0.0
      %2083 = vmatpush2.msra.mxu0 0.0
      %2084 = vmatprep.subr.mxu0 0.0
      %2085 = vmatpush2.msra.mxu0 0.0
      %2086 = vmatprep.subr.mxu0 0.0
      %2087 = vmatpush2.msra.mxu0 0.0
      %2088 = vmatprep.subr.mxu0 0.0
      %2089 = vmatpush2.msra.mxu0 0.0
      %2090 = vmatprep.subr.mxu0 0.0
      %2091 = vmatpush2.msra.mxu0 0.0
      %2092 = vmatprep.subr.mxu0 0.0
      %2093 = vmatpush2.msra.mxu0 0.0
      %2094 = vmatprep.subr.mxu0 0.0
      %2095 = vmatpush2.msra.mxu0 0.0
      %2096 = vmatprep.subr.mxu0 0.0
      %2097 = vmatpush2.msra.mxu0 0.0
      %2098 = vmatprep.subr.mxu0 0.0
      %2099 = vmatpush2.msra.mxu0 0.0
      %2100 = vmatprep.subr.mxu0 0.0
      %2101 = vmatpush2.msra.mxu0 0.0
      %2102 = vmatprep.subr.mxu0 0.0
      %2103 = vmatpush2.msra.mxu0 0.0
      %2104 = vmatprep.subr.mxu0 0.0
      %2105 = vmatpush2.msra.mxu0 0.0
      %2106 = vmatprep.subr.mxu0 0.0
      %2107 = vmatpush2.msra.mxu0 0.0
      %2108 = vmatprep.mubr.f32.mxu0 0.0
      %2109 = vmatmul.mubr.f32.gmra.mxu0 %v2042
      %v2110 = vpop.f32.mrf.mxu0
      %v2111 = vadd.f32 0.0, %v2110
      %v2112 = vpop.f32.mrf.mxu0
      %v2113 = vadd.f32 0.0, %v2112
      %2114 = vdwg.mxu0
      %2115 = vmatprep.subr.mxu0 0.0
      %2116 = vmatpush1.msra.mxu0 0.0
      %2117 = vmatprep.subr.mxu0 0.0
      %2118 = vmatpush1.msra.mxu0 0.0
      %2119 = vmatprep.subr.mxu0 0.0
      %2120 = vmatpush1.msra.mxu0 0.0
      %2121 = vmatprep.subr.mxu0 0.0
      %2122 = vmatpush1.msra.mxu0 0.0
      %2123 = vmatprep.subr.mxu0 0.0
      %2124 = vmatpush1.msra.mxu0 0.0
      %2125 = vmatprep.subr.mxu0 0.0
      %2126 = vmatpush1.msra.mxu0 0.0
      %2127 = vmatprep.subr.mxu0 0.0
      %2128 = vmatpush1.msra.mxu0 0.0
      %2129 = vmatprep.subr.mxu0 0.0
      %2130 = vmatpush1.msra.mxu0 0.0
      %2131 = vmatprep.subr.mxu0 0.0
      %2132 = vmatpush1.msra.mxu0 0.0
      %2133 = vmatprep.subr.mxu0 0.0
      %2134 = vmatpush1.msra.mxu0 0.0
      %2135 = vmatprep.subr.mxu0 0.0
      %2136 = vmatpush1.msra.mxu0 0.0
      %2137 = vmatprep.subr.mxu0 0.0
      %2138 = vmatpush1.msra.mxu0 0.0
      %2139 = vmatprep.subr.mxu0 0.0
      %2140 = vmatpush1.msra.mxu0 0.0
      %2141 = vmatprep.subr.mxu0 0.0
      %2142 = vmatpush1.msra.mxu0 0.0
      %2143 = vmatprep.subr.mxu0 0.0
      %2144 = vmatpush1.msra.mxu0 0.0
      %2145 = vmatprep.subr.mxu0 0.0
      %2146 = vmatpush1.msra.mxu0 %v2036
      %2147 = vmatprep.subr.mxu0 0.0
      %2148 = vmatpush2.msra.mxu0 0.0
      %2149 = vmatprep.subr.mxu0 0.0
      %2150 = vmatpush2.msra.mxu0 0.0
      %2151 = vmatprep.subr.mxu0 0.0
      %2152 = vmatpush2.msra.mxu0 0.0
      %2153 = vmatprep.subr.mxu0 0.0
      %2154 = vmatpush2.msra.mxu0 0.0
      %2155 = vmatprep.subr.mxu0 0.0
      %2156 = vmatpush2.msra.mxu0 0.0
      %2157 = vmatprep.subr.mxu0 0.0
      %2158 = vmatpush2.msra.mxu0 0.0
      %2159 = vmatprep.subr.mxu0 0.0
      %2160 = vmatpush2.msra.mxu0 0.0
      %2161 = vmatprep.subr.mxu0 0.0
      %2162 = vmatpush2.msra.mxu0 0.0
      %2163 = vmatprep.subr.mxu0 0.0
      %2164 = vmatpush2.msra.mxu0 0.0
      %2165 = vmatprep.subr.mxu0 0.0
      %2166 = vmatpush2.msra.mxu0 0.0
      %2167 = vmatprep.subr.mxu0 0.0
      %2168 = vmatpush2.msra.mxu0 0.0
      %2169 = vmatprep.subr.mxu0 0.0
      %2170 = vmatpush2.msra.mxu0 0.0
      %2171 = vmatprep.subr.mxu0 0.0
      %2172 = vmatpush2.msra.mxu0 0.0
      %2173 = vmatprep.subr.mxu0 0.0
      %2174 = vmatpush2.msra.mxu0 0.0
      %2175 = vmatprep.subr.mxu0 0.0
      %2176 = vmatpush2.msra.mxu0 0.0
      %2177 = vmatprep.subr.mxu0 0.0
      %2178 = vmatpush2.msra.mxu0 0.0
      %2179 = vmatprep.mubr.f32.mxu0 0.0
      %2180 = vmatmul.mubr.f32.gmra.mxu0 %v2042
      %v2181 = vpop.f32.mrf.mxu0
      %v2182 = vadd.f32 0.0, %v2181
      %v2183 = vpop.f32.mrf.mxu0
      %2184 = vdwg.mxu0
      %v2185 = vsel %vm555, %v2021, 0
      %2187 = vmatprep.subr.mxu0 0.0
      %2188 = vmatpush1.msra.mxu0 0.0
      %2189 = vmatprep.subr.mxu0 0.0
      %2190 = vmatpush1.msra.mxu0 0.0
      %2191 = vmatprep.subr.mxu0 0.0
      %2192 = vmatpush1.msra.mxu0 0.0
      %2193 = vmatprep.subr.mxu0 0.0
      %2194 = vmatpush1.msra.mxu0 0.0
      %2195 = vmatprep.subr.mxu0 0.0
      %2196 = vmatpush1.msra.mxu0 0.0
      %2197 = vmatprep.subr.mxu0 0.0
      %2198 = vmatpush1.msra.mxu0 0.0
      %2199 = vmatprep.subr.mxu0 0.0
      %2200 = vmatpush1.msra.mxu0 0.0
      %2201 = vmatprep.subr.mxu0 0.0
      %2202 = vmatpush1.msra.mxu0 0.0
      %2203 = vmatprep.subr.mxu0 0.0
      %2204 = vmatpush1.msra.mxu0 0.0
      %2205 = vmatprep.subr.mxu0 0.0
      %2206 = vmatpush1.msra.mxu0 0.0
      %2207 = vmatprep.subr.mxu0 0.0
      %2208 = vmatpush1.msra.mxu0 0.0
      %2209 = vmatprep.subr.mxu0 0.0
      %2210 = vmatpush1.msra.mxu0 0.0
      %2211 = vmatprep.subr.mxu0 0.0
      %2212 = vmatpush1.msra.mxu0 0.0
      %2213 = vmatprep.subr.mxu0 0.0
      %2214 = vmatpush1.msra.mxu0 0.0
      %2215 = vmatprep.subr.mxu0 0.0
      %2216 = vmatpush1.msra.mxu0 0.0
      %2217 = vmatprep.subr.mxu0 %v2023
      %2218 = vmatpush1.msra.mxu0 %v2022
      %2219 = vmatprep.subr.mxu0 0.0
      %2220 = vmatpush2.msra.mxu0 0.0
      %2221 = vmatprep.subr.mxu0 0.0
      %2222 = vmatpush2.msra.mxu0 0.0
      %2223 = vmatprep.subr.mxu0 0.0
      %2224 = vmatpush2.msra.mxu0 0.0
      %2225 = vmatprep.subr.mxu0 0.0
      %2226 = vmatpush2.msra.mxu0 0.0
      %2227 = vmatprep.subr.mxu0 0.0
      %2228 = vmatpush2.msra.mxu0 0.0
      %2229 = vmatprep.subr.mxu0 0.0
      %2230 = vmatpush2.msra.mxu0 0.0
      %2231 = vmatprep.subr.mxu0 0.0
      %2232 = vmatpush2.msra.mxu0 0.0
      %2233 = vmatprep.subr.mxu0 0.0
      %2234 = vmatpush2.msra.mxu0 0.0
      %2235 = vmatprep.subr.mxu0 0.0
      %2236 = vmatpush2.msra.mxu0 0.0
      %2237 = vmatprep.subr.mxu0 0.0
      %2238 = vmatpush2.msra.mxu0 0.0
      %2239 = vmatprep.subr.mxu0 0.0
      %2240 = vmatpush2.msra.mxu0 0.0
      %2241 = vmatprep.subr.mxu0 0.0
      %2242 = vmatpush2.msra.mxu0 0.0
      %2243 = vmatprep.subr.mxu0 0.0
      %2244 = vmatpush2.msra.mxu0 0.0
      %2245 = vmatprep.subr.mxu0 0.0
      %2246 = vmatpush2.msra.mxu0 0.0
      %2247 = vmatprep.subr.mxu0 0.0
      %2248 = vmatpush2.msra.mxu0 0.0
      %2249 = vmatprep.subr.mxu0 0.0
      %2250 = vmatpush2.msra.mxu0 0.0
      %2251 = vmatprep.mubr.f32.mxu0 0.0
      %2252 = vmatmul.mubr.f32.gmra.mxu0 %v2185
      %v2253 = vpop.f32.mrf.mxu0
      %v2254 = vadd.f32 %v2111, %v2253
      %v2255 = vpop.f32.mrf.mxu0
      %v2256 = vadd.f32 %v2113, %v2255
      %2257 = vdwg.mxu0
      %2258 = vmatprep.subr.mxu0 0.0
      %2259 = vmatpush1.msra.mxu0 0.0
      %2260 = vmatprep.subr.mxu0 0.0
      %2261 = vmatpush1.msra.mxu0 0.0
      %2262 = vmatprep.subr.mxu0 0.0
      %2263 = vmatpush1.msra.mxu0 0.0
      %2264 = vmatprep.subr.mxu0 0.0
      %2265 = vmatpush1.msra.mxu0 0.0
      %2266 = vmatprep.subr.mxu0 0.0
      %2267 = vmatpush1.msra.mxu0 0.0
      %2268 = vmatprep.subr.mxu0 0.0
      %2269 = vmatpush1.msra.mxu0 0.0
      %2270 = vmatprep.subr.mxu0 0.0
      %2271 = vmatpush1.msra.mxu0 0.0
      %2272 = vmatprep.subr.mxu0 0.0
      %2273 = vmatpush1.msra.mxu0 0.0
      %2274 = vmatprep.subr.mxu0 0.0
      %2275 = vmatpush1.msra.mxu0 0.0
      %2276 = vmatprep.subr.mxu0 0.0
      %2277 = vmatpush1.msra.mxu0 0.0
      %2278 = vmatprep.subr.mxu0 0.0
      %2279 = vmatpush1.msra.mxu0 0.0
      %2280 = vmatprep.subr.mxu0 0.0
      %2281 = vmatpush1.msra.mxu0 0.0
      %2282 = vmatprep.subr.mxu0 0.0
      %2283 = vmatpush1.msra.mxu0 0.0
      %2284 = vmatprep.subr.mxu0 0.0
      %2285 = vmatpush1.msra.mxu0 0.0
      %2286 = vmatprep.subr.mxu0 0.0
      %2287 = vmatpush1.msra.mxu0 0.0
      %2288 = vmatprep.subr.mxu0 0.0
      %2289 = vmatpush1.msra.mxu0 %v2024
      %2290 = vmatprep.subr.mxu0 0.0
      %2291 = vmatpush2.msra.mxu0 0.0
      %2292 = vmatprep.subr.mxu0 0.0
      %2293 = vmatpush2.msra.mxu0 0.0
      %2294 = vmatprep.subr.mxu0 0.0
      %2295 = vmatpush2.msra.mxu0 0.0
      %2296 = vmatprep.subr.mxu0 0.0
      %2297 = vmatpush2.msra.mxu0 0.0
      %2298 = vmatprep.subr.mxu0 0.0
      %2299 = vmatpush2.msra.mxu0 0.0
      %2300 = vmatprep.subr.mxu0 0.0
      %2301 = vmatpush2.msra.mxu0 0.0
      %2302 = vmatprep.subr.mxu0 0.0
      %2303 = vmatpush2.msra.mxu0 0.0
      %2304 = vmatprep.subr.mxu0 0.0
      %2305 = vmatpush2.msra.mxu0 0.0
      %2306 = vmatprep.subr.mxu0 0.0
      %2307 = vmatpush2.msra.mxu0 0.0
      %2308 = vmatprep.subr.mxu0 0.0
      %2309 = vmatpush2.msra.mxu0 0.0
      %2310 = vmatprep.subr.mxu0 0.0
      %2311 = vmatpush2.msra.mxu0 0.0
      %2312 = vmatprep.subr.mxu0 0.0
      %2313 = vmatpush2.msra.mxu0 0.0
      %2314 = vmatprep.subr.mxu0 0.0
      %2315 = vmatpush2.msra.mxu0 0.0
      %2316 = vmatprep.subr.mxu0 0.0
      %2317 = vmatpush2.msra.mxu0 0.0
      %2318 = vmatprep.subr.mxu0 0.0
      %2319 = vmatpush2.msra.mxu0 0.0
      %2320 = vmatprep.subr.mxu0 0.0
      %2321 = vmatpush2.msra.mxu0 0.0
      %2322 = vmatprep.mubr.f32.mxu0 0.0
      %2323 = vmatmul.mubr.f32.gmra.mxu0 %v2185
      %v2324 = vpop.f32.mrf.mxu0
      %v2325 = vadd.f32 %v2182, %v2324
      %v2326 = vpop.f32.mrf.mxu0
      %2327 = vdwg.mxu0
      %2328 = vrot.lane.b32.xlu0 %v2021, 112
      %v2329 = vpop.permute.xlu0 %2328
      %2330 = vrot.lane.b32.xlu0 %v2022, 126
      %v2331 = vpop.permute.xlu0 %2330
      %2332 = vrot.lane.b32.xlu0 %v2023, 126
      %v2333 = vpop.permute.xlu0 %2332
      %2334 = vrot.lane.b32.xlu0 %v2024, 126
      %v2335 = vpop.permute.xlu0 %2334
      %v2336 = vsel %vm850, %v2331, %v2333
      %v2337 = vsel %vm850, %v2333, %v2335
      %v2341 = vsel %vm555, %v2329, 0
      %2343 = vmatprep.subr.mxu0 0.0
      %2344 = vmatpush1.msra.mxu0 0.0
      %2345 = vmatprep.subr.mxu0 0.0
      %2346 = vmatpush1.msra.mxu0 0.0
      %2347 = vmatprep.subr.mxu0 0.0
      %2348 = vmatpush1.msra.mxu0 0.0
      %2349 = vmatprep.subr.mxu0 0.0
      %2350 = vmatpush1.msra.mxu0 0.0
      %2351 = vmatprep.subr.mxu0 0.0
      %2352 = vmatpush1.msra.mxu0 0.0
      %2353 = vmatprep.subr.mxu0 0.0
      %2354 = vmatpush1.msra.mxu0 0.0
      %2355 = vmatprep.subr.mxu0 0.0
      %2356 = vmatpush1.msra.mxu0 0.0
      %2357 = vmatprep.subr.mxu0 0.0
      %2358 = vmatpush1.msra.mxu0 0.0
      %2359 = vmatprep.subr.mxu0 0.0
      %2360 = vmatpush1.msra.mxu0 0.0
      %2361 = vmatprep.subr.mxu0 0.0
      %2362 = vmatpush1.msra.mxu0 0.0
      %2363 = vmatprep.subr.mxu0 0.0
      %2364 = vmatpush1.msra.mxu0 0.0
      %2365 = vmatprep.subr.mxu0 0.0
      %2366 = vmatpush1.msra.mxu0 0.0
      %2367 = vmatprep.subr.mxu0 0.0
      %2368 = vmatpush1.msra.mxu0 0.0
      %2369 = vmatprep.subr.mxu0 0.0
      %2370 = vmatpush1.msra.mxu0 0.0
      %2371 = vmatprep.subr.mxu0 0.0
      %2372 = vmatpush1.msra.mxu0 0.0
      %2373 = vmatprep.subr.mxu0 %v2337
      %2374 = vmatpush1.msra.mxu0 %v2336
      %2375 = vmatprep.subr.mxu0 0.0
      %2376 = vmatpush2.msra.mxu0 0.0
      %2377 = vmatprep.subr.mxu0 0.0
      %2378 = vmatpush2.msra.mxu0 0.0
      %2379 = vmatprep.subr.mxu0 0.0
      %2380 = vmatpush2.msra.mxu0 0.0
      %2381 = vmatprep.subr.mxu0 0.0
      %2382 = vmatpush2.msra.mxu0 0.0
      %2383 = vmatprep.subr.mxu0 0.0
      %2384 = vmatpush2.msra.mxu0 0.0
      %2385 = vmatprep.subr.mxu0 0.0
      %2386 = vmatpush2.msra.mxu0 0.0
      %2387 = vmatprep.subr.mxu0 0.0
      %2388 = vmatpush2.msra.mxu0 0.0
      %2389 = vmatprep.subr.mxu0 0.0
      %2390 = vmatpush2.msra.mxu0 0.0
      %2391 = vmatprep.subr.mxu0 0.0
      %2392 = vmatpush2.msra.mxu0 0.0
      %2393 = vmatprep.subr.mxu0 0.0
      %2394 = vmatpush2.msra.mxu0 0.0
      %2395 = vmatprep.subr.mxu0 0.0
      %2396 = vmatpush2.msra.mxu0 0.0
      %2397 = vmatprep.subr.mxu0 0.0
      %2398 = vmatpush2.msra.mxu0 0.0
      %2399 = vmatprep.subr.mxu0 0.0
      %2400 = vmatpush2.msra.mxu0 0.0
      %2401 = vmatprep.subr.mxu0 0.0
      %2402 = vmatpush2.msra.mxu0 0.0
      %2403 = vmatprep.subr.mxu0 0.0
      %2404 = vmatpush2.msra.mxu0 0.0
      %2405 = vmatprep.subr.mxu0 0.0
      %2406 = vmatpush2.msra.mxu0 0.0
      %2407 = vmatprep.mubr.f32.mxu0 0.0
      %2408 = vmatmul.mubr.f32.gmra.mxu0 %v2341
      %v2409 = vpop.f32.mrf.mxu0
      %v2410 = vadd.f32 0.0, %v2409
      %v2411 = vpop.f32.mrf.mxu0
      %v2412 = vadd.f32 0.0, %v2411
      %2413 = vdwg.mxu0
      %2414 = vmatprep.subr.mxu0 0.0
      %2415 = vmatpush1.msra.mxu0 0.0
      %2416 = vmatprep.subr.mxu0 0.0
      %2417 = vmatpush1.msra.mxu0 0.0
      %2418 = vmatprep.subr.mxu0 0.0
      %2419 = vmatpush1.msra.mxu0 0.0
      %2420 = vmatprep.subr.mxu0 0.0
      %2421 = vmatpush1.msra.mxu0 0.0
      %2422 = vmatprep.subr.mxu0 0.0
      %2423 = vmatpush1.msra.mxu0 0.0
      %2424 = vmatprep.subr.mxu0 0.0
      %2425 = vmatpush1.msra.mxu0 0.0
      %2426 = vmatprep.subr.mxu0 0.0
      %2427 = vmatpush1.msra.mxu0 0.0
      %2428 = vmatprep.subr.mxu0 0.0
      %2429 = vmatpush1.msra.mxu0 0.0
      %2430 = vmatprep.subr.mxu0 0.0
      %2431 = vmatpush1.msra.mxu0 0.0
      %2432 = vmatprep.subr.mxu0 0.0
      %2433 = vmatpush1.msra.mxu0 0.0
      %2434 = vmatprep.subr.mxu0 0.0
      %2435 = vmatpush1.msra.mxu0 0.0
      %2436 = vmatprep.subr.mxu0 0.0
      %2437 = vmatpush1.msra.mxu0 0.0
      %2438 = vmatprep.subr.mxu0 0.0
      %2439 = vmatpush1.msra.mxu0 0.0
      %2440 = vmatprep.subr.mxu0 0.0
      %2441 = vmatpush1.msra.mxu0 0.0
      %2442 = vmatprep.subr.mxu0 0.0
      %2443 = vmatpush1.msra.mxu0 0.0
      %2444 = vmatprep.subr.mxu0 0.0
      %2445 = vmatpush1.msra.mxu0 %v2335
      %2446 = vmatprep.subr.mxu0 0.0
      %2447 = vmatpush2.msra.mxu0 0.0
      %2448 = vmatprep.subr.mxu0 0.0
      %2449 = vmatpush2.msra.mxu0 0.0
      %2450 = vmatprep.subr.mxu0 0.0
      %2451 = vmatpush2.msra.mxu0 0.0
      %2452 = vmatprep.subr.mxu0 0.0
      %2453 = vmatpush2.msra.mxu0 0.0
      %2454 = vmatprep.subr.mxu0 0.0
      %2455 = vmatpush2.msra.mxu0 0.0
      %2456 = vmatprep.subr.mxu0 0.0
      %2457 = vmatpush2.msra.mxu0 0.0
      %2458 = vmatprep.subr.mxu0 0.0
      %2459 = vmatpush2.msra.mxu0 0.0
      %2460 = vmatprep.subr.mxu0 0.0
      %2461 = vmatpush2.msra.mxu0 0.0
      %2462 = vmatprep.subr.mxu0 0.0
      %2463 = vmatpush2.msra.mxu0 0.0
      %2464 = vmatprep.subr.mxu0 0.0
      %2465 = vmatpush2.msra.mxu0 0.0
      %2466 = vmatprep.subr.mxu0 0.0
      %2467 = vmatpush2.msra.mxu0 0.0
      %2468 = vmatprep.subr.mxu0 0.0
      %2469 = vmatpush2.msra.mxu0 0.0
      %2470 = vmatprep.subr.mxu0 0.0
      %2471 = vmatpush2.msra.mxu0 0.0
      %2472 = vmatprep.subr.mxu0 0.0
      %2473 = vmatpush2.msra.mxu0 0.0
      %2474 = vmatprep.subr.mxu0 0.0
      %2475 = vmatpush2.msra.mxu0 0.0
      %2476 = vmatprep.subr.mxu0 0.0
      %2477 = vmatpush2.msra.mxu0 0.0
      %2478 = vmatprep.mubr.f32.mxu0 0.0
      %2479 = vmatmul.mubr.f32.gmra.mxu0 %v2341
      %v2480 = vpop.f32.mrf.mxu0
      %v2481 = vadd.f32 0.0, %v2480
      %v2482 = vpop.f32.mrf.mxu0
      %2483 = vdwg.mxu0
      %v2484 = vadd.f32 %v2254, %v2410
      %v2485 = vadd.f32 %v2256, %v2412
      %v2486 = vadd.f32 %v2325, %v2481
      %2487 = vrot.lane.b32.xlu0 %v2021, 104
      %v2488 = vpop.permute.xlu0 %2487
      %2489 = vrot.lane.b32.xlu0 %v2022, 110
      %v2490 = vpop.permute.xlu0 %2489
      %2491 = vrot.lane.b32.xlu0 %v2023, 110
      %v2492 = vpop.permute.xlu0 %2491
      %2493 = vrot.lane.b32.xlu0 %v2024, 110
      %v2494 = vpop.permute.xlu0 %2493
      %v2495 = vsel %vm1010, %v2490, %v2492
      %v2496 = vsel %vm1010, %v2492, %v2494
      %v2500 = vsel %vm555, %v2488, 0
      %2502 = vmatprep.subr.mxu0 0.0
      %2503 = vmatpush1.msra.mxu0 0.0
      %2504 = vmatprep.subr.mxu0 0.0
      %2505 = vmatpush1.msra.mxu0 0.0
      %2506 = vmatprep.subr.mxu0 0.0
      %2507 = vmatpush1.msra.mxu0 0.0
      %2508 = vmatprep.subr.mxu0 0.0
      %2509 = vmatpush1.msra.mxu0 0.0
      %2510 = vmatprep.subr.mxu0 0.0
      %2511 = vmatpush1.msra.mxu0 0.0
      %2512 = vmatprep.subr.mxu0 0.0
      %2513 = vmatpush1.msra.mxu0 0.0
      %2514 = vmatprep.subr.mxu0 0.0
      %2515 = vmatpush1.msra.mxu0 0.0
      %2516 = vmatprep.subr.mxu0 0.0
      %2517 = vmatpush1.msra.mxu0 0.0
      %2518 = vmatprep.subr.mxu0 0.0
      %2519 = vmatpush1.msra.mxu0 0.0
      %2520 = vmatprep.subr.mxu0 0.0
      %2521 = vmatpush1.msra.mxu0 0.0
      %2522 = vmatprep.subr.mxu0 0.0
      %2523 = vmatpush1.msra.mxu0 0.0
      %2524 = vmatprep.subr.mxu0 0.0
      %2525 = vmatpush1.msra.mxu0 0.0
      %2526 = vmatprep.subr.mxu0 0.0
      %2527 = vmatpush1.msra.mxu0 0.0
      %2528 = vmatprep.subr.mxu0 0.0
      %2529 = vmatpush1.msra.mxu0 0.0
      %2530 = vmatprep.subr.mxu0 0.0
      %2531 = vmatpush1.msra.mxu0 0.0
      %2532 = vmatprep.subr.mxu0 %v2496
      %2533 = vmatpush1.msra.mxu0 %v2495
      %2534 = vmatprep.subr.mxu0 0.0
      %2535 = vmatpush2.msra.mxu0 0.0
      %2536 = vmatprep.subr.mxu0 0.0
      %2537 = vmatpush2.msra.mxu0 0.0
      %2538 = vmatprep.subr.mxu0 0.0
      %2539 = vmatpush2.msra.mxu0 0.0
      %2540 = vmatprep.subr.mxu0 0.0
      %2541 = vmatpush2.msra.mxu0 0.0
      %2542 = vmatprep.subr.mxu0 0.0
      %2543 = vmatpush2.msra.mxu0 0.0
      %2544 = vmatprep.subr.mxu0 0.0
      %2545 = vmatpush2.msra.mxu0 0.0
      %2546 = vmatprep.subr.mxu0 0.0
      %2547 = vmatpush2.msra.mxu0 0.0
      %2548 = vmatprep.subr.mxu0 0.0
      %2549 = vmatpush2.msra.mxu0 0.0
      %2550 = vmatprep.subr.mxu0 0.0
      %2551 = vmatpush2.msra.mxu0 0.0
      %2552 = vmatprep.subr.mxu0 0.0
      %2553 = vmatpush2.msra.mxu0 0.0
      %2554 = vmatprep.subr.mxu0 0.0
      %2555 = vmatpush2.msra.mxu0 0.0
      %2556 = vmatprep.subr.mxu0 0.0
      %2557 = vmatpush2.msra.mxu0 0.0
      %2558 = vmatprep.subr.mxu0 0.0
      %2559 = vmatpush2.msra.mxu0 0.0
      %2560 = vmatprep.subr.mxu0 0.0
      %2561 = vmatpush2.msra.mxu0 0.0
      %2562 = vmatprep.subr.mxu0 0.0
      %2563 = vmatpush2.msra.mxu0 0.0
      %2564 = vmatprep.subr.mxu0 0.0
      %2565 = vmatpush2.msra.mxu0 0.0
      %2566 = vmatprep.mubr.f32.mxu0 0.0
      %2567 = vmatmul.mubr.f32.gmra.mxu0 %v2500
      %v2568 = vpop.f32.mrf.mxu0
      %v2569 = vadd.f32 0.0, %v2568
      %v2570 = vpop.f32.mrf.mxu0
      %v2571 = vadd.f32 0.0, %v2570
      %2572 = vdwg.mxu0
      %2573 = vmatprep.subr.mxu0 0.0
      %2574 = vmatpush1.msra.mxu0 0.0
      %2575 = vmatprep.subr.mxu0 0.0
      %2576 = vmatpush1.msra.mxu0 0.0
      %2577 = vmatprep.subr.mxu0 0.0
      %2578 = vmatpush1.msra.mxu0 0.0
      %2579 = vmatprep.subr.mxu0 0.0
      %2580 = vmatpush1.msra.mxu0 0.0
      %2581 = vmatprep.subr.mxu0 0.0
      %2582 = vmatpush1.msra.mxu0 0.0
      %2583 = vmatprep.subr.mxu0 0.0
      %2584 = vmatpush1.msra.mxu0 0.0
      %2585 = vmatprep.subr.mxu0 0.0
      %2586 = vmatpush1.msra.mxu0 0.0
      %2587 = vmatprep.subr.mxu0 0.0
      %2588 = vmatpush1.msra.mxu0 0.0
      %2589 = vmatprep.subr.mxu0 0.0
      %2590 = vmatpush1.msra.mxu0 0.0
      %2591 = vmatprep.subr.mxu0 0.0
      %2592 = vmatpush1.msra.mxu0 0.0
      %2593 = vmatprep.subr.mxu0 0.0
      %2594 = vmatpush1.msra.mxu0 0.0
      %2595 = vmatprep.subr.mxu0 0.0
      %2596 = vmatpush1.msra.mxu0 0.0
      %2597 = vmatprep.subr.mxu0 0.0
      %2598 = vmatpush1.msra.mxu0 0.0
      %2599 = vmatprep.subr.mxu0 0.0
      %2600 = vmatpush1.msra.mxu0 0.0
      %2601 = vmatprep.subr.mxu0 0.0
      %2602 = vmatpush1.msra.mxu0 0.0
      %2603 = vmatprep.subr.mxu0 0.0
      %2604 = vmatpush1.msra.mxu0 %v2494
      %2605 = vmatprep.subr.mxu0 0.0
      %2606 = vmatpush2.msra.mxu0 0.0
      %2607 = vmatprep.subr.mxu0 0.0
      %2608 = vmatpush2.msra.mxu0 0.0
      %2609 = vmatprep.subr.mxu0 0.0
      %2610 = vmatpush2.msra.mxu0 0.0
      %2611 = vmatprep.subr.mxu0 0.0
      %2612 = vmatpush2.msra.mxu0 0.0
      %2613 = vmatprep.subr.mxu0 0.0
      %2614 = vmatpush2.msra.mxu0 0.0
      %2615 = vmatprep.subr.mxu0 0.0
      %2616 = vmatpush2.msra.mxu0 0.0
      %2617 = vmatprep.subr.mxu0 0.0
      %2618 = vmatpush2.msra.mxu0 0.0
      %2619 = vmatprep.subr.mxu0 0.0
      %2620 = vmatpush2.msra.mxu0 0.0
      %2621 = vmatprep.subr.mxu0 0.0
      %2622 = vmatpush2.msra.mxu0 0.0
      %2623 = vmatprep.subr.mxu0 0.0
      %2624 = vmatpush2.msra.mxu0 0.0
      %2625 = vmatprep.subr.mxu0 0.0
      %2626 = vmatpush2.msra.mxu0 0.0
      %2627 = vmatprep.subr.mxu0 0.0
      %2628 = vmatpush2.msra.mxu0 0.0
      %2629 = vmatprep.subr.mxu0 0.0
      %2630 = vmatpush2.msra.mxu0 0.0
      %2631 = vmatprep.subr.mxu0 0.0
      %2632 = vmatpush2.msra.mxu0 0.0
      %2633 = vmatprep.subr.mxu0 0.0
      %2634 = vmatpush2.msra.mxu0 0.0
      %2635 = vmatprep.subr.mxu0 0.0
      %2636 = vmatpush2.msra.mxu0 0.0
      %2637 = vmatprep.mubr.f32.mxu0 0.0
      %2638 = vmatmul.mubr.f32.gmra.mxu0 %v2500
      %v2639 = vpop.f32.mrf.mxu0
      %v2640 = vadd.f32 0.0, %v2639
      %v2641 = vpop.f32.mrf.mxu0
      %2642 = vdwg.mxu0
      %v2643 = vadd.f32 %v2484, %v2569
      %v2644 = vadd.f32 %v2485, %v2571
      %v2645 = vadd.f32 %v2486, %v2640
      %2646 = vrot.lane.b32.xlu0 %v2021, 96
      %v2647 = vpop.permute.xlu0 %2646
      %2648 = vrot.lane.b32.xlu0 %v2022, 109
      %v2649 = vpop.permute.xlu0 %2648
      %2650 = vrot.lane.b32.xlu0 %v2023, 109
      %v2651 = vpop.permute.xlu0 %2650
      %2652 = vrot.lane.b32.xlu0 %v2024, 109
      %v2653 = vpop.permute.xlu0 %2652
      %v2654 = vsel %vm1170, %v2649, %v2651
      %v2655 = vsel %vm1170, %v2651, %v2653
      %v2659 = vsel %vm555, %v2647, 0
      %2661 = vmatprep.subr.mxu0 0.0
      %2662 = vmatpush1.msra.mxu0 0.0
      %2663 = vmatprep.subr.mxu0 0.0
      %2664 = vmatpush1.msra.mxu0 0.0
      %2665 = vmatprep.subr.mxu0 0.0
      %2666 = vmatpush1.msra.mxu0 0.0
      %2667 = vmatprep.subr.mxu0 0.0
      %2668 = vmatpush1.msra.mxu0 0.0
      %2669 = vmatprep.subr.mxu0 0.0
      %2670 = vmatpush1.msra.mxu0 0.0
      %2671 = vmatprep.subr.mxu0 0.0
      %2672 = vmatpush1.msra.mxu0 0.0
      %2673 = vmatprep.subr.mxu0 0.0
      %2674 = vmatpush1.msra.mxu0 0.0
      %2675 = vmatprep.subr.mxu0 0.0
      %2676 = vmatpush1.msra.mxu0 0.0
      %2677 = vmatprep.subr.mxu0 0.0
      %2678 = vmatpush1.msra.mxu0 0.0
      %2679 = vmatprep.subr.mxu0 0.0
      %2680 = vmatpush1.msra.mxu0 0.0
      %2681 = vmatprep.subr.mxu0 0.0
      %2682 = vmatpush1.msra.mxu0 0.0
      %2683 = vmatprep.subr.mxu0 0.0
      %2684 = vmatpush1.msra.mxu0 0.0
      %2685 = vmatprep.subr.mxu0 0.0
      %2686 = vmatpush1.msra.mxu0 0.0
      %2687 = vmatprep.subr.mxu0 0.0
      %2688 = vmatpush1.msra.mxu0 0.0
      %2689 = vmatprep.subr.mxu0 0.0
      %2690 = vmatpush1.msra.mxu0 0.0
      %2691 = vmatprep.subr.mxu0 %v2655
      %2692 = vmatpush1.msra.mxu0 %v2654
      %2693 = vmatprep.subr.mxu0 0.0
      %2694 = vmatpush2.msra.mxu0 0.0
      %2695 = vmatprep.subr.mxu0 0.0
      %2696 = vmatpush2.msra.mxu0 0.0
      %2697 = vmatprep.subr.mxu0 0.0
      %2698 = vmatpush2.msra.mxu0 0.0
      %2699 = vmatprep.subr.mxu0 0.0
      %2700 = vmatpush2.msra.mxu0 0.0
      %2701 = vmatprep.subr.mxu0 0.0
      %2702 = vmatpush2.msra.mxu0 0.0
      %2703 = vmatprep.subr.mxu0 0.0
      %2704 = vmatpush2.msra.mxu0 0.0
      %2705 = vmatprep.subr.mxu0 0.0
      %2706 = vmatpush2.msra.mxu0 0.0
      %2707 = vmatprep.subr.mxu0 0.0
      %2708 = vmatpush2.msra.mxu0 0.0
      %2709 = vmatprep.subr.mxu0 0.0
      %2710 = vmatpush2.msra.mxu0 0.0
      %2711 = vmatprep.subr.mxu0 0.0
      %2712 = vmatpush2.msra.mxu0 0.0
      %2713 = vmatprep.subr.mxu0 0.0
      %2714 = vmatpush2.msra.mxu0 0.0
      %2715 = vmatprep.subr.mxu0 0.0
      %2716 = vmatpush2.msra.mxu0 0.0
      %2717 = vmatprep.subr.mxu0 0.0
      %2718 = vmatpush2.msra.mxu0 0.0
      %2719 = vmatprep.subr.mxu0 0.0
      %2720 = vmatpush2.msra.mxu0 0.0
      %2721 = vmatprep.subr.mxu0 0.0
      %2722 = vmatpush2.msra.mxu0 0.0
      %2723 = vmatprep.subr.mxu0 0.0
      %2724 = vmatpush2.msra.mxu0 0.0
      %2725 = vmatprep.mubr.f32.mxu0 0.0
      %2726 = vmatmul.mubr.f32.gmra.mxu0 %v2659
      %v2727 = vpop.f32.mrf.mxu0
      %v2728 = vadd.f32 0.0, %v2727
      %v2729 = vpop.f32.mrf.mxu0
      %v2730 = vadd.f32 0.0, %v2729
      %2731 = vdwg.mxu0
      %2732 = vmatprep.subr.mxu0 0.0
      %2733 = vmatpush1.msra.mxu0 0.0
      %2734 = vmatprep.subr.mxu0 0.0
      %2735 = vmatpush1.msra.mxu0 0.0
      %2736 = vmatprep.subr.mxu0 0.0
      %2737 = vmatpush1.msra.mxu0 0.0
      %2738 = vmatprep.subr.mxu0 0.0
      %2739 = vmatpush1.msra.mxu0 0.0
      %2740 = vmatprep.subr.mxu0 0.0
      %2741 = vmatpush1.msra.mxu0 0.0
      %2742 = vmatprep.subr.mxu0 0.0
      %2743 = vmatpush1.msra.mxu0 0.0
      %2744 = vmatprep.subr.mxu0 0.0
      %2745 = vmatpush1.msra.mxu0 0.0
      %2746 = vmatprep.subr.mxu0 0.0
      %2747 = vmatpush1.msra.mxu0 0.0
      %2748 = vmatprep.subr.mxu0 0.0
      %2749 = vmatpush1.msra.mxu0 0.0
      %2750 = vmatprep.subr.mxu0 0.0
      %2751 = vmatpush1.msra.mxu0 0.0
      %2752 = vmatprep.subr.mxu0 0.0
      %2753 = vmatpush1.msra.mxu0 0.0
      %2754 = vmatprep.subr.mxu0 0.0
      %2755 = vmatpush1.msra.mxu0 0.0
      %2756 = vmatprep.subr.mxu0 0.0
      %2757 = vmatpush1.msra.mxu0 0.0
      %2758 = vmatprep.subr.mxu0 0.0
      %2759 = vmatpush1.msra.mxu0 0.0
      %2760 = vmatprep.subr.mxu0 0.0
      %2761 = vmatpush1.msra.mxu0 0.0
      %2762 = vmatprep.subr.mxu0 0.0
      %2763 = vmatpush1.msra.mxu0 %v2653
      %2764 = vmatprep.subr.mxu0 0.0
      %2765 = vmatpush2.msra.mxu0 0.0
      %2766 = vmatprep.subr.mxu0 0.0
      %2767 = vmatpush2.msra.mxu0 0.0
      %2768 = vmatprep.subr.mxu0 0.0
      %2769 = vmatpush2.msra.mxu0 0.0
      %2770 = vmatprep.subr.mxu0 0.0
      %2771 = vmatpush2.msra.mxu0 0.0
      %2772 = vmatprep.subr.mxu0 0.0
      %2773 = vmatpush2.msra.mxu0 0.0
      %2774 = vmatprep.subr.mxu0 0.0
      %2775 = vmatpush2.msra.mxu0 0.0
      %2776 = vmatprep.subr.mxu0 0.0
      %2777 = vmatpush2.msra.mxu0 0.0
      %2778 = vmatprep.subr.mxu0 0.0
      %2779 = vmatpush2.msra.mxu0 0.0
      %2780 = vmatprep.subr.mxu0 0.0
      %2781 = vmatpush2.msra.mxu0 0.0
      %2782 = vmatprep.subr.mxu0 0.0
      %2783 = vmatpush2.msra.mxu0 0.0
      %2784 = vmatprep.subr.mxu0 0.0
      %2785 = vmatpush2.msra.mxu0 0.0
      %2786 = vmatprep.subr.mxu0 0.0
      %2787 = vmatpush2.msra.mxu0 0.0
      %2788 = vmatprep.subr.mxu0 0.0
      %2789 = vmatpush2.msra.mxu0 0.0
      %2790 = vmatprep.subr.mxu0 0.0
      %2791 = vmatpush2.msra.mxu0 0.0
      %2792 = vmatprep.subr.mxu0 0.0
      %2793 = vmatpush2.msra.mxu0 0.0
      %2794 = vmatprep.subr.mxu0 0.0
      %2795 = vmatpush2.msra.mxu0 0.0
      %2796 = vmatprep.mubr.f32.mxu0 0.0
      %2797 = vmatmul.mubr.f32.gmra.mxu0 %v2659
      %v2798 = vpop.f32.mrf.mxu0
      %v2799 = vadd.f32 0.0, %v2798
      %v2800 = vpop.f32.mrf.mxu0
      %2801 = vdwg.mxu0
      %v2802 = vadd.f32 %v2643, %v2728
      %v2803 = vadd.f32 %v2644, %v2730
      %v2804 = vadd.f32 %v2645, %v2799
      %2805 = vrot.lane.b32.xlu0 %v2021, 88
      %v2806 = vpop.permute.xlu0 %2805
      %2807 = vrot.lane.b32.xlu0 %v2022, 108
      %v2808 = vpop.permute.xlu0 %2807
      %2809 = vrot.lane.b32.xlu0 %v2023, 108
      %v2810 = vpop.permute.xlu0 %2809
      %2811 = vrot.lane.b32.xlu0 %v2024, 108
      %v2812 = vpop.permute.xlu0 %2811
      %v2813 = vsel %vm1330, %v2808, %v2810
      %v2814 = vsel %vm1330, %v2810, %v2812
      %v2818 = vsel %vm555, %v2806, 0
      %2820 = vmatprep.subr.mxu0 0.0
      %2821 = vmatpush1.msra.mxu0 0.0
      %2822 = vmatprep.subr.mxu0 0.0
      %2823 = vmatpush1.msra.mxu0 0.0
      %2824 = vmatprep.subr.mxu0 0.0
      %2825 = vmatpush1.msra.mxu0 0.0
      %2826 = vmatprep.subr.mxu0 0.0
      %2827 = vmatpush1.msra.mxu0 0.0
      %2828 = vmatprep.subr.mxu0 0.0
      %2829 = vmatpush1.msra.mxu0 0.0
      %2830 = vmatprep.subr.mxu0 0.0
      %2831 = vmatpush1.msra.mxu0 0.0
      %2832 = vmatprep.subr.mxu0 0.0
      %2833 = vmatpush1.msra.mxu0 0.0
      %2834 = vmatprep.subr.mxu0 0.0
      %2835 = vmatpush1.msra.mxu0 0.0
      %2836 = vmatprep.subr.mxu0 0.0
      %2837 = vmatpush1.msra.mxu0 0.0
      %2838 = vmatprep.subr.mxu0 0.0
      %2839 = vmatpush1.msra.mxu0 0.0
      %2840 = vmatprep.subr.mxu0 0.0
      %2841 = vmatpush1.msra.mxu0 0.0
      %2842 = vmatprep.subr.mxu0 0.0
      %2843 = vmatpush1.msra.mxu0 0.0
      %2844 = vmatprep.subr.mxu0 0.0
      %2845 = vmatpush1.msra.mxu0 0.0
      %2846 = vmatprep.subr.mxu0 0.0
      %2847 = vmatpush1.msra.mxu0 0.0
      %2848 = vmatprep.subr.mxu0 0.0
      %2849 = vmatpush1.msra.mxu0 0.0
      %2850 = vmatprep.subr.mxu0 %v2814
      %2851 = vmatpush1.msra.mxu0 %v2813
      %2852 = vmatprep.subr.mxu0 0.0
      %2853 = vmatpush2.msra.mxu0 0.0
      %2854 = vmatprep.subr.mxu0 0.0
      %2855 = vmatpush2.msra.mxu0 0.0
      %2856 = vmatprep.subr.mxu0 0.0
      %2857 = vmatpush2.msra.mxu0 0.0
      %2858 = vmatprep.subr.mxu0 0.0
      %2859 = vmatpush2.msra.mxu0 0.0
      %2860 = vmatprep.subr.mxu0 0.0
      %2861 = vmatpush2.msra.mxu0 0.0
      %2862 = vmatprep.subr.mxu0 0.0
      %2863 = vmatpush2.msra.mxu0 0.0
      %2864 = vmatprep.subr.mxu0 0.0
      %2865 = vmatpush2.msra.mxu0 0.0
      %2866 = vmatprep.subr.mxu0 0.0
      %2867 = vmatpush2.msra.mxu0 0.0
      %2868 = vmatprep.subr.mxu0 0.0
      %2869 = vmatpush2.msra.mxu0 0.0
      %2870 = vmatprep.subr.mxu0 0.0
      %2871 = vmatpush2.msra.mxu0 0.0
      %2872 = vmatprep.subr.mxu0 0.0
      %2873 = vmatpush2.msra.mxu0 0.0
      %2874 = vmatprep.subr.mxu0 0.0
      %2875 = vmatpush2.msra.mxu0 0.0
      %2876 = vmatprep.subr.mxu0 0.0
      %2877 = vmatpush2.msra.mxu0 0.0
      %2878 = vmatprep.subr.mxu0 0.0
      %2879 = vmatpush2.msra.mxu0 0.0
      %2880 = vmatprep.subr.mxu0 0.0
      %2881 = vmatpush2.msra.mxu0 0.0
      %2882 = vmatprep.subr.mxu0 0.0
      %2883 = vmatpush2.msra.mxu0 0.0
      %2884 = vmatprep.mubr.f32.mxu0 0.0
      %2885 = vmatmul.mubr.f32.gmra.mxu0 %v2818
      %v2886 = vpop.f32.mrf.mxu0
      %v2887 = vadd.f32 0.0, %v2886
      %v2888 = vpop.f32.mrf.mxu0
      %v2889 = vadd.f32 0.0, %v2888
      %2890 = vdwg.mxu0
      %2891 = vmatprep.subr.mxu0 0.0
      %2892 = vmatpush1.msra.mxu0 0.0
      %2893 = vmatprep.subr.mxu0 0.0
      %2894 = vmatpush1.msra.mxu0 0.0
      %2895 = vmatprep.subr.mxu0 0.0
      %2896 = vmatpush1.msra.mxu0 0.0
      %2897 = vmatprep.subr.mxu0 0.0
      %2898 = vmatpush1.msra.mxu0 0.0
      %2899 = vmatprep.subr.mxu0 0.0
      %2900 = vmatpush1.msra.mxu0 0.0
      %2901 = vmatprep.subr.mxu0 0.0
      %2902 = vmatpush1.msra.mxu0 0.0
      %2903 = vmatprep.subr.mxu0 0.0
      %2904 = vmatpush1.msra.mxu0 0.0
      %2905 = vmatprep.subr.mxu0 0.0
      %2906 = vmatpush1.msra.mxu0 0.0
      %2907 = vmatprep.subr.mxu0 0.0
      %2908 = vmatpush1.msra.mxu0 0.0
      %2909 = vmatprep.subr.mxu0 0.0
      %2910 = vmatpush1.msra.mxu0 0.0
      %2911 = vmatprep.subr.mxu0 0.0
      %2912 = vmatpush1.msra.mxu0 0.0
      %2913 = vmatprep.subr.mxu0 0.0
      %2914 = vmatpush1.msra.mxu0 0.0
      %2915 = vmatprep.subr.mxu0 0.0
      %2916 = vmatpush1.msra.mxu0 0.0
      %2917 = vmatprep.subr.mxu0 0.0
      %2918 = vmatpush1.msra.mxu0 0.0
      %2919 = vmatprep.subr.mxu0 0.0
      %2920 = vmatpush1.msra.mxu0 0.0
      %2921 = vmatprep.subr.mxu0 0.0
      %2922 = vmatpush1.msra.mxu0 %v2812
      %2923 = vmatprep.subr.mxu0 0.0
      %2924 = vmatpush2.msra.mxu0 0.0
      %2925 = vmatprep.subr.mxu0 0.0
      %2926 = vmatpush2.msra.mxu0 0.0
      %2927 = vmatprep.subr.mxu0 0.0
      %2928 = vmatpush2.msra.mxu0 0.0
      %2929 = vmatprep.subr.mxu0 0.0
      %2930 = vmatpush2.msra.mxu0 0.0
      %2931 = vmatprep.subr.mxu0 0.0
      %2932 = vmatpush2.msra.mxu0 0.0
      %2933 = vmatprep.subr.mxu0 0.0
      %2934 = vmatpush2.msra.mxu0 0.0
      %2935 = vmatprep.subr.mxu0 0.0
      %2936 = vmatpush2.msra.mxu0 0.0
      %2937 = vmatprep.subr.mxu0 0.0
      %2938 = vmatpush2.msra.mxu0 0.0
      %2939 = vmatprep.subr.mxu0 0.0
      %2940 = vmatpush2.msra.mxu0 0.0
      %2941 = vmatprep.subr.mxu0 0.0
      %2942 = vmatpush2.msra.mxu0 0.0
      %2943 = vmatprep.subr.mxu0 0.0
      %2944 = vmatpush2.msra.mxu0 0.0
      %2945 = vmatprep.subr.mxu0 0.0
      %2946 = vmatpush2.msra.mxu0 0.0
      %2947 = vmatprep.subr.mxu0 0.0
      %2948 = vmatpush2.msra.mxu0 0.0
      %2949 = vmatprep.subr.mxu0 0.0
      %2950 = vmatpush2.msra.mxu0 0.0
      %2951 = vmatprep.subr.mxu0 0.0
      %2952 = vmatpush2.msra.mxu0 0.0
      %2953 = vmatprep.subr.mxu0 0.0
      %2954 = vmatpush2.msra.mxu0 0.0
      %2955 = vmatprep.mubr.f32.mxu0 0.0
      %2956 = vmatmul.mubr.f32.gmra.mxu0 %v2818
      %v2957 = vpop.f32.mrf.mxu0
      %v2958 = vadd.f32 0.0, %v2957
      %v2959 = vpop.f32.mrf.mxu0
      %2960 = vdwg.mxu0
      %v2961 = vadd.f32 %v2802, %v2887
      %v2962 = vadd.f32 %v2803, %v2889
      %v2963 = vadd.f32 %v2804, %v2958
      %2964 = vrot.lane.b32.xlu0 %v2021, 80
      %v2965 = vpop.permute.xlu0 %2964
      %2966 = vrot.lane.b32.xlu0 %v2022, 92
      %v2967 = vpop.permute.xlu0 %2966
      %2968 = vrot.lane.b32.xlu0 %v2023, 92
      %v2969 = vpop.permute.xlu0 %2968
      %2970 = vrot.lane.b32.xlu0 %v2024, 92
      %v2971 = vpop.permute.xlu0 %2970
      %v2972 = vsel %vm1490, %v2967, %v2969
      %v2973 = vsel %vm1490, %v2969, %v2971
      %v2977 = vsel %vm555, %v2965, 0
      %2979 = vmatprep.subr.mxu0 0.0
      %2980 = vmatpush1.msra.mxu0 0.0
      %2981 = vmatprep.subr.mxu0 0.0
      %2982 = vmatpush1.msra.mxu0 0.0
      %2983 = vmatprep.subr.mxu0 0.0
      %2984 = vmatpush1.msra.mxu0 0.0
      %2985 = vmatprep.subr.mxu0 0.0
      %2986 = vmatpush1.msra.mxu0 0.0
      %2987 = vmatprep.subr.mxu0 0.0
      %2988 = vmatpush1.msra.mxu0 0.0
      %2989 = vmatprep.subr.mxu0 0.0
      %2990 = vmatpush1.msra.mxu0 0.0
      %2991 = vmatprep.subr.mxu0 0.0
      %2992 = vmatpush1.msra.mxu0 0.0
      %2993 = vmatprep.subr.mxu0 0.0
      %2994 = vmatpush1.msra.mxu0 0.0
      %2995 = vmatprep.subr.mxu0 0.0
      %2996 = vmatpush1.msra.mxu0 0.0
      %2997 = vmatprep.subr.mxu0 0.0
      %2998 = vmatpush1.msra.mxu0 0.0
      %2999 = vmatprep.subr.mxu0 0.0
      %3000 = vmatpush1.msra.mxu0 0.0
      %3001 = vmatprep.subr.mxu0 0.0
      %3002 = vmatpush1.msra.mxu0 0.0
      %3003 = vmatprep.subr.mxu0 0.0
      %3004 = vmatpush1.msra.mxu0 0.0
      %3005 = vmatprep.subr.mxu0 0.0
      %3006 = vmatpush1.msra.mxu0 0.0
      %3007 = vmatprep.subr.mxu0 0.0
      %3008 = vmatpush1.msra.mxu0 0.0
      %3009 = vmatprep.subr.mxu0 %v2973
      %3010 = vmatpush1.msra.mxu0 %v2972
      %3011 = vmatprep.subr.mxu0 0.0
      %3012 = vmatpush2.msra.mxu0 0.0
      %3013 = vmatprep.subr.mxu0 0.0
      %3014 = vmatpush2.msra.mxu0 0.0
      %3015 = vmatprep.subr.mxu0 0.0
      %3016 = vmatpush2.msra.mxu0 0.0
      %3017 = vmatprep.subr.mxu0 0.0
      %3018 = vmatpush2.msra.mxu0 0.0
      %3019 = vmatprep.subr.mxu0 0.0
      %3020 = vmatpush2.msra.mxu0 0.0
      %3021 = vmatprep.subr.mxu0 0.0
      %3022 = vmatpush2.msra.mxu0 0.0
      %3023 = vmatprep.subr.mxu0 0.0
      %3024 = vmatpush2.msra.mxu0 0.0
      %3025 = vmatprep.subr.mxu0 0.0
      %3026 = vmatpush2.msra.mxu0 0.0
      %3027 = vmatprep.subr.mxu0 0.0
      %3028 = vmatpush2.msra.mxu0 0.0
      %3029 = vmatprep.subr.mxu0 0.0
      %3030 = vmatpush2.msra.mxu0 0.0
      %3031 = vmatprep.subr.mxu0 0.0
      %3032 = vmatpush2.msra.mxu0 0.0
      %3033 = vmatprep.subr.mxu0 0.0
      %3034 = vmatpush2.msra.mxu0 0.0
      %3035 = vmatprep.subr.mxu0 0.0
      %3036 = vmatpush2.msra.mxu0 0.0
      %3037 = vmatprep.subr.mxu0 0.0
      %3038 = vmatpush2.msra.mxu0 0.0
      %3039 = vmatprep.subr.mxu0 0.0
      %3040 = vmatpush2.msra.mxu0 0.0
      %3041 = vmatprep.subr.mxu0 0.0
      %3042 = vmatpush2.msra.mxu0 0.0
      %3043 = vmatprep.mubr.f32.mxu0 0.0
      %3044 = vmatmul.mubr.f32.gmra.mxu0 %v2977
      %v3045 = vpop.f32.mrf.mxu0
      %v3046 = vadd.f32 0.0, %v3045
      %v3047 = vpop.f32.mrf.mxu0
      %v3048 = vadd.f32 0.0, %v3047
      %3049 = vdwg.mxu0
      %3050 = vmatprep.subr.mxu0 0.0
      %3051 = vmatpush1.msra.mxu0 0.0
      %3052 = vmatprep.subr.mxu0 0.0
      %3053 = vmatpush1.msra.mxu0 0.0
      %3054 = vmatprep.subr.mxu0 0.0
      %3055 = vmatpush1.msra.mxu0 0.0
      %3056 = vmatprep.subr.mxu0 0.0
      %3057 = vmatpush1.msra.mxu0 0.0
      %3058 = vmatprep.subr.mxu0 0.0
      %3059 = vmatpush1.msra.mxu0 0.0
      %3060 = vmatprep.subr.mxu0 0.0
      %3061 = vmatpush1.msra.mxu0 0.0
      %3062 = vmatprep.subr.mxu0 0.0
      %3063 = vmatpush1.msra.mxu0 0.0
      %3064 = vmatprep.subr.mxu0 0.0
      %3065 = vmatpush1.msra.mxu0 0.0
      %3066 = vmatprep.subr.mxu0 0.0
      %3067 = vmatpush1.msra.mxu0 0.0
      %3068 = vmatprep.subr.mxu0 0.0
      %3069 = vmatpush1.msra.mxu0 0.0
      %3070 = vmatprep.subr.mxu0 0.0
      %3071 = vmatpush1.msra.mxu0 0.0
      %3072 = vmatprep.subr.mxu0 0.0
      %3073 = vmatpush1.msra.mxu0 0.0
      %3074 = vmatprep.subr.mxu0 0.0
      %3075 = vmatpush1.msra.mxu0 0.0
      %3076 = vmatprep.subr.mxu0 0.0
      %3077 = vmatpush1.msra.mxu0 0.0
      %3078 = vmatprep.subr.mxu0 0.0
      %3079 = vmatpush1.msra.mxu0 0.0
      %3080 = vmatprep.subr.mxu0 0.0
      %3081 = vmatpush1.msra.mxu0 %v2971
      %3082 = vmatprep.subr.mxu0 0.0
      %3083 = vmatpush2.msra.mxu0 0.0
      %3084 = vmatprep.subr.mxu0 0.0
      %3085 = vmatpush2.msra.mxu0 0.0
      %3086 = vmatprep.subr.mxu0 0.0
      %3087 = vmatpush2.msra.mxu0 0.0
      %3088 = vmatprep.subr.mxu0 0.0
      %3089 = vmatpush2.msra.mxu0 0.0
      %3090 = vmatprep.subr.mxu0 0.0
      %3091 = vmatpush2.msra.mxu0 0.0
      %3092 = vmatprep.subr.mxu0 0.0
      %3093 = vmatpush2.msra.mxu0 0.0
      %3094 = vmatprep.subr.mxu0 0.0
      %3095 = vmatpush2.msra.mxu0 0.0
      %3096 = vmatprep.subr.mxu0 0.0
      %3097 = vmatpush2.msra.mxu0 0.0
      %3098 = vmatprep.subr.mxu0 0.0
      %3099 = vmatpush2.msra.mxu0 0.0
      %3100 = vmatprep.subr.mxu0 0.0
      %3101 = vmatpush2.msra.mxu0 0.0
      %3102 = vmatprep.subr.mxu0 0.0
      %3103 = vmatpush2.msra.mxu0 0.0
      %3104 = vmatprep.subr.mxu0 0.0
      %3105 = vmatpush2.msra.mxu0 0.0
      %3106 = vmatprep.subr.mxu0 0.0
      %3107 = vmatpush2.msra.mxu0 0.0
      %3108 = vmatprep.subr.mxu0 0.0
      %3109 = vmatpush2.msra.mxu0 0.0
      %3110 = vmatprep.subr.mxu0 0.0
      %3111 = vmatpush2.msra.mxu0 0.0
      %3112 = vmatprep.subr.mxu0 0.0
      %3113 = vmatpush2.msra.mxu0 0.0
      %3114 = vmatprep.mubr.f32.mxu0 0.0
      %3115 = vmatmul.mubr.f32.gmra.mxu0 %v2977
      %v3116 = vpop.f32.mrf.mxu0
      %v3117 = vadd.f32 0.0, %v3116
      %v3118 = vpop.f32.mrf.mxu0
      %3119 = vdwg.mxu0
      %v3120 = vadd.f32 %v2961, %v3046
      %v3121 = vadd.f32 %v2962, %v3048
      %v3122 = vadd.f32 %v2963, %v3117
      %3123 = vrot.lane.b32.xlu0 %v2021, 72
      %v3124 = vpop.permute.xlu0 %3123
      %3125 = vrot.lane.b32.xlu0 %v2022, 91
      %v3126 = vpop.permute.xlu0 %3125
      %3127 = vrot.lane.b32.xlu0 %v2023, 91
      %v3128 = vpop.permute.xlu0 %3127
      %3129 = vrot.lane.b32.xlu0 %v2024, 91
      %v3130 = vpop.permute.xlu0 %3129
      %v3131 = vsel %vm1650, %v3126, %v3128
      %v3132 = vsel %vm1650, %v3128, %v3130
      %v3136 = vsel %vm555, %v3124, 0
      %3138 = vmatprep.subr.mxu0 0.0
      %3139 = vmatpush1.msra.mxu0 0.0
      %3140 = vmatprep.subr.mxu0 0.0
      %3141 = vmatpush1.msra.mxu0 0.0
      %3142 = vmatprep.subr.mxu0 0.0
      %3143 = vmatpush1.msra.mxu0 0.0
      %3144 = vmatprep.subr.mxu0 0.0
      %3145 = vmatpush1.msra.mxu0 0.0
      %3146 = vmatprep.subr.mxu0 0.0
      %3147 = vmatpush1.msra.mxu0 0.0
      %3148 = vmatprep.subr.mxu0 0.0
      %3149 = vmatpush1.msra.mxu0 0.0
      %3150 = vmatprep.subr.mxu0 0.0
      %3151 = vmatpush1.msra.mxu0 0.0
      %3152 = vmatprep.subr.mxu0 0.0
      %3153 = vmatpush1.msra.mxu0 0.0
      %3154 = vmatprep.subr.mxu0 0.0
      %3155 = vmatpush1.msra.mxu0 0.0
      %3156 = vmatprep.subr.mxu0 0.0
      %3157 = vmatpush1.msra.mxu0 0.0
      %3158 = vmatprep.subr.mxu0 0.0
      %3159 = vmatpush1.msra.mxu0 0.0
      %3160 = vmatprep.subr.mxu0 0.0
      %3161 = vmatpush1.msra.mxu0 0.0
      %3162 = vmatprep.subr.mxu0 0.0
      %3163 = vmatpush1.msra.mxu0 0.0
      %3164 = vmatprep.subr.mxu0 0.0
      %3165 = vmatpush1.msra.mxu0 0.0
      %3166 = vmatprep.subr.mxu0 0.0
      %3167 = vmatpush1.msra.mxu0 0.0
      %3168 = vmatprep.subr.mxu0 %v3132
      %3169 = vmatpush1.msra.mxu0 %v3131
      %3170 = vmatprep.subr.mxu0 0.0
      %3171 = vmatpush2.msra.mxu0 0.0
      %3172 = vmatprep.subr.mxu0 0.0
      %3173 = vmatpush2.msra.mxu0 0.0
      %3174 = vmatprep.subr.mxu0 0.0
      %3175 = vmatpush2.msra.mxu0 0.0
      %3176 = vmatprep.subr.mxu0 0.0
      %3177 = vmatpush2.msra.mxu0 0.0
      %3178 = vmatprep.subr.mxu0 0.0
      %3179 = vmatpush2.msra.mxu0 0.0
      %3180 = vmatprep.subr.mxu0 0.0
      %3181 = vmatpush2.msra.mxu0 0.0
      %3182 = vmatprep.subr.mxu0 0.0
      %3183 = vmatpush2.msra.mxu0 0.0
      %3184 = vmatprep.subr.mxu0 0.0
      %3185 = vmatpush2.msra.mxu0 0.0
      %3186 = vmatprep.subr.mxu0 0.0
      %3187 = vmatpush2.msra.mxu0 0.0
      %3188 = vmatprep.subr.mxu0 0.0
      %3189 = vmatpush2.msra.mxu0 0.0
      %3190 = vmatprep.subr.mxu0 0.0
      %3191 = vmatpush2.msra.mxu0 0.0
      %3192 = vmatprep.subr.mxu0 0.0
      %3193 = vmatpush2.msra.mxu0 0.0
      %3194 = vmatprep.subr.mxu0 0.0
      %3195 = vmatpush2.msra.mxu0 0.0
      %3196 = vmatprep.subr.mxu0 0.0
      %3197 = vmatpush2.msra.mxu0 0.0
      %3198 = vmatprep.subr.mxu0 0.0
      %3199 = vmatpush2.msra.mxu0 0.0
      %3200 = vmatprep.subr.mxu0 0.0
      %3201 = vmatpush2.msra.mxu0 0.0
      %3202 = vmatprep.mubr.f32.mxu0 0.0
      %3203 = vmatmul.mubr.f32.gmra.mxu0 %v3136
      %v3204 = vpop.f32.mrf.mxu0
      %v3205 = vadd.f32 0.0, %v3204
      %v3206 = vpop.f32.mrf.mxu0
      %v3207 = vadd.f32 0.0, %v3206
      %3208 = vdwg.mxu0
      %3209 = vmatprep.subr.mxu0 0.0
      %3210 = vmatpush1.msra.mxu0 0.0
      %3211 = vmatprep.subr.mxu0 0.0
      %3212 = vmatpush1.msra.mxu0 0.0
      %3213 = vmatprep.subr.mxu0 0.0
      %3214 = vmatpush1.msra.mxu0 0.0
      %3215 = vmatprep.subr.mxu0 0.0
      %3216 = vmatpush1.msra.mxu0 0.0
      %3217 = vmatprep.subr.mxu0 0.0
      %3218 = vmatpush1.msra.mxu0 0.0
      %3219 = vmatprep.subr.mxu0 0.0
      %3220 = vmatpush1.msra.mxu0 0.0
      %3221 = vmatprep.subr.mxu0 0.0
      %3222 = vmatpush1.msra.mxu0 0.0
      %3223 = vmatprep.subr.mxu0 0.0
      %3224 = vmatpush1.msra.mxu0 0.0
      %3225 = vmatprep.subr.mxu0 0.0
      %3226 = vmatpush1.msra.mxu0 0.0
      %3227 = vmatprep.subr.mxu0 0.0
      %3228 = vmatpush1.msra.mxu0 0.0
      %3229 = vmatprep.subr.mxu0 0.0
      %3230 = vmatpush1.msra.mxu0 0.0
      %3231 = vmatprep.subr.mxu0 0.0
      %3232 = vmatpush1.msra.mxu0 0.0
      %3233 = vmatprep.subr.mxu0 0.0
      %3234 = vmatpush1.msra.mxu0 0.0
      %3235 = vmatprep.subr.mxu0 0.0
      %3236 = vmatpush1.msra.mxu0 0.0
      %3237 = vmatprep.subr.mxu0 0.0
      %3238 = vmatpush1.msra.mxu0 0.0
      %3239 = vmatprep.subr.mxu0 0.0
      %3240 = vmatpush1.msra.mxu0 %v3130
      %3241 = vmatprep.subr.mxu0 0.0
      %3242 = vmatpush2.msra.mxu0 0.0
      %3243 = vmatprep.subr.mxu0 0.0
      %3244 = vmatpush2.msra.mxu0 0.0
      %3245 = vmatprep.subr.mxu0 0.0
      %3246 = vmatpush2.msra.mxu0 0.0
      %3247 = vmatprep.subr.mxu0 0.0
      %3248 = vmatpush2.msra.mxu0 0.0
      %3249 = vmatprep.subr.mxu0 0.0
      %3250 = vmatpush2.msra.mxu0 0.0
      %3251 = vmatprep.subr.mxu0 0.0
      %3252 = vmatpush2.msra.mxu0 0.0
      %3253 = vmatprep.subr.mxu0 0.0
      %3254 = vmatpush2.msra.mxu0 0.0
      %3255 = vmatprep.subr.mxu0 0.0
      %3256 = vmatpush2.msra.mxu0 0.0
      %3257 = vmatprep.subr.mxu0 0.0
      %3258 = vmatpush2.msra.mxu0 0.0
      %3259 = vmatprep.subr.mxu0 0.0
      %3260 = vmatpush2.msra.mxu0 0.0
      %3261 = vmatprep.subr.mxu0 0.0
      %3262 = vmatpush2.msra.mxu0 0.0
      %3263 = vmatprep.subr.mxu0 0.0
      %3264 = vmatpush2.msra.mxu0 0.0
      %3265 = vmatprep.subr.mxu0 0.0
      %3266 = vmatpush2.msra.mxu0 0.0
      %3267 = vmatprep.subr.mxu0 0.0
      %3268 = vmatpush2.msra.mxu0 0.0
      %3269 = vmatprep.subr.mxu0 0.0
      %3270 = vmatpush2.msra.mxu0 0.0
      %3271 = vmatprep.subr.mxu0 0.0
      %3272 = vmatpush2.msra.mxu0 0.0
      %3273 = vmatprep.mubr.f32.mxu0 0.0
      %3274 = vmatmul.mubr.f32.gmra.mxu0 %v3136
      %v3275 = vpop.f32.mrf.mxu0
      %v3276 = vadd.f32 0.0, %v3275
      %v3277 = vpop.f32.mrf.mxu0
      %3278 = vdwg.mxu0
      %v3279 = vadd.f32 %v3120, %v3205
      %v3280 = vadd.f32 %v3121, %v3207
      %v3281 = vadd.f32 %v3122, %v3276
      %3282 = vrot.lane.b32.xlu0 %v2021, 64
      %v3283 = vpop.permute.xlu0 %3282
      %3284 = vrot.lane.b32.xlu0 %v2022, 90
      %v3285 = vpop.permute.xlu0 %3284
      %3286 = vrot.lane.b32.xlu0 %v2023, 90
      %v3287 = vpop.permute.xlu0 %3286
      %3288 = vrot.lane.b32.xlu0 %v2024, 90
      %v3289 = vpop.permute.xlu0 %3288
      %v3290 = vsel %vm1810, %v3285, %v3287
      %v3291 = vsel %vm1810, %v3287, %v3289
      %v3295 = vsel %vm555, %v3283, 0
      %3297 = vmatprep.subr.mxu0 0.0
      %3298 = vmatpush1.msra.mxu0 0.0
      %3299 = vmatprep.subr.mxu0 0.0
      %3300 = vmatpush1.msra.mxu0 0.0
      %3301 = vmatprep.subr.mxu0 0.0
      %3302 = vmatpush1.msra.mxu0 0.0
      %3303 = vmatprep.subr.mxu0 0.0
      %3304 = vmatpush1.msra.mxu0 0.0
      %3305 = vmatprep.subr.mxu0 0.0
      %3306 = vmatpush1.msra.mxu0 0.0
      %3307 = vmatprep.subr.mxu0 0.0
      %3308 = vmatpush1.msra.mxu0 0.0
      %3309 = vmatprep.subr.mxu0 0.0
      %3310 = vmatpush1.msra.mxu0 0.0
      %3311 = vmatprep.subr.mxu0 0.0
      %3312 = vmatpush1.msra.mxu0 0.0
      %3313 = vmatprep.subr.mxu0 0.0
      %3314 = vmatpush1.msra.mxu0 0.0
      %3315 = vmatprep.subr.mxu0 0.0
      %3316 = vmatpush1.msra.mxu0 0.0
      %3317 = vmatprep.subr.mxu0 0.0
      %3318 = vmatpush1.msra.mxu0 0.0
      %3319 = vmatprep.subr.mxu0 0.0
      %3320 = vmatpush1.msra.mxu0 0.0
      %3321 = vmatprep.subr.mxu0 0.0
      %3322 = vmatpush1.msra.mxu0 0.0
      %3323 = vmatprep.subr.mxu0 0.0
      %3324 = vmatpush1.msra.mxu0 0.0
      %3325 = vmatprep.subr.mxu0 0.0
      %3326 = vmatpush1.msra.mxu0 0.0
      %3327 = vmatprep.subr.mxu0 %v3291
      %3328 = vmatpush1.msra.mxu0 %v3290
      %3329 = vmatprep.subr.mxu0 0.0
      %3330 = vmatpush2.msra.mxu0 0.0
      %3331 = vmatprep.subr.mxu0 0.0
      %3332 = vmatpush2.msra.mxu0 0.0
      %3333 = vmatprep.subr.mxu0 0.0
      %3334 = vmatpush2.msra.mxu0 0.0
      %3335 = vmatprep.subr.mxu0 0.0
      %3336 = vmatpush2.msra.mxu0 0.0
      %3337 = vmatprep.subr.mxu0 0.0
      %3338 = vmatpush2.msra.mxu0 0.0
      %3339 = vmatprep.subr.mxu0 0.0
      %3340 = vmatpush2.msra.mxu0 0.0
      %3341 = vmatprep.subr.mxu0 0.0
      %3342 = vmatpush2.msra.mxu0 0.0
      %3343 = vmatprep.subr.mxu0 0.0
      %3344 = vmatpush2.msra.mxu0 0.0
      %3345 = vmatprep.subr.mxu0 0.0
      %3346 = vmatpush2.msra.mxu0 0.0
      %3347 = vmatprep.subr.mxu0 0.0
      %3348 = vmatpush2.msra.mxu0 0.0
      %3349 = vmatprep.subr.mxu0 0.0
      %3350 = vmatpush2.msra.mxu0 0.0
      %3351 = vmatprep.subr.mxu0 0.0
      %3352 = vmatpush2.msra.mxu0 0.0
      %3353 = vmatprep.subr.mxu0 0.0
      %3354 = vmatpush2.msra.mxu0 0.0
      %3355 = vmatprep.subr.mxu0 0.0
      %3356 = vmatpush2.msra.mxu0 0.0
      %3357 = vmatprep.subr.mxu0 0.0
      %3358 = vmatpush2.msra.mxu0 0.0
      %3359 = vmatprep.subr.mxu0 0.0
      %3360 = vmatpush2.msra.mxu0 0.0
      %3361 = vmatprep.mubr.f32.mxu0 0.0
      %3362 = vmatmul.mubr.f32.gmra.mxu0 %v3295
      %v3363 = vpop.f32.mrf.mxu0
      %v3364 = vadd.f32 0.0, %v3363
      %v3365 = vpop.f32.mrf.mxu0
      %v3366 = vadd.f32 0.0, %v3365
      %3367 = vdwg.mxu0
      %3368 = vmatprep.subr.mxu0 0.0
      %3369 = vmatpush1.msra.mxu0 0.0
      %3370 = vmatprep.subr.mxu0 0.0
      %3371 = vmatpush1.msra.mxu0 0.0
      %3372 = vmatprep.subr.mxu0 0.0
      %3373 = vmatpush1.msra.mxu0 0.0
      %3374 = vmatprep.subr.mxu0 0.0
      %3375 = vmatpush1.msra.mxu0 0.0
      %3376 = vmatprep.subr.mxu0 0.0
      %3377 = vmatpush1.msra.mxu0 0.0
      %3378 = vmatprep.subr.mxu0 0.0
      %3379 = vmatpush1.msra.mxu0 0.0
      %3380 = vmatprep.subr.mxu0 0.0
      %3381 = vmatpush1.msra.mxu0 0.0
      %3382 = vmatprep.subr.mxu0 0.0
      %3383 = vmatpush1.msra.mxu0 0.0
      %3384 = vmatprep.subr.mxu0 0.0
      %3385 = vmatpush1.msra.mxu0 0.0
      %3386 = vmatprep.subr.mxu0 0.0
      %3387 = vmatpush1.msra.mxu0 0.0
      %3388 = vmatprep.subr.mxu0 0.0
      %3389 = vmatpush1.msra.mxu0 0.0
      %3390 = vmatprep.subr.mxu0 0.0
      %3391 = vmatpush1.msra.mxu0 0.0
      %3392 = vmatprep.subr.mxu0 0.0
      %3393 = vmatpush1.msra.mxu0 0.0
      %3394 = vmatprep.subr.mxu0 0.0
      %3395 = vmatpush1.msra.mxu0 0.0
      %3396 = vmatprep.subr.mxu0 0.0
      %3397 = vmatpush1.msra.mxu0 0.0
      %3398 = vmatprep.subr.mxu0 0.0
      %3399 = vmatpush1.msra.mxu0 %v3289
      %3400 = vmatprep.subr.mxu0 0.0
      %3401 = vmatpush2.msra.mxu0 0.0
      %3402 = vmatprep.subr.mxu0 0.0
      %3403 = vmatpush2.msra.mxu0 0.0
      %3404 = vmatprep.subr.mxu0 0.0
      %3405 = vmatpush2.msra.mxu0 0.0
      %3406 = vmatprep.subr.mxu0 0.0
      %3407 = vmatpush2.msra.mxu0 0.0
      %3408 = vmatprep.subr.mxu0 0.0
      %3409 = vmatpush2.msra.mxu0 0.0
      %3410 = vmatprep.subr.mxu0 0.0
      %3411 = vmatpush2.msra.mxu0 0.0
      %3412 = vmatprep.subr.mxu0 0.0
      %3413 = vmatpush2.msra.mxu0 0.0
      %3414 = vmatprep.subr.mxu0 0.0
      %3415 = vmatpush2.msra.mxu0 0.0
      %3416 = vmatprep.subr.mxu0 0.0
      %3417 = vmatpush2.msra.mxu0 0.0
      %3418 = vmatprep.subr.mxu0 0.0
      %3419 = vmatpush2.msra.mxu0 0.0
      %3420 = vmatprep.subr.mxu0 0.0
      %3421 = vmatpush2.msra.mxu0 0.0
      %3422 = vmatprep.subr.mxu0 0.0
      %3423 = vmatpush2.msra.mxu0 0.0
      %3424 = vmatprep.subr.mxu0 0.0
      %3425 = vmatpush2.msra.mxu0 0.0
      %3426 = vmatprep.subr.mxu0 0.0
      %3427 = vmatpush2.msra.mxu0 0.0
      %3428 = vmatprep.subr.mxu0 0.0
      %3429 = vmatpush2.msra.mxu0 0.0
      %3430 = vmatprep.subr.mxu0 0.0
      %3431 = vmatpush2.msra.mxu0 0.0
      %3432 = vmatprep.mubr.f32.mxu0 0.0
      %3433 = vmatmul.mubr.f32.gmra.mxu0 %v3295
      %v3434 = vpop.f32.mrf.mxu0
      %v3435 = vadd.f32 0.0, %v3434
      %v3436 = vpop.f32.mrf.mxu0
      %3437 = vdwg.mxu0
      %v3438 = vadd.f32 %v3279, %v3364
      %v3439 = vadd.f32 %v3280, %v3366
      %v3440 = vadd.f32 %v3281, %v3435
      %v3441 = vld [vmem:[%s7] sm:$0xff]
      %3443 = vset.pattern.permute.xlu0 0
      %3444 = vperm.xlu0 %3443, %v3441
      %v3445 = vpop.permute.xlu0 %3444
      %v3447 = vmul.f32 %v3438, %v3445
      %v3448 = vmul.f32 %v3439, %v3445
      %v3449 = vmul.f32 %v3440, %v3445
      %v3450 = vld [vmem:[%s8] sm:$0xff]
      %3452 = vset.pattern.permute.xlu0 0
      %3453 = vperm.xlu0 %3452, %v3450
      %v3454 = vpop.permute.xlu0 %3453
      %v3456 = vadd.f32 %v3447, %v3454
      %v3457 = vadd.f32 %v3448, %v3454
      %v3458 = vadd.f32 %v3449, %v3454
      %v3459 = vmax.f32 %v3456, 0.0
      %v3460 = vmax.f32 %v3457, 0.0
      %v3461 = vmax.f32 %v3458, 0.0
      %v3462 = vmul.f32 %v3459, %v1987
      %v3463 = vmul.f32 %v3460, %v1991
      %v3464 = vmul.f32 %v3461, %v1995
      %3468 = vrot.lane.b32.xlu0 %v3462, 19
      %v3469 = vpop.permute.xlu0 %3468
      %3470 = vrot.lane.b32.xlu0 %v3463, 19
      %v3471 = vpop.permute.xlu0 %3470
      %3472 = vrot.lane.b32.xlu0 %v3464, 19
      %v3473 = vpop.permute.xlu0 %3472
      %v3474 = vsel %vm482, %v3469, %v3471
      %v3475 = vsel %vm482, %v3471, %v3473
      %3479 = vst.msk [vmem:[#allocation4] sm:$0xff] %vm2016, %v3469
      %3480 = vst [vmem:[#allocation4 + $0x8] sm:$0xff] %v3474
      %3481 = vst.msk [vmem:[#allocation4 + $0x10] sm:$0xff] %vm2019, %v3475
      %v3482 = vld [vmem:[%s9] sm:$0xff]
      %v3483 = vld [vmem:[#allocation4] sm:$0xff]
      %v3484 = vld [vmem:[#allocation4 + $0x8] sm:$0xff]
      %v3485 = vld [vmem:[#allocation4 + $0x10] sm:$0xff]
      %3487 = vrot.lane.b32.xlu0 %v3482, 120
      %v3488 = vpop.permute.xlu0 %3487
      %3492 = vrot.lane.b32.xlu0 %v3483, 127
      %v3493 = vpop.permute.xlu0 %3492
      %3494 = vrot.lane.b32.xlu0 %v3484, 127
      %v3495 = vpop.permute.xlu0 %3494
      %3496 = vrot.lane.b32.xlu0 %v3485, 127
      %v3497 = vpop.permute.xlu0 %3496
      %v3498 = vsel %vm549, %v3493, %v3495
      %v3499 = vsel %vm549, %v3495, %v3497
      %v3503 = vsel %vm555, %v3488, 0
      %3505 = vmatprep.subr.mxu0 0.0
      %3506 = vmatpush1.msra.mxu0 0.0
      %3507 = vmatprep.subr.mxu0 0.0
      %3508 = vmatpush1.msra.mxu0 0.0
      %3509 = vmatprep.subr.mxu0 0.0
      %3510 = vmatpush1.msra.mxu0 0.0
      %3511 = vmatprep.subr.mxu0 0.0
      %3512 = vmatpush1.msra.mxu0 0.0
      %3513 = vmatprep.subr.mxu0 0.0
      %3514 = vmatpush1.msra.mxu0 0.0
      %3515 = vmatprep.subr.mxu0 0.0
      %3516 = vmatpush1.msra.mxu0 0.0
      %3517 = vmatprep.subr.mxu0 0.0
      %3518 = vmatpush1.msra.mxu0 0.0
      %3519 = vmatprep.subr.mxu0 0.0
      %3520 = vmatpush1.msra.mxu0 0.0
      %3521 = vmatprep.subr.mxu0 0.0
      %3522 = vmatpush1.msra.mxu0 0.0
      %3523 = vmatprep.subr.mxu0 0.0
      %3524 = vmatpush1.msra.mxu0 0.0
      %3525 = vmatprep.subr.mxu0 0.0
      %3526 = vmatpush1.msra.mxu0 0.0
      %3527 = vmatprep.subr.mxu0 0.0
      %3528 = vmatpush1.msra.mxu0 0.0
      %3529 = vmatprep.subr.mxu0 0.0
      %3530 = vmatpush1.msra.mxu0 0.0
      %3531 = vmatprep.subr.mxu0 0.0
      %3532 = vmatpush1.msra.mxu0 0.0
      %3533 = vmatprep.subr.mxu0 0.0
      %3534 = vmatpush1.msra.mxu0 0.0
      %3535 = vmatprep.subr.mxu0 %v3499
      %3536 = vmatpush1.msra.mxu0 %v3498
      %3537 = vmatprep.subr.mxu0 0.0
      %3538 = vmatpush2.msra.mxu0 0.0
      %3539 = vmatprep.subr.mxu0 0.0
      %3540 = vmatpush2.msra.mxu0 0.0
      %3541 = vmatprep.subr.mxu0 0.0
      %3542 = vmatpush2.msra.mxu0 0.0
      %3543 = vmatprep.subr.mxu0 0.0
      %3544 = vmatpush2.msra.mxu0 0.0
      %3545 = vmatprep.subr.mxu0 0.0
      %3546 = vmatpush2.msra.mxu0 0.0
      %3547 = vmatprep.subr.mxu0 0.0
      %3548 = vmatpush2.msra.mxu0 0.0
      %3549 = vmatprep.subr.mxu0 0.0
      %3550 = vmatpush2.msra.mxu0 0.0
      %3551 = vmatprep.subr.mxu0 0.0
      %3552 = vmatpush2.msra.mxu0 0.0
      %3553 = vmatprep.subr.mxu0 0.0
      %3554 = vmatpush2.msra.mxu0 0.0
      %3555 = vmatprep.subr.mxu0 0.0
      %3556 = vmatpush2.msra.mxu0 0.0
      %3557 = vmatprep.subr.mxu0 0.0
      %3558 = vmatpush2.msra.mxu0 0.0
      %3559 = vmatprep.subr.mxu0 0.0
      %3560 = vmatpush2.msra.mxu0 0.0
      %3561 = vmatprep.subr.mxu0 0.0
      %3562 = vmatpush2.msra.mxu0 0.0
      %3563 = vmatprep.subr.mxu0 0.0
      %3564 = vmatpush2.msra.mxu0 0.0
      %3565 = vmatprep.subr.mxu0 0.0
      %3566 = vmatpush2.msra.mxu0 0.0
      %3567 = vmatprep.subr.mxu0 0.0
      %3568 = vmatpush2.msra.mxu0 0.0
      %3569 = vmatprep.mubr.f32.mxu0 0.0
      %3570 = vmatmul.mubr.f32.gmra.mxu0 %v3503
      %v3571 = vpop.f32.mrf.mxu0
      %v3572 = vadd.f32 0.0, %v3571
      %v3573 = vpop.f32.mrf.mxu0
      %v3574 = vadd.f32 0.0, %v3573
      %3575 = vdwg.mxu0
      %3576 = vmatprep.subr.mxu0 0.0
      %3577 = vmatpush1.msra.mxu0 0.0
      %3578 = vmatprep.subr.mxu0 0.0
      %3579 = vmatpush1.msra.mxu0 0.0
      %3580 = vmatprep.subr.mxu0 0.0
      %3581 = vmatpush1.msra.mxu0 0.0
      %3582 = vmatprep.subr.mxu0 0.0
      %3583 = vmatpush1.msra.mxu0 0.0
      %3584 = vmatprep.subr.mxu0 0.0
      %3585 = vmatpush1.msra.mxu0 0.0
      %3586 = vmatprep.subr.mxu0 0.0
      %3587 = vmatpush1.msra.mxu0 0.0
      %3588 = vmatprep.subr.mxu0 0.0
      %3589 = vmatpush1.msra.mxu0 0.0
      %3590 = vmatprep.subr.mxu0 0.0
      %3591 = vmatpush1.msra.mxu0 0.0
      %3592 = vmatprep.subr.mxu0 0.0
      %3593 = vmatpush1.msra.mxu0 0.0
      %3594 = vmatprep.subr.mxu0 0.0
      %3595 = vmatpush1.msra.mxu0 0.0
      %3596 = vmatprep.subr.mxu0 0.0
      %3597 = vmatpush1.msra.mxu0 0.0
      %3598 = vmatprep.subr.mxu0 0.0
      %3599 = vmatpush1.msra.mxu0 0.0
      %3600 = vmatprep.subr.mxu0 0.0
      %3601 = vmatpush1.msra.mxu0 0.0
      %3602 = vmatprep.subr.mxu0 0.0
      %3603 = vmatpush1.msra.mxu0 0.0
      %3604 = vmatprep.subr.mxu0 0.0
      %3605 = vmatpush1.msra.mxu0 0.0
      %3606 = vmatprep.subr.mxu0 0.0
      %3607 = vmatpush1.msra.mxu0 %v3497
      %3608 = vmatprep.subr.mxu0 0.0
      %3609 = vmatpush2.msra.mxu0 0.0
      %3610 = vmatprep.subr.mxu0 0.0
      %3611 = vmatpush2.msra.mxu0 0.0
      %3612 = vmatprep.subr.mxu0 0.0
      %3613 = vmatpush2.msra.mxu0 0.0
      %3614 = vmatprep.subr.mxu0 0.0
      %3615 = vmatpush2.msra.mxu0 0.0
      %3616 = vmatprep.subr.mxu0 0.0
      %3617 = vmatpush2.msra.mxu0 0.0
      %3618 = vmatprep.subr.mxu0 0.0
      %3619 = vmatpush2.msra.mxu0 0.0
      %3620 = vmatprep.subr.mxu0 0.0
      %3621 = vmatpush2.msra.mxu0 0.0
      %3622 = vmatprep.subr.mxu0 0.0
      %3623 = vmatpush2.msra.mxu0 0.0
      %3624 = vmatprep.subr.mxu0 0.0
      %3625 = vmatpush2.msra.mxu0 0.0
      %3626 = vmatprep.subr.mxu0 0.0
      %3627 = vmatpush2.msra.mxu0 0.0
      %3628 = vmatprep.subr.mxu0 0.0
      %3629 = vmatpush2.msra.mxu0 0.0
      %3630 = vmatprep.subr.mxu0 0.0
      %3631 = vmatpush2.msra.mxu0 0.0
      %3632 = vmatprep.subr.mxu0 0.0
      %3633 = vmatpush2.msra.mxu0 0.0
      %3634 = vmatprep.subr.mxu0 0.0
      %3635 = vmatpush2.msra.mxu0 0.0
      %3636 = vmatprep.subr.mxu0 0.0
      %3637 = vmatpush2.msra.mxu0 0.0
      %3638 = vmatprep.subr.mxu0 0.0
      %3639 = vmatpush2.msra.mxu0 0.0
      %3640 = vmatprep.mubr.f32.mxu0 0.0
      %3641 = vmatmul.mubr.f32.gmra.mxu0 %v3503
      %v3642 = vpop.f32.mrf.mxu0
      %v3643 = vadd.f32 0.0, %v3642
      %v3644 = vpop.f32.mrf.mxu0
      %3645 = vdwg.mxu0
      %v3646 = vsel %vm555, %v3482, 0
      %3648 = vmatprep.subr.mxu0 0.0
      %3649 = vmatpush1.msra.mxu0 0.0
      %3650 = vmatprep.subr.mxu0 0.0
      %3651 = vmatpush1.msra.mxu0 0.0
      %3652 = vmatprep.subr.mxu0 0.0
      %3653 = vmatpush1.msra.mxu0 0.0
      %3654 = vmatprep.subr.mxu0 0.0
      %3655 = vmatpush1.msra.mxu0 0.0
      %3656 = vmatprep.subr.mxu0 0.0
      %3657 = vmatpush1.msra.mxu0 0.0
      %3658 = vmatprep.subr.mxu0 0.0
      %3659 = vmatpush1.msra.mxu0 0.0
      %3660 = vmatprep.subr.mxu0 0.0
      %3661 = vmatpush1.msra.mxu0 0.0
      %3662 = vmatprep.subr.mxu0 0.0
      %3663 = vmatpush1.msra.mxu0 0.0
      %3664 = vmatprep.subr.mxu0 0.0
      %3665 = vmatpush1.msra.mxu0 0.0
      %3666 = vmatprep.subr.mxu0 0.0
      %3667 = vmatpush1.msra.mxu0 0.0
      %3668 = vmatprep.subr.mxu0 0.0
      %3669 = vmatpush1.msra.mxu0 0.0
      %3670 = vmatprep.subr.mxu0 0.0
      %3671 = vmatpush1.msra.mxu0 0.0
      %3672 = vmatprep.subr.mxu0 0.0
      %3673 = vmatpush1.msra.mxu0 0.0
      %3674 = vmatprep.subr.mxu0 0.0
      %3675 = vmatpush1.msra.mxu0 0.0
      %3676 = vmatprep.subr.mxu0 0.0
      %3677 = vmatpush1.msra.mxu0 0.0
      %3678 = vmatprep.subr.mxu0 %v3484
      %3679 = vmatpush1.msra.mxu0 %v3483
      %3680 = vmatprep.subr.mxu0 0.0
      %3681 = vmatpush2.msra.mxu0 0.0
      %3682 = vmatprep.subr.mxu0 0.0
      %3683 = vmatpush2.msra.mxu0 0.0
      %3684 = vmatprep.subr.mxu0 0.0
      %3685 = vmatpush2.msra.mxu0 0.0
      %3686 = vmatprep.subr.mxu0 0.0
      %3687 = vmatpush2.msra.mxu0 0.0
      %3688 = vmatprep.subr.mxu0 0.0
      %3689 = vmatpush2.msra.mxu0 0.0
      %3690 = vmatprep.subr.mxu0 0.0
      %3691 = vmatpush2.msra.mxu0 0.0
      %3692 = vmatprep.subr.mxu0 0.0
      %3693 = vmatpush2.msra.mxu0 0.0
      %3694 = vmatprep.subr.mxu0 0.0
      %3695 = vmatpush2.msra.mxu0 0.0
      %3696 = vmatprep.subr.mxu0 0.0
      %3697 = vmatpush2.msra.mxu0 0.0
      %3698 = vmatprep.subr.mxu0 0.0
      %3699 = vmatpush2.msra.mxu0 0.0
      %3700 = vmatprep.subr.mxu0 0.0
      %3701 = vmatpush2.msra.mxu0 0.0
      %3702 = vmatprep.subr.mxu0 0.0
      %3703 = vmatpush2.msra.mxu0 0.0
      %3704 = vmatprep.subr.mxu0 0.0
      %3705 = vmatpush2.msra.mxu0 0.0
      %3706 = vmatprep.subr.mxu0 0.0
      %3707 = vmatpush2.msra.mxu0 0.0
      %3708 = vmatprep.subr.mxu0 0.0
      %3709 = vmatpush2.msra.mxu0 0.0
      %3710 = vmatprep.subr.mxu0 0.0
      %3711 = vmatpush2.msra.mxu0 0.0
      %3712 = vmatprep.mubr.f32.mxu0 0.0
      %3713 = vmatmul.mubr.f32.gmra.mxu0 %v3646
      %v3714 = vpop.f32.mrf.mxu0
      %v3715 = vadd.f32 %v3572, %v3714
      %v3716 = vpop.f32.mrf.mxu0
      %v3717 = vadd.f32 %v3574, %v3716
      %3718 = vdwg.mxu0
      %3719 = vmatprep.subr.mxu0 0.0
      %3720 = vmatpush1.msra.mxu0 0.0
      %3721 = vmatprep.subr.mxu0 0.0
      %3722 = vmatpush1.msra.mxu0 0.0
      %3723 = vmatprep.subr.mxu0 0.0
      %3724 = vmatpush1.msra.mxu0 0.0
      %3725 = vmatprep.subr.mxu0 0.0
      %3726 = vmatpush1.msra.mxu0 0.0
      %3727 = vmatprep.subr.mxu0 0.0
      %3728 = vmatpush1.msra.mxu0 0.0
      %3729 = vmatprep.subr.mxu0 0.0
      %3730 = vmatpush1.msra.mxu0 0.0
      %3731 = vmatprep.subr.mxu0 0.0
      %3732 = vmatpush1.msra.mxu0 0.0
      %3733 = vmatprep.subr.mxu0 0.0
      %3734 = vmatpush1.msra.mxu0 0.0
      %3735 = vmatprep.subr.mxu0 0.0
      %3736 = vmatpush1.msra.mxu0 0.0
      %3737 = vmatprep.subr.mxu0 0.0
      %3738 = vmatpush1.msra.mxu0 0.0
      %3739 = vmatprep.subr.mxu0 0.0
      %3740 = vmatpush1.msra.mxu0 0.0
      %3741 = vmatprep.subr.mxu0 0.0
      %3742 = vmatpush1.msra.mxu0 0.0
      %3743 = vmatprep.subr.mxu0 0.0
      %3744 = vmatpush1.msra.mxu0 0.0
      %3745 = vmatprep.subr.mxu0 0.0
      %3746 = vmatpush1.msra.mxu0 0.0
      %3747 = vmatprep.subr.mxu0 0.0
      %3748 = vmatpush1.msra.mxu0 0.0
      %3749 = vmatprep.subr.mxu0 0.0
      %3750 = vmatpush1.msra.mxu0 %v3485
      %3751 = vmatprep.subr.mxu0 0.0
      %3752 = vmatpush2.msra.mxu0 0.0
      %3753 = vmatprep.subr.mxu0 0.0
      %3754 = vmatpush2.msra.mxu0 0.0
      %3755 = vmatprep.subr.mxu0 0.0
      %3756 = vmatpush2.msra.mxu0 0.0
      %3757 = vmatprep.subr.mxu0 0.0
      %3758 = vmatpush2.msra.mxu0 0.0
      %3759 = vmatprep.subr.mxu0 0.0
      %3760 = vmatpush2.msra.mxu0 0.0
      %3761 = vmatprep.subr.mxu0 0.0
      %3762 = vmatpush2.msra.mxu0 0.0
      %3763 = vmatprep.subr.mxu0 0.0
      %3764 = vmatpush2.msra.mxu0 0.0
      %3765 = vmatprep.subr.mxu0 0.0
      %3766 = vmatpush2.msra.mxu0 0.0
      %3767 = vmatprep.subr.mxu0 0.0
      %3768 = vmatpush2.msra.mxu0 0.0
      %3769 = vmatprep.subr.mxu0 0.0
      %3770 = vmatpush2.msra.mxu0 0.0
      %3771 = vmatprep.subr.mxu0 0.0
      %3772 = vmatpush2.msra.mxu0 0.0
      %3773 = vmatprep.subr.mxu0 0.0
      %3774 = vmatpush2.msra.mxu0 0.0
      %3775 = vmatprep.subr.mxu0 0.0
      %3776 = vmatpush2.msra.mxu0 0.0
      %3777 = vmatprep.subr.mxu0 0.0
      %3778 = vmatpush2.msra.mxu0 0.0
      %3779 = vmatprep.subr.mxu0 0.0
      %3780 = vmatpush2.msra.mxu0 0.0
      %3781 = vmatprep.subr.mxu0 0.0
      %3782 = vmatpush2.msra.mxu0 0.0
      %3783 = vmatprep.mubr.f32.mxu0 0.0
      %3784 = vmatmul.mubr.f32.gmra.mxu0 %v3646
      %v3785 = vpop.f32.mrf.mxu0
      %v3786 = vadd.f32 %v3643, %v3785
      %v3787 = vpop.f32.mrf.mxu0
      %3788 = vdwg.mxu0
      %3789 = vrot.lane.b32.xlu0 %v3482, 112
      %v3790 = vpop.permute.xlu0 %3789
      %3791 = vrot.lane.b32.xlu0 %v3483, 126
      %v3792 = vpop.permute.xlu0 %3791
      %3793 = vrot.lane.b32.xlu0 %v3484, 126
      %v3794 = vpop.permute.xlu0 %3793
      %3795 = vrot.lane.b32.xlu0 %v3485, 126
      %v3796 = vpop.permute.xlu0 %3795
      %v3797 = vsel %vm850, %v3792, %v3794
      %v3798 = vsel %vm850, %v3794, %v3796
      %v3802 = vsel %vm555, %v3790, 0
      %3804 = vmatprep.subr.mxu0 0.0
      %3805 = vmatpush1.msra.mxu0 0.0
      %3806 = vmatprep.subr.mxu0 0.0
      %3807 = vmatpush1.msra.mxu0 0.0
      %3808 = vmatprep.subr.mxu0 0.0
      %3809 = vmatpush1.msra.mxu0 0.0
      %3810 = vmatprep.subr.mxu0 0.0
      %3811 = vmatpush1.msra.mxu0 0.0
      %3812 = vmatprep.subr.mxu0 0.0
      %3813 = vmatpush1.msra.mxu0 0.0
      %3814 = vmatprep.subr.mxu0 0.0
      %3815 = vmatpush1.msra.mxu0 0.0
      %3816 = vmatprep.subr.mxu0 0.0
      %3817 = vmatpush1.msra.mxu0 0.0
      %3818 = vmatprep.subr.mxu0 0.0
      %3819 = vmatpush1.msra.mxu0 0.0
      %3820 = vmatprep.subr.mxu0 0.0
      %3821 = vmatpush1.msra.mxu0 0.0
      %3822 = vmatprep.subr.mxu0 0.0
      %3823 = vmatpush1.msra.mxu0 0.0
      %3824 = vmatprep.subr.mxu0 0.0
      %3825 = vmatpush1.msra.mxu0 0.0
      %3826 = vmatprep.subr.mxu0 0.0
      %3827 = vmatpush1.msra.mxu0 0.0
      %3828 = vmatprep.subr.mxu0 0.0
      %3829 = vmatpush1.msra.mxu0 0.0
      %3830 = vmatprep.subr.mxu0 0.0
      %3831 = vmatpush1.msra.mxu0 0.0
      %3832 = vmatprep.subr.mxu0 0.0
      %3833 = vmatpush1.msra.mxu0 0.0
      %3834 = vmatprep.subr.mxu0 %v3798
      %3835 = vmatpush1.msra.mxu0 %v3797
      %3836 = vmatprep.subr.mxu0 0.0
      %3837 = vmatpush2.msra.mxu0 0.0
      %3838 = vmatprep.subr.mxu0 0.0
      %3839 = vmatpush2.msra.mxu0 0.0
      %3840 = vmatprep.subr.mxu0 0.0
      %3841 = vmatpush2.msra.mxu0 0.0
      %3842 = vmatprep.subr.mxu0 0.0
      %3843 = vmatpush2.msra.mxu0 0.0
      %3844 = vmatprep.subr.mxu0 0.0
      %3845 = vmatpush2.msra.mxu0 0.0
      %3846 = vmatprep.subr.mxu0 0.0
      %3847 = vmatpush2.msra.mxu0 0.0
      %3848 = vmatprep.subr.mxu0 0.0
      %3849 = vmatpush2.msra.mxu0 0.0
      %3850 = vmatprep.subr.mxu0 0.0
      %3851 = vmatpush2.msra.mxu0 0.0
      %3852 = vmatprep.subr.mxu0 0.0
      %3853 = vmatpush2.msra.mxu0 0.0
      %3854 = vmatprep.subr.mxu0 0.0
      %3855 = vmatpush2.msra.mxu0 0.0
      %3856 = vmatprep.subr.mxu0 0.0
      %3857 = vmatpush2.msra.mxu0 0.0
      %3858 = vmatprep.subr.mxu0 0.0
      %3859 = vmatpush2.msra.mxu0 0.0
      %3860 = vmatprep.subr.mxu0 0.0
      %3861 = vmatpush2.msra.mxu0 0.0
      %3862 = vmatprep.subr.mxu0 0.0
      %3863 = vmatpush2.msra.mxu0 0.0
      %3864 = vmatprep.subr.mxu0 0.0
      %3865 = vmatpush2.msra.mxu0 0.0
      %3866 = vmatprep.subr.mxu0 0.0
      %3867 = vmatpush2.msra.mxu0 0.0
      %3868 = vmatprep.mubr.f32.mxu0 0.0
      %3869 = vmatmul.mubr.f32.gmra.mxu0 %v3802
      %v3870 = vpop.f32.mrf.mxu0
      %v3871 = vadd.f32 0.0, %v3870
      %v3872 = vpop.f32.mrf.mxu0
      %v3873 = vadd.f32 0.0, %v3872
      %3874 = vdwg.mxu0
      %3875 = vmatprep.subr.mxu0 0.0
      %3876 = vmatpush1.msra.mxu0 0.0
      %3877 = vmatprep.subr.mxu0 0.0
      %3878 = vmatpush1.msra.mxu0 0.0
      %3879 = vmatprep.subr.mxu0 0.0
      %3880 = vmatpush1.msra.mxu0 0.0
      %3881 = vmatprep.subr.mxu0 0.0
      %3882 = vmatpush1.msra.mxu0 0.0
      %3883 = vmatprep.subr.mxu0 0.0
      %3884 = vmatpush1.msra.mxu0 0.0
      %3885 = vmatprep.subr.mxu0 0.0
      %3886 = vmatpush1.msra.mxu0 0.0
      %3887 = vmatprep.subr.mxu0 0.0
      %3888 = vmatpush1.msra.mxu0 0.0
      %3889 = vmatprep.subr.mxu0 0.0
      %3890 = vmatpush1.msra.mxu0 0.0
      %3891 = vmatprep.subr.mxu0 0.0
      %3892 = vmatpush1.msra.mxu0 0.0
      %3893 = vmatprep.subr.mxu0 0.0
      %3894 = vmatpush1.msra.mxu0 0.0
      %3895 = vmatprep.subr.mxu0 0.0
      %3896 = vmatpush1.msra.mxu0 0.0
      %3897 = vmatprep.subr.mxu0 0.0
      %3898 = vmatpush1.msra.mxu0 0.0
      %3899 = vmatprep.subr.mxu0 0.0
      %3900 = vmatpush1.msra.mxu0 0.0
      %3901 = vmatprep.subr.mxu0 0.0
      %3902 = vmatpush1.msra.mxu0 0.0
      %3903 = vmatprep.subr.mxu0 0.0
      %3904 = vmatpush1.msra.mxu0 0.0
      %3905 = vmatprep.subr.mxu0 0.0
      %3906 = vmatpush1.msra.mxu0 %v3796
      %3907 = vmatprep.subr.mxu0 0.0
      %3908 = vmatpush2.msra.mxu0 0.0
      %3909 = vmatprep.subr.mxu0 0.0
      %3910 = vmatpush2.msra.mxu0 0.0
      %3911 = vmatprep.subr.mxu0 0.0
      %3912 = vmatpush2.msra.mxu0 0.0
      %3913 = vmatprep.subr.mxu0 0.0
      %3914 = vmatpush2.msra.mxu0 0.0
      %3915 = vmatprep.subr.mxu0 0.0
      %3916 = vmatpush2.msra.mxu0 0.0
      %3917 = vmatprep.subr.mxu0 0.0
      %3918 = vmatpush2.msra.mxu0 0.0
      %3919 = vmatprep.subr.mxu0 0.0
      %3920 = vmatpush2.msra.mxu0 0.0
      %3921 = vmatprep.subr.mxu0 0.0
      %3922 = vmatpush2.msra.mxu0 0.0
      %3923 = vmatprep.subr.mxu0 0.0
      %3924 = vmatpush2.msra.mxu0 0.0
      %3925 = vmatprep.subr.mxu0 0.0
      %3926 = vmatpush2.msra.mxu0 0.0
      %3927 = vmatprep.subr.mxu0 0.0
      %3928 = vmatpush2.msra.mxu0 0.0
      %3929 = vmatprep.subr.mxu0 0.0
      %3930 = vmatpush2.msra.mxu0 0.0
      %3931 = vmatprep.subr.mxu0 0.0
      %3932 = vmatpush2.msra.mxu0 0.0
      %3933 = vmatprep.subr.mxu0 0.0
      %3934 = vmatpush2.msra.mxu0 0.0
      %3935 = vmatprep.subr.mxu0 0.0
      %3936 = vmatpush2.msra.mxu0 0.0
      %3937 = vmatprep.subr.mxu0 0.0
      %3938 = vmatpush2.msra.mxu0 0.0
      %3939 = vmatprep.mubr.f32.mxu0 0.0
      %3940 = vmatmul.mubr.f32.gmra.mxu0 %v3802
      %v3941 = vpop.f32.mrf.mxu0
      %v3942 = vadd.f32 0.0, %v3941
      %v3943 = vpop.f32.mrf.mxu0
      %3944 = vdwg.mxu0
      %v3945 = vadd.f32 %v3715, %v3871
      %v3946 = vadd.f32 %v3717, %v3873
      %v3947 = vadd.f32 %v3786, %v3942
      %3948 = vrot.lane.b32.xlu0 %v3482, 104
      %v3949 = vpop.permute.xlu0 %3948
      %3950 = vrot.lane.b32.xlu0 %v3483, 110
      %v3951 = vpop.permute.xlu0 %3950
      %3952 = vrot.lane.b32.xlu0 %v3484, 110
      %v3953 = vpop.permute.xlu0 %3952
      %3954 = vrot.lane.b32.xlu0 %v3485, 110
      %v3955 = vpop.permute.xlu0 %3954
      %v3956 = vsel %vm1010, %v3951, %v3953
      %v3957 = vsel %vm1010, %v3953, %v3955
      %v3961 = vsel %vm555, %v3949, 0
      %3963 = vmatprep.subr.mxu0 0.0
      %3964 = vmatpush1.msra.mxu0 0.0
      %3965 = vmatprep.subr.mxu0 0.0
      %3966 = vmatpush1.msra.mxu0 0.0
      %3967 = vmatprep.subr.mxu0 0.0
      %3968 = vmatpush1.msra.mxu0 0.0
      %3969 = vmatprep.subr.mxu0 0.0
      %3970 = vmatpush1.msra.mxu0 0.0
      %3971 = vmatprep.subr.mxu0 0.0
      %3972 = vmatpush1.msra.mxu0 0.0
      %3973 = vmatprep.subr.mxu0 0.0
      %3974 = vmatpush1.msra.mxu0 0.0
      %3975 = vmatprep.subr.mxu0 0.0
      %3976 = vmatpush1.msra.mxu0 0.0
      %3977 = vmatprep.subr.mxu0 0.0
      %3978 = vmatpush1.msra.mxu0 0.0
      %3979 = vmatprep.subr.mxu0 0.0
      %3980 = vmatpush1.msra.mxu0 0.0
      %3981 = vmatprep.subr.mxu0 0.0
      %3982 = vmatpush1.msra.mxu0 0.0
      %3983 = vmatprep.subr.mxu0 0.0
      %3984 = vmatpush1.msra.mxu0 0.0
      %3985 = vmatprep.subr.mxu0 0.0
      %3986 = vmatpush1.msra.mxu0 0.0
      %3987 = vmatprep.subr.mxu0 0.0
      %3988 = vmatpush1.msra.mxu0 0.0
      %3989 = vmatprep.subr.mxu0 0.0
      %3990 = vmatpush1.msra.mxu0 0.0
      %3991 = vmatprep.subr.mxu0 0.0
      %3992 = vmatpush1.msra.mxu0 0.0
      %3993 = vmatprep.subr.mxu0 %v3957
      %3994 = vmatpush1.msra.mxu0 %v3956
      %3995 = vmatprep.subr.mxu0 0.0
      %3996 = vmatpush2.msra.mxu0 0.0
      %3997 = vmatprep.subr.mxu0 0.0
      %3998 = vmatpush2.msra.mxu0 0.0
      %3999 = vmatprep.subr.mxu0 0.0
      %4000 = vmatpush2.msra.mxu0 0.0
      %4001 = vmatprep.subr.mxu0 0.0
      %4002 = vmatpush2.msra.mxu0 0.0
      %4003 = vmatprep.subr.mxu0 0.0
      %4004 = vmatpush2.msra.mxu0 0.0
      %4005 = vmatprep.subr.mxu0 0.0
      %4006 = vmatpush2.msra.mxu0 0.0
      %4007 = vmatprep.subr.mxu0 0.0
      %4008 = vmatpush2.msra.mxu0 0.0
      %4009 = vmatprep.subr.mxu0 0.0
      %4010 = vmatpush2.msra.mxu0 0.0
      %4011 = vmatprep.subr.mxu0 0.0
      %4012 = vmatpush2.msra.mxu0 0.0
      %4013 = vmatprep.subr.mxu0 0.0
      %4014 = vmatpush2.msra.mxu0 0.0
      %4015 = vmatprep.subr.mxu0 0.0
      %4016 = vmatpush2.msra.mxu0 0.0
      %4017 = vmatprep.subr.mxu0 0.0
      %4018 = vmatpush2.msra.mxu0 0.0
      %4019 = vmatprep.subr.mxu0 0.0
      %4020 = vmatpush2.msra.mxu0 0.0
      %4021 = vmatprep.subr.mxu0 0.0
      %4022 = vmatpush2.msra.mxu0 0.0
      %4023 = vmatprep.subr.mxu0 0.0
      %4024 = vmatpush2.msra.mxu0 0.0
      %4025 = vmatprep.subr.mxu0 0.0
      %4026 = vmatpush2.msra.mxu0 0.0
      %4027 = vmatprep.mubr.f32.mxu0 0.0
      %4028 = vmatmul.mubr.f32.gmra.mxu0 %v3961
      %v4029 = vpop.f32.mrf.mxu0
      %v4030 = vadd.f32 0.0, %v4029
      %v4031 = vpop.f32.mrf.mxu0
      %v4032 = vadd.f32 0.0, %v4031
      %4033 = vdwg.mxu0
      %4034 = vmatprep.subr.mxu0 0.0
      %4035 = vmatpush1.msra.mxu0 0.0
      %4036 = vmatprep.subr.mxu0 0.0
      %4037 = vmatpush1.msra.mxu0 0.0
      %4038 = vmatprep.subr.mxu0 0.0
      %4039 = vmatpush1.msra.mxu0 0.0
      %4040 = vmatprep.subr.mxu0 0.0
      %4041 = vmatpush1.msra.mxu0 0.0
      %4042 = vmatprep.subr.mxu0 0.0
      %4043 = vmatpush1.msra.mxu0 0.0
      %4044 = vmatprep.subr.mxu0 0.0
      %4045 = vmatpush1.msra.mxu0 0.0
      %4046 = vmatprep.subr.mxu0 0.0
      %4047 = vmatpush1.msra.mxu0 0.0
      %4048 = vmatprep.subr.mxu0 0.0
      %4049 = vmatpush1.msra.mxu0 0.0
      %4050 = vmatprep.subr.mxu0 0.0
      %4051 = vmatpush1.msra.mxu0 0.0
      %4052 = vmatprep.subr.mxu0 0.0
      %4053 = vmatpush1.msra.mxu0 0.0
      %4054 = vmatprep.subr.mxu0 0.0
      %4055 = vmatpush1.msra.mxu0 0.0
      %4056 = vmatprep.subr.mxu0 0.0
      %4057 = vmatpush1.msra.mxu0 0.0
      %4058 = vmatprep.subr.mxu0 0.0
      %4059 = vmatpush1.msra.mxu0 0.0
      %4060 = vmatprep.subr.mxu0 0.0
      %4061 = vmatpush1.msra.mxu0 0.0
      %4062 = vmatprep.subr.mxu0 0.0
      %4063 = vmatpush1.msra.mxu0 0.0
      %4064 = vmatprep.subr.mxu0 0.0
      %4065 = vmatpush1.msra.mxu0 %v3955
      %4066 = vmatprep.subr.mxu0 0.0
      %4067 = vmatpush2.msra.mxu0 0.0
      %4068 = vmatprep.subr.mxu0 0.0
      %4069 = vmatpush2.msra.mxu0 0.0
      %4070 = vmatprep.subr.mxu0 0.0
      %4071 = vmatpush2.msra.mxu0 0.0
      %4072 = vmatprep.subr.mxu0 0.0
      %4073 = vmatpush2.msra.mxu0 0.0
      %4074 = vmatprep.subr.mxu0 0.0
      %4075 = vmatpush2.msra.mxu0 0.0
      %4076 = vmatprep.subr.mxu0 0.0
      %4077 = vmatpush2.msra.mxu0 0.0
      %4078 = vmatprep.subr.mxu0 0.0
      %4079 = vmatpush2.msra.mxu0 0.0
      %4080 = vmatprep.subr.mxu0 0.0
      %4081 = vmatpush2.msra.mxu0 0.0
      %4082 = vmatprep.subr.mxu0 0.0
      %4083 = vmatpush2.msra.mxu0 0.0
      %4084 = vmatprep.subr.mxu0 0.0
      %4085 = vmatpush2.msra.mxu0 0.0
      %4086 = vmatprep.subr.mxu0 0.0
      %4087 = vmatpush2.msra.mxu0 0.0
      %4088 = vmatprep.subr.mxu0 0.0
      %4089 = vmatpush2.msra.mxu0 0.0
      %4090 = vmatprep.subr.mxu0 0.0
      %4091 = vmatpush2.msra.mxu0 0.0
      %4092 = vmatprep.subr.mxu0 0.0
      %4093 = vmatpush2.msra.mxu0 0.0
      %4094 = vmatprep.subr.mxu0 0.0
      %4095 = vmatpush2.msra.mxu0 0.0
      %4096 = vmatprep.subr.mxu0 0.0
      %4097 = vmatpush2.msra.mxu0 0.0
      %4098 = vmatprep.mubr.f32.mxu0 0.0
      %4099 = vmatmul.mubr.f32.gmra.mxu0 %v3961
      %v4100 = vpop.f32.mrf.mxu0
      %v4101 = vadd.f32 0.0, %v4100
      %v4102 = vpop.f32.mrf.mxu0
      %4103 = vdwg.mxu0
      %v4104 = vadd.f32 %v3945, %v4030
      %v4105 = vadd.f32 %v3946, %v4032
      %v4106 = vadd.f32 %v3947, %v4101
      %4107 = vrot.lane.b32.xlu0 %v3482, 96
      %v4108 = vpop.permute.xlu0 %4107
      %4109 = vrot.lane.b32.xlu0 %v3483, 109
      %v4110 = vpop.permute.xlu0 %4109
      %4111 = vrot.lane.b32.xlu0 %v3484, 109
      %v4112 = vpop.permute.xlu0 %4111
      %4113 = vrot.lane.b32.xlu0 %v3485, 109
      %v4114 = vpop.permute.xlu0 %4113
      %v4115 = vsel %vm1170, %v4110, %v4112
      %v4116 = vsel %vm1170, %v4112, %v4114
      %v4120 = vsel %vm555, %v4108, 0
      %4122 = vmatprep.subr.mxu0 0.0
      %4123 = vmatpush1.msra.mxu0 0.0
      %4124 = vmatprep.subr.mxu0 0.0
      %4125 = vmatpush1.msra.mxu0 0.0
      %4126 = vmatprep.subr.mxu0 0.0
      %4127 = vmatpush1.msra.mxu0 0.0
      %4128 = vmatprep.subr.mxu0 0.0
      %4129 = vmatpush1.msra.mxu0 0.0
      %4130 = vmatprep.subr.mxu0 0.0
      %4131 = vmatpush1.msra.mxu0 0.0
      %4132 = vmatprep.subr.mxu0 0.0
      %4133 = vmatpush1.msra.mxu0 0.0
      %4134 = vmatprep.subr.mxu0 0.0
      %4135 = vmatpush1.msra.mxu0 0.0
      %4136 = vmatprep.subr.mxu0 0.0
      %4137 = vmatpush1.msra.mxu0 0.0
      %4138 = vmatprep.subr.mxu0 0.0
      %4139 = vmatpush1.msra.mxu0 0.0
      %4140 = vmatprep.subr.mxu0 0.0
      %4141 = vmatpush1.msra.mxu0 0.0
      %4142 = vmatprep.subr.mxu0 0.0
      %4143 = vmatpush1.msra.mxu0 0.0
      %4144 = vmatprep.subr.mxu0 0.0
      %4145 = vmatpush1.msra.mxu0 0.0
      %4146 = vmatprep.subr.mxu0 0.0
      %4147 = vmatpush1.msra.mxu0 0.0
      %4148 = vmatprep.subr.mxu0 0.0
      %4149 = vmatpush1.msra.mxu0 0.0
      %4150 = vmatprep.subr.mxu0 0.0
      %4151 = vmatpush1.msra.mxu0 0.0
      %4152 = vmatprep.subr.mxu0 %v4116
      %4153 = vmatpush1.msra.mxu0 %v4115
      %4154 = vmatprep.subr.mxu0 0.0
      %4155 = vmatpush2.msra.mxu0 0.0
      %4156 = vmatprep.subr.mxu0 0.0
      %4157 = vmatpush2.msra.mxu0 0.0
      %4158 = vmatprep.subr.mxu0 0.0
      %4159 = vmatpush2.msra.mxu0 0.0
      %4160 = vmatprep.subr.mxu0 0.0
      %4161 = vmatpush2.msra.mxu0 0.0
      %4162 = vmatprep.subr.mxu0 0.0
      %4163 = vmatpush2.msra.mxu0 0.0
      %4164 = vmatprep.subr.mxu0 0.0
      %4165 = vmatpush2.msra.mxu0 0.0
      %4166 = vmatprep.subr.mxu0 0.0
      %4167 = vmatpush2.msra.mxu0 0.0
      %4168 = vmatprep.subr.mxu0 0.0
      %4169 = vmatpush2.msra.mxu0 0.0
      %4170 = vmatprep.subr.mxu0 0.0
      %4171 = vmatpush2.msra.mxu0 0.0
      %4172 = vmatprep.subr.mxu0 0.0
      %4173 = vmatpush2.msra.mxu0 0.0
      %4174 = vmatprep.subr.mxu0 0.0
      %4175 = vmatpush2.msra.mxu0 0.0
      %4176 = vmatprep.subr.mxu0 0.0
      %4177 = vmatpush2.msra.mxu0 0.0
      %4178 = vmatprep.subr.mxu0 0.0
      %4179 = vmatpush2.msra.mxu0 0.0
      %4180 = vmatprep.subr.mxu0 0.0
      %4181 = vmatpush2.msra.mxu0 0.0
      %4182 = vmatprep.subr.mxu0 0.0
      %4183 = vmatpush2.msra.mxu0 0.0
      %4184 = vmatprep.subr.mxu0 0.0
      %4185 = vmatpush2.msra.mxu0 0.0
      %4186 = vmatprep.mubr.f32.mxu0 0.0
      %4187 = vmatmul.mubr.f32.gmra.mxu0 %v4120
      %v4188 = vpop.f32.mrf.mxu0
      %v4189 = vadd.f32 0.0, %v4188
      %v4190 = vpop.f32.mrf.mxu0
      %v4191 = vadd.f32 0.0, %v4190
      %4192 = vdwg.mxu0
      %4193 = vmatprep.subr.mxu0 0.0
      %4194 = vmatpush1.msra.mxu0 0.0
      %4195 = vmatprep.subr.mxu0 0.0
      %4196 = vmatpush1.msra.mxu0 0.0
      %4197 = vmatprep.subr.mxu0 0.0
      %4198 = vmatpush1.msra.mxu0 0.0
      %4199 = vmatprep.subr.mxu0 0.0
      %4200 = vmatpush1.msra.mxu0 0.0
      %4201 = vmatprep.subr.mxu0 0.0
      %4202 = vmatpush1.msra.mxu0 0.0
      %4203 = vmatprep.subr.mxu0 0.0
      %4204 = vmatpush1.msra.mxu0 0.0
      %4205 = vmatprep.subr.mxu0 0.0
      %4206 = vmatpush1.msra.mxu0 0.0
      %4207 = vmatprep.subr.mxu0 0.0
      %4208 = vmatpush1.msra.mxu0 0.0
      %4209 = vmatprep.subr.mxu0 0.0
      %4210 = vmatpush1.msra.mxu0 0.0
      %4211 = vmatprep.subr.mxu0 0.0
      %4212 = vmatpush1.msra.mxu0 0.0
      %4213 = vmatprep.subr.mxu0 0.0
      %4214 = vmatpush1.msra.mxu0 0.0
      %4215 = vmatprep.subr.mxu0 0.0
      %4216 = vmatpush1.msra.mxu0 0.0
      %4217 = vmatprep.subr.mxu0 0.0
      %4218 = vmatpush1.msra.mxu0 0.0
      %4219 = vmatprep.subr.mxu0 0.0
      %4220 = vmatpush1.msra.mxu0 0.0
      %4221 = vmatprep.subr.mxu0 0.0
      %4222 = vmatpush1.msra.mxu0 0.0
      %4223 = vmatprep.subr.mxu0 0.0
      %4224 = vmatpush1.msra.mxu0 %v4114
      %4225 = vmatprep.subr.mxu0 0.0
      %4226 = vmatpush2.msra.mxu0 0.0
      %4227 = vmatprep.subr.mxu0 0.0
      %4228 = vmatpush2.msra.mxu0 0.0
      %4229 = vmatprep.subr.mxu0 0.0
      %4230 = vmatpush2.msra.mxu0 0.0
      %4231 = vmatprep.subr.mxu0 0.0
      %4232 = vmatpush2.msra.mxu0 0.0
      %4233 = vmatprep.subr.mxu0 0.0
      %4234 = vmatpush2.msra.mxu0 0.0
      %4235 = vmatprep.subr.mxu0 0.0
      %4236 = vmatpush2.msra.mxu0 0.0
      %4237 = vmatprep.subr.mxu0 0.0
      %4238 = vmatpush2.msra.mxu0 0.0
      %4239 = vmatprep.subr.mxu0 0.0
      %4240 = vmatpush2.msra.mxu0 0.0
      %4241 = vmatprep.subr.mxu0 0.0
      %4242 = vmatpush2.msra.mxu0 0.0
      %4243 = vmatprep.subr.mxu0 0.0
      %4244 = vmatpush2.msra.mxu0 0.0
      %4245 = vmatprep.subr.mxu0 0.0
      %4246 = vmatpush2.msra.mxu0 0.0
      %4247 = vmatprep.subr.mxu0 0.0
      %4248 = vmatpush2.msra.mxu0 0.0
      %4249 = vmatprep.subr.mxu0 0.0
      %4250 = vmatpush2.msra.mxu0 0.0
      %4251 = vmatprep.subr.mxu0 0.0
      %4252 = vmatpush2.msra.mxu0 0.0
      %4253 = vmatprep.subr.mxu0 0.0
      %4254 = vmatpush2.msra.mxu0 0.0
      %4255 = vmatprep.subr.mxu0 0.0
      %4256 = vmatpush2.msra.mxu0 0.0
      %4257 = vmatprep.mubr.f32.mxu0 0.0
      %4258 = vmatmul.mubr.f32.gmra.mxu0 %v4120
      %v4259 = vpop.f32.mrf.mxu0
      %v4260 = vadd.f32 0.0, %v4259
      %v4261 = vpop.f32.mrf.mxu0
      %4262 = vdwg.mxu0
      %v4263 = vadd.f32 %v4104, %v4189
      %v4264 = vadd.f32 %v4105, %v4191
      %v4265 = vadd.f32 %v4106, %v4260
      %4266 = vrot.lane.b32.xlu0 %v3482, 88
      %v4267 = vpop.permute.xlu0 %4266
      %4268 = vrot.lane.b32.xlu0 %v3483, 108
      %v4269 = vpop.permute.xlu0 %4268
      %4270 = vrot.lane.b32.xlu0 %v3484, 108
      %v4271 = vpop.permute.xlu0 %4270
      %4272 = vrot.lane.b32.xlu0 %v3485, 108
      %v4273 = vpop.permute.xlu0 %4272
      %v4274 = vsel %vm1330, %v4269, %v4271
      %v4275 = vsel %vm1330, %v4271, %v4273
      %v4279 = vsel %vm555, %v4267, 0
      %4281 = vmatprep.subr.mxu0 0.0
      %4282 = vmatpush1.msra.mxu0 0.0
      %4283 = vmatprep.subr.mxu0 0.0
      %4284 = vmatpush1.msra.mxu0 0.0
      %4285 = vmatprep.subr.mxu0 0.0
      %4286 = vmatpush1.msra.mxu0 0.0
      %4287 = vmatprep.subr.mxu0 0.0
      %4288 = vmatpush1.msra.mxu0 0.0
      %4289 = vmatprep.subr.mxu0 0.0
      %4290 = vmatpush1.msra.mxu0 0.0
      %4291 = vmatprep.subr.mxu0 0.0
      %4292 = vmatpush1.msra.mxu0 0.0
      %4293 = vmatprep.subr.mxu0 0.0
      %4294 = vmatpush1.msra.mxu0 0.0
      %4295 = vmatprep.subr.mxu0 0.0
      %4296 = vmatpush1.msra.mxu0 0.0
      %4297 = vmatprep.subr.mxu0 0.0
      %4298 = vmatpush1.msra.mxu0 0.0
      %4299 = vmatprep.subr.mxu0 0.0
      %4300 = vmatpush1.msra.mxu0 0.0
      %4301 = vmatprep.subr.mxu0 0.0
      %4302 = vmatpush1.msra.mxu0 0.0
      %4303 = vmatprep.subr.mxu0 0.0
      %4304 = vmatpush1.msra.mxu0 0.0
      %4305 = vmatprep.subr.mxu0 0.0
      %4306 = vmatpush1.msra.mxu0 0.0
      %4307 = vmatprep.subr.mxu0 0.0
      %4308 = vmatpush1.msra.mxu0 0.0
      %4309 = vmatprep.subr.mxu0 0.0
      %4310 = vmatpush1.msra.mxu0 0.0
      %4311 = vmatprep.subr.mxu0 %v4275
      %4312 = vmatpush1.msra.mxu0 %v4274
      %4313 = vmatprep.subr.mxu0 0.0
      %4314 = vmatpush2.msra.mxu0 0.0
      %4315 = vmatprep.subr.mxu0 0.0
      %4316 = vmatpush2.msra.mxu0 0.0
      %4317 = vmatprep.subr.mxu0 0.0
      %4318 = vmatpush2.msra.mxu0 0.0
      %4319 = vmatprep.subr.mxu0 0.0
      %4320 = vmatpush2.msra.mxu0 0.0
      %4321 = vmatprep.subr.mxu0 0.0
      %4322 = vmatpush2.msra.mxu0 0.0
      %4323 = vmatprep.subr.mxu0 0.0
      %4324 = vmatpush2.msra.mxu0 0.0
      %4325 = vmatprep.subr.mxu0 0.0
      %4326 = vmatpush2.msra.mxu0 0.0
      %4327 = vmatprep.subr.mxu0 0.0
      %4328 = vmatpush2.msra.mxu0 0.0
      %4329 = vmatprep.subr.mxu0 0.0
      %4330 = vmatpush2.msra.mxu0 0.0
      %4331 = vmatprep.subr.mxu0 0.0
      %4332 = vmatpush2.msra.mxu0 0.0
      %4333 = vmatprep.subr.mxu0 0.0
      %4334 = vmatpush2.msra.mxu0 0.0
      %4335 = vmatprep.subr.mxu0 0.0
      %4336 = vmatpush2.msra.mxu0 0.0
      %4337 = vmatprep.subr.mxu0 0.0
      %4338 = vmatpush2.msra.mxu0 0.0
      %4339 = vmatprep.subr.mxu0 0.0
      %4340 = vmatpush2.msra.mxu0 0.0
      %4341 = vmatprep.subr.mxu0 0.0
      %4342 = vmatpush2.msra.mxu0 0.0
      %4343 = vmatprep.subr.mxu0 0.0
      %4344 = vmatpush2.msra.mxu0 0.0
      %4345 = vmatprep.mubr.f32.mxu0 0.0
      %4346 = vmatmul.mubr.f32.gmra.mxu0 %v4279
      %v4347 = vpop.f32.mrf.mxu0
      %v4348 = vadd.f32 0.0, %v4347
      %v4349 = vpop.f32.mrf.mxu0
      %v4350 = vadd.f32 0.0, %v4349
      %4351 = vdwg.mxu0
      %4352 = vmatprep.subr.mxu0 0.0
      %4353 = vmatpush1.msra.mxu0 0.0
      %4354 = vmatprep.subr.mxu0 0.0
      %4355 = vmatpush1.msra.mxu0 0.0
      %4356 = vmatprep.subr.mxu0 0.0
      %4357 = vmatpush1.msra.mxu0 0.0
      %4358 = vmatprep.subr.mxu0 0.0
      %4359 = vmatpush1.msra.mxu0 0.0
      %4360 = vmatprep.subr.mxu0 0.0
      %4361 = vmatpush1.msra.mxu0 0.0
      %4362 = vmatprep.subr.mxu0 0.0
      %4363 = vmatpush1.msra.mxu0 0.0
      %4364 = vmatprep.subr.mxu0 0.0
      %4365 = vmatpush1.msra.mxu0 0.0
      %4366 = vmatprep.subr.mxu0 0.0
      %4367 = vmatpush1.msra.mxu0 0.0
      %4368 = vmatprep.subr.mxu0 0.0
      %4369 = vmatpush1.msra.mxu0 0.0
      %4370 = vmatprep.subr.mxu0 0.0
      %4371 = vmatpush1.msra.mxu0 0.0
      %4372 = vmatprep.subr.mxu0 0.0
      %4373 = vmatpush1.msra.mxu0 0.0
      %4374 = vmatprep.subr.mxu0 0.0
      %4375 = vmatpush1.msra.mxu0 0.0
      %4376 = vmatprep.subr.mxu0 0.0
      %4377 = vmatpush1.msra.mxu0 0.0
      %4378 = vmatprep.subr.mxu0 0.0
      %4379 = vmatpush1.msra.mxu0 0.0
      %4380 = vmatprep.subr.mxu0 0.0
      %4381 = vmatpush1.msra.mxu0 0.0
      %4382 = vmatprep.subr.mxu0 0.0
      %4383 = vmatpush1.msra.mxu0 %v4273
      %4384 = vmatprep.subr.mxu0 0.0
      %4385 = vmatpush2.msra.mxu0 0.0
      %4386 = vmatprep.subr.mxu0 0.0
      %4387 = vmatpush2.msra.mxu0 0.0
      %4388 = vmatprep.subr.mxu0 0.0
      %4389 = vmatpush2.msra.mxu0 0.0
      %4390 = vmatprep.subr.mxu0 0.0
      %4391 = vmatpush2.msra.mxu0 0.0
      %4392 = vmatprep.subr.mxu0 0.0
      %4393 = vmatpush2.msra.mxu0 0.0
      %4394 = vmatprep.subr.mxu0 0.0
      %4395 = vmatpush2.msra.mxu0 0.0
      %4396 = vmatprep.subr.mxu0 0.0
      %4397 = vmatpush2.msra.mxu0 0.0
      %4398 = vmatprep.subr.mxu0 0.0
      %4399 = vmatpush2.msra.mxu0 0.0
      %4400 = vmatprep.subr.mxu0 0.0
      %4401 = vmatpush2.msra.mxu0 0.0
      %4402 = vmatprep.subr.mxu0 0.0
      %4403 = vmatpush2.msra.mxu0 0.0
      %4404 = vmatprep.subr.mxu0 0.0
      %4405 = vmatpush2.msra.mxu0 0.0
      %4406 = vmatprep.subr.mxu0 0.0
      %4407 = vmatpush2.msra.mxu0 0.0
      %4408 = vmatprep.subr.mxu0 0.0
      %4409 = vmatpush2.msra.mxu0 0.0
      %4410 = vmatprep.subr.mxu0 0.0
      %4411 = vmatpush2.msra.mxu0 0.0
      %4412 = vmatprep.subr.mxu0 0.0
      %4413 = vmatpush2.msra.mxu0 0.0
      %4414 = vmatprep.subr.mxu0 0.0
      %4415 = vmatpush2.msra.mxu0 0.0
      %4416 = vmatprep.mubr.f32.mxu0 0.0
      %4417 = vmatmul.mubr.f32.gmra.mxu0 %v4279
      %v4418 = vpop.f32.mrf.mxu0
      %v4419 = vadd.f32 0.0, %v4418
      %v4420 = vpop.f32.mrf.mxu0
      %4421 = vdwg.mxu0
      %v4422 = vadd.f32 %v4263, %v4348
      %v4423 = vadd.f32 %v4264, %v4350
      %v4424 = vadd.f32 %v4265, %v4419
      %4425 = vrot.lane.b32.xlu0 %v3482, 80
      %v4426 = vpop.permute.xlu0 %4425
      %4427 = vrot.lane.b32.xlu0 %v3483, 92
      %v4428 = vpop.permute.xlu0 %4427
      %4429 = vrot.lane.b32.xlu0 %v3484, 92
      %v4430 = vpop.permute.xlu0 %4429
      %4431 = vrot.lane.b32.xlu0 %v3485, 92
      %v4432 = vpop.permute.xlu0 %4431
      %v4433 = vsel %vm1490, %v4428, %v4430
      %v4434 = vsel %vm1490, %v4430, %v4432
      %v4438 = vsel %vm555, %v4426, 0
      %4440 = vmatprep.subr.mxu0 0.0
      %4441 = vmatpush1.msra.mxu0 0.0
      %4442 = vmatprep.subr.mxu0 0.0
      %4443 = vmatpush1.msra.mxu0 0.0
      %4444 = vmatprep.subr.mxu0 0.0
      %4445 = vmatpush1.msra.mxu0 0.0
      %4446 = vmatprep.subr.mxu0 0.0
      %4447 = vmatpush1.msra.mxu0 0.0
      %4448 = vmatprep.subr.mxu0 0.0
      %4449 = vmatpush1.msra.mxu0 0.0
      %4450 = vmatprep.subr.mxu0 0.0
      %4451 = vmatpush1.msra.mxu0 0.0
      %4452 = vmatprep.subr.mxu0 0.0
      %4453 = vmatpush1.msra.mxu0 0.0
      %4454 = vmatprep.subr.mxu0 0.0
      %4455 = vmatpush1.msra.mxu0 0.0
      %4456 = vmatprep.subr.mxu0 0.0
      %4457 = vmatpush1.msra.mxu0 0.0
      %4458 = vmatprep.subr.mxu0 0.0
      %4459 = vmatpush1.msra.mxu0 0.0
      %4460 = vmatprep.subr.mxu0 0.0
      %4461 = vmatpush1.msra.mxu0 0.0
      %4462 = vmatprep.subr.mxu0 0.0
      %4463 = vmatpush1.msra.mxu0 0.0
      %4464 = vmatprep.subr.mxu0 0.0
      %4465 = vmatpush1.msra.mxu0 0.0
      %4466 = vmatprep.subr.mxu0 0.0
      %4467 = vmatpush1.msra.mxu0 0.0
      %4468 = vmatprep.subr.mxu0 0.0
      %4469 = vmatpush1.msra.mxu0 0.0
      %4470 = vmatprep.subr.mxu0 %v4434
      %4471 = vmatpush1.msra.mxu0 %v4433
      %4472 = vmatprep.subr.mxu0 0.0
      %4473 = vmatpush2.msra.mxu0 0.0
      %4474 = vmatprep.subr.mxu0 0.0
      %4475 = vmatpush2.msra.mxu0 0.0
      %4476 = vmatprep.subr.mxu0 0.0
      %4477 = vmatpush2.msra.mxu0 0.0
      %4478 = vmatprep.subr.mxu0 0.0
      %4479 = vmatpush2.msra.mxu0 0.0
      %4480 = vmatprep.subr.mxu0 0.0
      %4481 = vmatpush2.msra.mxu0 0.0
      %4482 = vmatprep.subr.mxu0 0.0
      %4483 = vmatpush2.msra.mxu0 0.0
      %4484 = vmatprep.subr.mxu0 0.0
      %4485 = vmatpush2.msra.mxu0 0.0
      %4486 = vmatprep.subr.mxu0 0.0
      %4487 = vmatpush2.msra.mxu0 0.0
      %4488 = vmatprep.subr.mxu0 0.0
      %4489 = vmatpush2.msra.mxu0 0.0
      %4490 = vmatprep.subr.mxu0 0.0
      %4491 = vmatpush2.msra.mxu0 0.0
      %4492 = vmatprep.subr.mxu0 0.0
      %4493 = vmatpush2.msra.mxu0 0.0
      %4494 = vmatprep.subr.mxu0 0.0
      %4495 = vmatpush2.msra.mxu0 0.0
      %4496 = vmatprep.subr.mxu0 0.0
      %4497 = vmatpush2.msra.mxu0 0.0
      %4498 = vmatprep.subr.mxu0 0.0
      %4499 = vmatpush2.msra.mxu0 0.0
      %4500 = vmatprep.subr.mxu0 0.0
      %4501 = vmatpush2.msra.mxu0 0.0
      %4502 = vmatprep.subr.mxu0 0.0
      %4503 = vmatpush2.msra.mxu0 0.0
      %4504 = vmatprep.mubr.f32.mxu0 0.0
      %4505 = vmatmul.mubr.f32.gmra.mxu0 %v4438
      %v4506 = vpop.f32.mrf.mxu0
      %v4507 = vadd.f32 0.0, %v4506
      %v4508 = vpop.f32.mrf.mxu0
      %v4509 = vadd.f32 0.0, %v4508
      %4510 = vdwg.mxu0
      %4511 = vmatprep.subr.mxu0 0.0
      %4512 = vmatpush1.msra.mxu0 0.0
      %4513 = vmatprep.subr.mxu0 0.0
      %4514 = vmatpush1.msra.mxu0 0.0
      %4515 = vmatprep.subr.mxu0 0.0
      %4516 = vmatpush1.msra.mxu0 0.0
      %4517 = vmatprep.subr.mxu0 0.0
      %4518 = vmatpush1.msra.mxu0 0.0
      %4519 = vmatprep.subr.mxu0 0.0
      %4520 = vmatpush1.msra.mxu0 0.0
      %4521 = vmatprep.subr.mxu0 0.0
      %4522 = vmatpush1.msra.mxu0 0.0
      %4523 = vmatprep.subr.mxu0 0.0
      %4524 = vmatpush1.msra.mxu0 0.0
      %4525 = vmatprep.subr.mxu0 0.0
      %4526 = vmatpush1.msra.mxu0 0.0
      %4527 = vmatprep.subr.mxu0 0.0
      %4528 = vmatpush1.msra.mxu0 0.0
      %4529 = vmatprep.subr.mxu0 0.0
      %4530 = vmatpush1.msra.mxu0 0.0
      %4531 = vmatprep.subr.mxu0 0.0
      %4532 = vmatpush1.msra.mxu0 0.0
      %4533 = vmatprep.subr.mxu0 0.0
      %4534 = vmatpush1.msra.mxu0 0.0
      %4535 = vmatprep.subr.mxu0 0.0
      %4536 = vmatpush1.msra.mxu0 0.0
      %4537 = vmatprep.subr.mxu0 0.0
      %4538 = vmatpush1.msra.mxu0 0.0
      %4539 = vmatprep.subr.mxu0 0.0
      %4540 = vmatpush1.msra.mxu0 0.0
      %4541 = vmatprep.subr.mxu0 0.0
      %4542 = vmatpush1.msra.mxu0 %v4432
      %4543 = vmatprep.subr.mxu0 0.0
      %4544 = vmatpush2.msra.mxu0 0.0
      %4545 = vmatprep.subr.mxu0 0.0
      %4546 = vmatpush2.msra.mxu0 0.0
      %4547 = vmatprep.subr.mxu0 0.0
      %4548 = vmatpush2.msra.mxu0 0.0
      %4549 = vmatprep.subr.mxu0 0.0
      %4550 = vmatpush2.msra.mxu0 0.0
      %4551 = vmatprep.subr.mxu0 0.0
      %4552 = vmatpush2.msra.mxu0 0.0
      %4553 = vmatprep.subr.mxu0 0.0
      %4554 = vmatpush2.msra.mxu0 0.0
      %4555 = vmatprep.subr.mxu0 0.0
      %4556 = vmatpush2.msra.mxu0 0.0
      %4557 = vmatprep.subr.mxu0 0.0
      %4558 = vmatpush2.msra.mxu0 0.0
      %4559 = vmatprep.subr.mxu0 0.0
      %4560 = vmatpush2.msra.mxu0 0.0
      %4561 = vmatprep.subr.mxu0 0.0
      %4562 = vmatpush2.msra.mxu0 0.0
      %4563 = vmatprep.subr.mxu0 0.0
      %4564 = vmatpush2.msra.mxu0 0.0
      %4565 = vmatprep.subr.mxu0 0.0
      %4566 = vmatpush2.msra.mxu0 0.0
      %4567 = vmatprep.subr.mxu0 0.0
      %4568 = vmatpush2.msra.mxu0 0.0
      %4569 = vmatprep.subr.mxu0 0.0
      %4570 = vmatpush2.msra.mxu0 0.0
      %4571 = vmatprep.subr.mxu0 0.0
      %4572 = vmatpush2.msra.mxu0 0.0
      %4573 = vmatprep.subr.mxu0 0.0
      %4574 = vmatpush2.msra.mxu0 0.0
      %4575 = vmatprep.mubr.f32.mxu0 0.0
      %4576 = vmatmul.mubr.f32.gmra.mxu0 %v4438
      %v4577 = vpop.f32.mrf.mxu0
      %v4578 = vadd.f32 0.0, %v4577
      %v4579 = vpop.f32.mrf.mxu0
      %4580 = vdwg.mxu0
      %v4581 = vadd.f32 %v4422, %v4507
      %v4582 = vadd.f32 %v4423, %v4509
      %v4583 = vadd.f32 %v4424, %v4578
      %4584 = vrot.lane.b32.xlu0 %v3482, 72
      %v4585 = vpop.permute.xlu0 %4584
      %4586 = vrot.lane.b32.xlu0 %v3483, 91
      %v4587 = vpop.permute.xlu0 %4586
      %4588 = vrot.lane.b32.xlu0 %v3484, 91
      %v4589 = vpop.permute.xlu0 %4588
      %4590 = vrot.lane.b32.xlu0 %v3485, 91
      %v4591 = vpop.permute.xlu0 %4590
      %v4592 = vsel %vm1650, %v4587, %v4589
      %v4593 = vsel %vm1650, %v4589, %v4591
      %v4597 = vsel %vm555, %v4585, 0
      %4599 = vmatprep.subr.mxu0 0.0
      %4600 = vmatpush1.msra.mxu0 0.0
      %4601 = vmatprep.subr.mxu0 0.0
      %4602 = vmatpush1.msra.mxu0 0.0
      %4603 = vmatprep.subr.mxu0 0.0
      %4604 = vmatpush1.msra.mxu0 0.0
      %4605 = vmatprep.subr.mxu0 0.0
      %4606 = vmatpush1.msra.mxu0 0.0
      %4607 = vmatprep.subr.mxu0 0.0
      %4608 = vmatpush1.msra.mxu0 0.0
      %4609 = vmatprep.subr.mxu0 0.0
      %4610 = vmatpush1.msra.mxu0 0.0
      %4611 = vmatprep.subr.mxu0 0.0
      %4612 = vmatpush1.msra.mxu0 0.0
      %4613 = vmatprep.subr.mxu0 0.0
      %4614 = vmatpush1.msra.mxu0 0.0
      %4615 = vmatprep.subr.mxu0 0.0
      %4616 = vmatpush1.msra.mxu0 0.0
      %4617 = vmatprep.subr.mxu0 0.0
      %4618 = vmatpush1.msra.mxu0 0.0
      %4619 = vmatprep.subr.mxu0 0.0
      %4620 = vmatpush1.msra.mxu0 0.0
      %4621 = vmatprep.subr.mxu0 0.0
      %4622 = vmatpush1.msra.mxu0 0.0
      %4623 = vmatprep.subr.mxu0 0.0
      %4624 = vmatpush1.msra.mxu0 0.0
      %4625 = vmatprep.subr.mxu0 0.0
      %4626 = vmatpush1.msra.mxu0 0.0
      %4627 = vmatprep.subr.mxu0 0.0
      %4628 = vmatpush1.msra.mxu0 0.0
      %4629 = vmatprep.subr.mxu0 %v4593
      %4630 = vmatpush1.msra.mxu0 %v4592
      %4631 = vmatprep.subr.mxu0 0.0
      %4632 = vmatpush2.msra.mxu0 0.0
      %4633 = vmatprep.subr.mxu0 0.0
      %4634 = vmatpush2.msra.mxu0 0.0
      %4635 = vmatprep.subr.mxu0 0.0
      %4636 = vmatpush2.msra.mxu0 0.0
      %4637 = vmatprep.subr.mxu0 0.0
      %4638 = vmatpush2.msra.mxu0 0.0
      %4639 = vmatprep.subr.mxu0 0.0
      %4640 = vmatpush2.msra.mxu0 0.0
      %4641 = vmatprep.subr.mxu0 0.0
      %4642 = vmatpush2.msra.mxu0 0.0
      %4643 = vmatprep.subr.mxu0 0.0
      %4644 = vmatpush2.msra.mxu0 0.0
      %4645 = vmatprep.subr.mxu0 0.0
      %4646 = vmatpush2.msra.mxu0 0.0
      %4647 = vmatprep.subr.mxu0 0.0
      %4648 = vmatpush2.msra.mxu0 0.0
      %4649 = vmatprep.subr.mxu0 0.0
      %4650 = vmatpush2.msra.mxu0 0.0
      %4651 = vmatprep.subr.mxu0 0.0
      %4652 = vmatpush2.msra.mxu0 0.0
      %4653 = vmatprep.subr.mxu0 0.0
      %4654 = vmatpush2.msra.mxu0 0.0
      %4655 = vmatprep.subr.mxu0 0.0
      %4656 = vmatpush2.msra.mxu0 0.0
      %4657 = vmatprep.subr.mxu0 0.0
      %4658 = vmatpush2.msra.mxu0 0.0
      %4659 = vmatprep.subr.mxu0 0.0
      %4660 = vmatpush2.msra.mxu0 0.0
      %4661 = vmatprep.subr.mxu0 0.0
      %4662 = vmatpush2.msra.mxu0 0.0
      %4663 = vmatprep.mubr.f32.mxu0 0.0
      %4664 = vmatmul.mubr.f32.gmra.mxu0 %v4597
      %v4665 = vpop.f32.mrf.mxu0
      %v4666 = vadd.f32 0.0, %v4665
      %v4667 = vpop.f32.mrf.mxu0
      %v4668 = vadd.f32 0.0, %v4667
      %4669 = vdwg.mxu0
      %4670 = vmatprep.subr.mxu0 0.0
      %4671 = vmatpush1.msra.mxu0 0.0
      %4672 = vmatprep.subr.mxu0 0.0
      %4673 = vmatpush1.msra.mxu0 0.0
      %4674 = vmatprep.subr.mxu0 0.0
      %4675 = vmatpush1.msra.mxu0 0.0
      %4676 = vmatprep.subr.mxu0 0.0
      %4677 = vmatpush1.msra.mxu0 0.0
      %4678 = vmatprep.subr.mxu0 0.0
      %4679 = vmatpush1.msra.mxu0 0.0
      %4680 = vmatprep.subr.mxu0 0.0
      %4681 = vmatpush1.msra.mxu0 0.0
      %4682 = vmatprep.subr.mxu0 0.0
      %4683 = vmatpush1.msra.mxu0 0.0
      %4684 = vmatprep.subr.mxu0 0.0
      %4685 = vmatpush1.msra.mxu0 0.0
      %4686 = vmatprep.subr.mxu0 0.0
      %4687 = vmatpush1.msra.mxu0 0.0
      %4688 = vmatprep.subr.mxu0 0.0
      %4689 = vmatpush1.msra.mxu0 0.0
      %4690 = vmatprep.subr.mxu0 0.0
      %4691 = vmatpush1.msra.mxu0 0.0
      %4692 = vmatprep.subr.mxu0 0.0
      %4693 = vmatpush1.msra.mxu0 0.0
      %4694 = vmatprep.subr.mxu0 0.0
      %4695 = vmatpush1.msra.mxu0 0.0
      %4696 = vmatprep.subr.mxu0 0.0
      %4697 = vmatpush1.msra.mxu0 0.0
      %4698 = vmatprep.subr.mxu0 0.0
      %4699 = vmatpush1.msra.mxu0 0.0
      %4700 = vmatprep.subr.mxu0 0.0
      %4701 = vmatpush1.msra.mxu0 %v4591
      %4702 = vmatprep.subr.mxu0 0.0
      %4703 = vmatpush2.msra.mxu0 0.0
      %4704 = vmatprep.subr.mxu0 0.0
      %4705 = vmatpush2.msra.mxu0 0.0
      %4706 = vmatprep.subr.mxu0 0.0
      %4707 = vmatpush2.msra.mxu0 0.0
      %4708 = vmatprep.subr.mxu0 0.0
      %4709 = vmatpush2.msra.mxu0 0.0
      %4710 = vmatprep.subr.mxu0 0.0
      %4711 = vmatpush2.msra.mxu0 0.0
      %4712 = vmatprep.subr.mxu0 0.0
      %4713 = vmatpush2.msra.mxu0 0.0
      %4714 = vmatprep.subr.mxu0 0.0
      %4715 = vmatpush2.msra.mxu0 0.0
      %4716 = vmatprep.subr.mxu0 0.0
      %4717 = vmatpush2.msra.mxu0 0.0
      %4718 = vmatprep.subr.mxu0 0.0
      %4719 = vmatpush2.msra.mxu0 0.0
      %4720 = vmatprep.subr.mxu0 0.0
      %4721 = vmatpush2.msra.mxu0 0.0
      %4722 = vmatprep.subr.mxu0 0.0
      %4723 = vmatpush2.msra.mxu0 0.0
      %4724 = vmatprep.subr.mxu0 0.0
      %4725 = vmatpush2.msra.mxu0 0.0
      %4726 = vmatprep.subr.mxu0 0.0
      %4727 = vmatpush2.msra.mxu0 0.0
      %4728 = vmatprep.subr.mxu0 0.0
      %4729 = vmatpush2.msra.mxu0 0.0
      %4730 = vmatprep.subr.mxu0 0.0
      %4731 = vmatpush2.msra.mxu0 0.0
      %4732 = vmatprep.subr.mxu0 0.0
      %4733 = vmatpush2.msra.mxu0 0.0
      %4734 = vmatprep.mubr.f32.mxu0 0.0
      %4735 = vmatmul.mubr.f32.gmra.mxu0 %v4597
      %v4736 = vpop.f32.mrf.mxu0
      %v4737 = vadd.f32 0.0, %v4736
      %v4738 = vpop.f32.mrf.mxu0
      %4739 = vdwg.mxu0
      %v4740 = vadd.f32 %v4581, %v4666
      %v4741 = vadd.f32 %v4582, %v4668
      %v4742 = vadd.f32 %v4583, %v4737
      %4743 = vrot.lane.b32.xlu0 %v3482, 64
      %v4744 = vpop.permute.xlu0 %4743
      %4745 = vrot.lane.b32.xlu0 %v3483, 90
      %v4746 = vpop.permute.xlu0 %4745
      %4747 = vrot.lane.b32.xlu0 %v3484, 90
      %v4748 = vpop.permute.xlu0 %4747
      %4749 = vrot.lane.b32.xlu0 %v3485, 90
      %v4750 = vpop.permute.xlu0 %4749
      %v4751 = vsel %vm1810, %v4746, %v4748
      %v4752 = vsel %vm1810, %v4748, %v4750
      %v4756 = vsel %vm555, %v4744, 0
      %4758 = vmatprep.subr.mxu0 0.0
      %4759 = vmatpush1.msra.mxu0 0.0
      %4760 = vmatprep.subr.mxu0 0.0
      %4761 = vmatpush1.msra.mxu0 0.0
      %4762 = vmatprep.subr.mxu0 0.0
      %4763 = vmatpush1.msra.mxu0 0.0
      %4764 = vmatprep.subr.mxu0 0.0
      %4765 = vmatpush1.msra.mxu0 0.0
      %4766 = vmatprep.subr.mxu0 0.0
      %4767 = vmatpush1.msra.mxu0 0.0
      %4768 = vmatprep.subr.mxu0 0.0
      %4769 = vmatpush1.msra.mxu0 0.0
      %4770 = vmatprep.subr.mxu0 0.0
      %4771 = vmatpush1.msra.mxu0 0.0
      %4772 = vmatprep.subr.mxu0 0.0
      %4773 = vmatpush1.msra.mxu0 0.0
      %4774 = vmatprep.subr.mxu0 0.0
      %4775 = vmatpush1.msra.mxu0 0.0
      %4776 = vmatprep.subr.mxu0 0.0
      %4777 = vmatpush1.msra.mxu0 0.0
      %4778 = vmatprep.subr.mxu0 0.0
      %4779 = vmatpush1.msra.mxu0 0.0
      %4780 = vmatprep.subr.mxu0 0.0
      %4781 = vmatpush1.msra.mxu0 0.0
      %4782 = vmatprep.subr.mxu0 0.0
      %4783 = vmatpush1.msra.mxu0 0.0
      %4784 = vmatprep.subr.mxu0 0.0
      %4785 = vmatpush1.msra.mxu0 0.0
      %4786 = vmatprep.subr.mxu0 0.0
      %4787 = vmatpush1.msra.mxu0 0.0
      %4788 = vmatprep.subr.mxu0 %v4752
      %4789 = vmatpush1.msra.mxu0 %v4751
      %4790 = vmatprep.subr.mxu0 0.0
      %4791 = vmatpush2.msra.mxu0 0.0
      %4792 = vmatprep.subr.mxu0 0.0
      %4793 = vmatpush2.msra.mxu0 0.0
      %4794 = vmatprep.subr.mxu0 0.0
      %4795 = vmatpush2.msra.mxu0 0.0
      %4796 = vmatprep.subr.mxu0 0.0
      %4797 = vmatpush2.msra.mxu0 0.0
      %4798 = vmatprep.subr.mxu0 0.0
      %4799 = vmatpush2.msra.mxu0 0.0
      %4800 = vmatprep.subr.mxu0 0.0
      %4801 = vmatpush2.msra.mxu0 0.0
      %4802 = vmatprep.subr.mxu0 0.0
      %4803 = vmatpush2.msra.mxu0 0.0
      %4804 = vmatprep.subr.mxu0 0.0
      %4805 = vmatpush2.msra.mxu0 0.0
      %4806 = vmatprep.subr.mxu0 0.0
      %4807 = vmatpush2.msra.mxu0 0.0
      %4808 = vmatprep.subr.mxu0 0.0
      %4809 = vmatpush2.msra.mxu0 0.0
      %4810 = vmatprep.subr.mxu0 0.0
      %4811 = vmatpush2.msra.mxu0 0.0
      %4812 = vmatprep.subr.mxu0 0.0
      %4813 = vmatpush2.msra.mxu0 0.0
      %4814 = vmatprep.subr.mxu0 0.0
      %4815 = vmatpush2.msra.mxu0 0.0
      %4816 = vmatprep.subr.mxu0 0.0
      %4817 = vmatpush2.msra.mxu0 0.0
      %4818 = vmatprep.subr.mxu0 0.0
      %4819 = vmatpush2.msra.mxu0 0.0
      %4820 = vmatprep.subr.mxu0 0.0
      %4821 = vmatpush2.msra.mxu0 0.0
      %4822 = vmatprep.mubr.f32.mxu0 0.0
      %4823 = vmatmul.mubr.f32.gmra.mxu0 %v4756
      %v4824 = vpop.f32.mrf.mxu0
      %v4825 = vadd.f32 0.0, %v4824
      %v4826 = vpop.f32.mrf.mxu0
      %v4827 = vadd.f32 0.0, %v4826
      %4828 = vdwg.mxu0
      %4829 = vmatprep.subr.mxu0 0.0
      %4830 = vmatpush1.msra.mxu0 0.0
      %4831 = vmatprep.subr.mxu0 0.0
      %4832 = vmatpush1.msra.mxu0 0.0
      %4833 = vmatprep.subr.mxu0 0.0
      %4834 = vmatpush1.msra.mxu0 0.0
      %4835 = vmatprep.subr.mxu0 0.0
      %4836 = vmatpush1.msra.mxu0 0.0
      %4837 = vmatprep.subr.mxu0 0.0
      %4838 = vmatpush1.msra.mxu0 0.0
      %4839 = vmatprep.subr.mxu0 0.0
      %4840 = vmatpush1.msra.mxu0 0.0
      %4841 = vmatprep.subr.mxu0 0.0
      %4842 = vmatpush1.msra.mxu0 0.0
      %4843 = vmatprep.subr.mxu0 0.0
      %4844 = vmatpush1.msra.mxu0 0.0
      %4845 = vmatprep.subr.mxu0 0.0
      %4846 = vmatpush1.msra.mxu0 0.0
      %4847 = vmatprep.subr.mxu0 0.0
      %4848 = vmatpush1.msra.mxu0 0.0
      %4849 = vmatprep.subr.mxu0 0.0
      %4850 = vmatpush1.msra.mxu0 0.0
      %4851 = vmatprep.subr.mxu0 0.0
      %4852 = vmatpush1.msra.mxu0 0.0
      %4853 = vmatprep.subr.mxu0 0.0
      %4854 = vmatpush1.msra.mxu0 0.0
      %4855 = vmatprep.subr.mxu0 0.0
      %4856 = vmatpush1.msra.mxu0 0.0
      %4857 = vmatprep.subr.mxu0 0.0
      %4858 = vmatpush1.msra.mxu0 0.0
      %4859 = vmatprep.subr.mxu0 0.0
      %4860 = vmatpush1.msra.mxu0 %v4750
      %4861 = vmatprep.subr.mxu0 0.0
      %4862 = vmatpush2.msra.mxu0 0.0
      %4863 = vmatprep.subr.mxu0 0.0
      %4864 = vmatpush2.msra.mxu0 0.0
      %4865 = vmatprep.subr.mxu0 0.0
      %4866 = vmatpush2.msra.mxu0 0.0
      %4867 = vmatprep.subr.mxu0 0.0
      %4868 = vmatpush2.msra.mxu0 0.0
      %4869 = vmatprep.subr.mxu0 0.0
      %4870 = vmatpush2.msra.mxu0 0.0
      %4871 = vmatprep.subr.mxu0 0.0
      %4872 = vmatpush2.msra.mxu0 0.0
      %4873 = vmatprep.subr.mxu0 0.0
      %4874 = vmatpush2.msra.mxu0 0.0
      %4875 = vmatprep.subr.mxu0 0.0
      %4876 = vmatpush2.msra.mxu0 0.0
      %4877 = vmatprep.subr.mxu0 0.0
      %4878 = vmatpush2.msra.mxu0 0.0
      %4879 = vmatprep.subr.mxu0 0.0
      %4880 = vmatpush2.msra.mxu0 0.0
      %4881 = vmatprep.subr.mxu0 0.0
      %4882 = vmatpush2.msra.mxu0 0.0
      %4883 = vmatprep.subr.mxu0 0.0
      %4884 = vmatpush2.msra.mxu0 0.0
      %4885 = vmatprep.subr.mxu0 0.0
      %4886 = vmatpush2.msra.mxu0 0.0
      %4887 = vmatprep.subr.mxu0 0.0
      %4888 = vmatpush2.msra.mxu0 0.0
      %4889 = vmatprep.subr.mxu0 0.0
      %4890 = vmatpush2.msra.mxu0 0.0
      %4891 = vmatprep.subr.mxu0 0.0
      %4892 = vmatpush2.msra.mxu0 0.0
      %4893 = vmatprep.mubr.f32.mxu0 0.0
      %4894 = vmatmul.mubr.f32.gmra.mxu0 %v4756
      %v4895 = vpop.f32.mrf.mxu0
      %v4896 = vadd.f32 0.0, %v4895
      %v4897 = vpop.f32.mrf.mxu0
      %4898 = vdwg.mxu0
      %v4899 = vadd.f32 %v4740, %v4825
      %v4900 = vadd.f32 %v4741, %v4827
      %v4901 = vadd.f32 %v4742, %v4896
      %v4902 = vld [vmem:[%s10] sm:$0xff]
      %4904 = vset.pattern.permute.xlu0 0
      %4905 = vperm.xlu0 %4904, %v4902
      %v4906 = vpop.permute.xlu0 %4905
      %v4908 = vmul.f32 %v4899, %v4906
      %v4909 = vmul.f32 %v4900, %v4906
      %v4910 = vmul.f32 %v4901, %v4906
      %v4911 = vld [vmem:[%s11] sm:$0xff]
      %4913 = vset.pattern.permute.xlu0 0
      %4914 = vperm.xlu0 %4913, %v4911
      %v4915 = vpop.permute.xlu0 %4914
      %v4917 = vadd.f32 %v4908, %v4915
      %v4918 = vadd.f32 %v4909, %v4915
      %v4919 = vadd.f32 %v4910, %v4915
      %v4920 = vmax.f32 %v4917, 0.0
      %v4921 = vmax.f32 %v4918, 0.0
      %v4922 = vmax.f32 %v4919, 0.0
      %v4923 = vmul.f32 %v4920, %v1987
      %v4924 = vmul.f32 %v4921, %v1991
      %v4925 = vmul.f32 %v4922, %v1995
      %v4926 = vld [vmem:[%s475] sm:$0xff]
      %v4927 = vld [vmem:[%s475 + $0x8] sm:$0xf]
      %v4929 = vcombine.high %v4926, %v4926
      %v4931 = vadd.f32 %v4923, %v4926
      %v4932 = vadd.f32 %v4924, %v4929
      %v4933 = vadd.f32 %v4925, %v4927
      %v4934 = vld [vmem:[%s470] sm:$0xff]
      %v4935 = vld [vmem:[%s470 + $0x8] sm:$0xf]
      %v4937 = vcombine.high %v4934, %v4934
      %v4939 = vadd.f32 %v4931, %v4934
      %v4940 = vadd.f32 %v4932, %v4937
      %v4941 = vadd.f32 %v4933, %v4935
      %v4944 = vcombine.low %v4939, %v4940
      %4946 = vst [vmem:[%s480] sm:$0xff] %v4944
      %vm4947 = vcmask 257024
      %4948 = vst.msk [vmem:[%s480 + $0x8] sm:$0xf] %vm4947, %v4941
      %p4949 = scmp.lt.s32.totalorder %s24, 1
      %s4950 = scalar_select %p4949, %s24, 1
      %s4951 = smul.addr %s4950, 3
      %s4952 = smul.addr %s4951, 4
      %s4953 = scalar_lea.vmem %s13, %s4952
      // Predicated region
      $region73: #{expansion_block_forward.3} parent=71 // pred_check
        %p4954 = pneg %p330
      $region74: #{expansion_block_forward.3} parent=71 // pred_check_branch
        %4956 = sbr.rel (%p4954) target = $region76
      $region75: #{expansion_block_forward.3} parent=71 // pred_region
        _
      $region76: #{expansion_block_forward.3} parent=71 // pred_fallthru
        _
    $region72: #{expansion_block_forward.3} parent=5 // pred_fallthru
      _
    %p4957 = scmp.le.s32.totalorder 2, %s19
    // Predicated region
    $region77: #{expansion_block_forward.3} parent=5 // pred_check
      %p4958 = pneg %p4957
    $region78: #{expansion_block_forward.3} parent=5 // pred_check_branch
      %4960 = sbr.rel (%p4958) target = $region80
    $region79: #{expansion_block_forward.3} parent=5 // pred_region
      %s4961 = ssub.s32 %s19, 2
      // Predicated region
      $region81: #{expansion_block_forward.3} parent=79 // pred_check
        %p4962 = pneg %p336
      $region82: #{expansion_block_forward.3} parent=79 // pred_check_branch
        %4964 = sbr.rel (%p4962) target = $region84
      $region83: #{expansion_block_forward.3} parent=79 // pred_region
        %p4965 = scmp.lt.s32.totalorder %s25, 1
        %s4966 = scalar_select %p4965, %s25, 1
        %s4967 = smul.addr %s4966, 3
        %s4968 = smul.addr %s4967, 4
        %s4969 = scalar_lea.vmem %s13, %s4968
      $region84: #{expansion_block_forward.3} parent=79 // pred_fallthru
        _
    $region80: #{expansion_block_forward.3} parent=5 // pred_fallthru
      _
  $region6: #{expansion_block_forward.3} parent=0 // loop_footer
    %s23 = sadd.s32 1, %s19
  $region7: #{expansion_block_forward.3} parent=0 // loop_footer_branch
    %18 = sbr.rel target = $region3
  $region8: #{expansion_block_forward.3} parent=0 // loop_exit
    _

</llo_original>
